<compile_context>
chip_gen: v5e
topology: v5e:2x2
jax: 0.10.0
libtpu: 0.0.40
codegen_flags: <defaults>
</compile_context>

<pallas_src>
import math

import jax
import jax.numpy as jnp
from jax.experimental import pallas as pl
from jax.experimental.pallas import tpu as pltpu


# ----------------------------- configuration -------------------------------
VOCAB_SIZE = 64
HIDDEN_SIZE = 128
NUM_LAYERS = 2
NUM_HEADS = 4
NUM_KV_HEADS = 2
HEAD_DIM = HIDDEN_SIZE // NUM_HEADS          # 32
NUM_KV_GROUPS = NUM_HEADS // NUM_KV_HEADS    # 2
Q_WIDTH = NUM_HEADS * HEAD_DIM               # 128
KV_WIDTH = NUM_KV_HEADS * HEAD_DIM           # 64
INTERMEDIATE_SIZE = 256
ROPE_THETA = 10000.0
RMS_EPS = 1e-6

BATCH = 2
SEQ = 16


# ------------------------------ kernel helpers ------------------------------
def _rmsnorm(x, w, eps):
    # x: (rows, d) f32, w: (1, d) f32
    var = jnp.mean(x * x, axis=-1, keepdims=True)
    return w * (x * jax.lax.rsqrt(var + eps))


def _softmax(s):
    m = jnp.max(s, axis=-1, keepdims=True)
    e = jnp.exp(s - m)
    return e * pl.reciprocal(jnp.sum(e, axis=-1, keepdims=True), approx=True)


def _mxu(a, b):
    # bf16 operands, f32 accumulation (MXU-native).
    return jnp.dot(a.astype(jnp.bfloat16), b.astype(jnp.bfloat16),
                   preferred_element_type=jnp.float32)


# ---------------------------- fused model kernel ----------------------------
def qwen3_model_kernel(ids_ref, embed_ref,
                       cosq_ref, sinq_ref, cosk_ref, sink_ref,
                       rq_ref, rk_ref, gq_ref, gk_ref,
                       mask_ref, fw_ref,
                       ln1_ref, wq_ref, wk_ref, wv_ref, wo_ref,
                       qn_ref, kn_ref, ln2_ref, wg_ref, wu_ref, wd_ref,
                       y_ref, hid_ref):
    """Grid = (batch_block ["parallel"], layer ["arbitrary"]).

    One batch element's hidden state (SEQ, H) stays resident in VMEM scratch
    across the layer axis; layer weights are pipelined per grid step.
    """
    b = pl.program_id(0)
    layer = pl.program_id(1)
    last_layer = pl.num_programs(1) - 1

    # ---- token embedding: SMEM ids -> row gather from VMEM table (layer 0 only)
    @pl.when(layer == 0)
    def _():
        base = b * SEQ
        for t in range(SEQ):                               # static unroll, runs once
            tok = ids_ref[base + t]
            hid_ref[pl.ds(t, 1), :] = embed_ref[pl.ds(tok, 1), :]

    x = hid_ref[...]                                       # (S, H) f32

    # ---- hoisted per-step constants (VMEM-resident, zero per-step build cost)
    cos_q = cosq_ref[...]                                  # (S, 128)
    sin_q = sinq_ref[...]
    cos_k = cosk_ref[...]                                  # (S, 64)
    sin_k = sink_ref[...]
    mask = mask_ref[...]                                   # (S, S) additive causal
    qn = qn_ref[0]                                         # (1, 128) carries 1/sqrt(hd)
    kn = kn_ref[0]                                         # (1, 64)

    # ---------------------------- attention --------------------------------
    h = _rmsnorm(x, ln1_ref[0], RMS_EPS)                   # f32
    hb = h.astype(jnp.bfloat16)

    # Fused full-width projections (one MXU matmul each).
    q = jnp.dot(hb, wq_ref[0], preferred_element_type=jnp.float32)   # (S, 128)
    k = jnp.dot(hb, wk_ref[0], preferred_element_type=jnp.float32)   # (S, 64)
    v = jnp.dot(hb, wv_ref[0], preferred_element_type=jnp.float32)   # (S, 64)

    # Per-head RMSNorm, lane-dense: mean-of-squares per 32-lane head group via a
    # block-diagonal group-mean matrix on the MXU (f32).
    q_ms = jnp.dot(q * q, gq_ref[...], preferred_element_type=jnp.float32)
    k_ms = jnp.dot(k * k, gk_ref[...], preferred_element_type=jnp.float32)
    q = q * jax.lax.rsqrt(q_ms + RMS_EPS) * qn             # scale folded into qn
    k = k * jax.lax.rsqrt(k_ms + RMS_EPS) * kn

    # Fused RoPE: rotate_half for all heads at once as a block-diagonal signed
    # permutation matmul; cos/sin pre-tiled to full lane width.
    q = q * cos_q + jnp.dot(q, rq_ref[...], preferred_element_type=jnp.float32) * sin_q
    k = k * cos_k + jnp.dot(k, rk_ref[...], preferred_element_type=jnp.float32) * sin_k

    qb = q.astype(jnp.bfloat16)
    kb = k.astype(jnp.bfloat16)
    vb = v.astype(jnp.bfloat16)

    # Attention core: per-head (S,S) scores for THIS batch element only.
    outs = []
    for hq in range(NUM_HEADS):                            # static unroll (4)
        kv = hq // NUM_KV_GROUPS
        q_h = qb[:, hq * HEAD_DIM:(hq + 1) * HEAD_DIM]
        k_h = kb[:, kv * HEAD_DIM:(kv + 1) * HEAD_DIM]
        v_h = vb[:, kv * HEAD_DIM:(kv + 1) * HEAD_DIM]
        s = jax.lax.dot_general(q_h, k_h, (((1,), (1,)), ((), ())),
                                preferred_element_type=jnp.float32)
        p = _softmax(s + mask)                             # f32
        outs.append(jnp.dot(p.astype(jnp.bfloat16), v_h,
                            preferred_element_type=jnp.float32))
    attn = jnp.concatenate(outs, axis=-1)                  # (S, 128) f32
    x = x + _mxu(attn, wo_ref[0])                          # fused o_proj

    # ---------------------------- SwiGLU MLP --------------------------------
    h2 = _rmsnorm(x, ln2_ref[0], RMS_EPS)
    h2b = h2.astype(jnp.bfloat16)
    gate = jnp.dot(h2b, wg_ref[0], preferred_element_type=jnp.float32)
    up = jnp.dot(h2b, wu_ref[0], preferred_element_type=jnp.float32)
    act = gate * jax.nn.sigmoid(gate) * up                 # SiLU(gate) * up, f32
    x = x + _mxu(act, wd_ref[0])

    hid_ref[...] = x

    # ---- final RMSNorm + single HBM writeback per batch block ----
    @pl.when(layer == last_layer)
    def _():
        y_ref[...] = _rmsnorm(x, fw_ref[...], RMS_EPS)


# ------------------------------ BlockSpec helpers ----------------------------
def _const_spec(shape):
    nd = len(shape)
    return pl.BlockSpec(tuple(shape), lambda b, l, _n=nd: (0,) * _n)


def _layer_spec(shape):
    nd = len(shape) + 1
    return pl.BlockSpec((1,) + tuple(shape),
                        lambda b, l, _n=nd: (l,) + (0,) * (_n - 1))


# --------------------------- host-side constants -----------------------------
def rope_tables(seq_len):
    inv_freq = 1.0 / (ROPE_THETA ** (jnp.arange(0, HEAD_DIM, 2,
                                                dtype=jnp.float32) / HEAD_DIM))
    pos = jnp.arange(seq_len, dtype=jnp.float32)
    freqs = jnp.einsum("i,j->ij", pos, inv_freq)            # (S, hd/2)
    emb = jnp.concatenate([freqs, freqs], axis=-1)          # (S, hd)
    return jnp.cos(emb), jnp.sin(emb)


def _rotate_half_matrix(dim):
    # y = x @ R  reproduces rotate_half exactly (signed permutation).
    half = dim // 2
    ri = jnp.arange(dim)[:, None]
    ci = jnp.arange(dim)[None, :]
    return jnp.where(ri == ci + half, -1.0,
                     jnp.where(ri + half == ci, 1.0, 0.0)).astype(jnp.float32)


def _block_diag(block, n):
    d = block.shape[0]
    out = jnp.zeros((n * d, n * d), jnp.float32)
    for g in range(n):
        out = out.at[g * d:(g + 1) * d, g * d:(g + 1) * d].set(block)
    return out


# ------------------------------- full forward --------------------------------
@jax.jit
def qwen3_forward(input_ids, params):
    B, S = input_ids.shape
    assert B == BATCH and S == SEQ

    ids_flat = input_ids.reshape(B * S).astype(jnp.int32)

    # Constants (hoisted out of the kernel; VMEM-resident across the grid).
    cos, sin = rope_tables(S)                                # (S, hd)
    cos_q = jnp.tile(cos, (1, NUM_HEADS))                    # (S, 128)
    sin_q = jnp.tile(sin, (1, NUM_HEADS))
    cos_k = jnp.tile(cos, (1, NUM_KV_HEADS))                 # (S, 64)
    sin_k = jnp.tile(sin, (1, NUM_KV_HEADS))
    rot = _rotate_half_matrix(HEAD_DIM)
    rot_q = _block_diag(rot, NUM_HEADS)                      # (128, 128)
    rot_k = _block_diag(rot, NUM_KV_HEADS)                   # (64, 64)
    gmean = jnp.full((HEAD_DIM, HEAD_DIM), 1.0 / HEAD_DIM, jnp.float32)
    gmean_q = _block_diag(gmean, NUM_HEADS)                  # (128, 128)
    gmean_k = _block_diag(gmean, NUM_KV_HEADS)               # (64, 64)
    r = jnp.arange(S)[:, None]
    c = jnp.arange(S)[None, :]
    mask = jnp.where(c <= r, 0.0, -1e30).astype(jnp.float32)  # (S, S) additive causal

    grid_spec = pltpu.PrefetchScalarGridSpec(
        num_scalar_prefetch=0,
        grid=(BATCH, NUM_LAYERS),
        in_specs=[
            pl.BlockSpec(memory_space=pltpu.MemorySpace.SMEM),       # ids (scalar path)
            _const_spec((VOCAB_SIZE, HIDDEN_SIZE)),                  # embed table
            _const_spec((SEQ, Q_WIDTH)),                             # cos_q
            _const_spec((SEQ, Q_WIDTH)),                             # sin_q
            _const_spec((SEQ, KV_WIDTH)),                            # cos_k
            _const_spec((SEQ, KV_WIDTH)),                            # sin_k
            _const_spec((Q_WIDTH, Q_WIDTH)),                         # rot_q
            _const_spec((KV_WIDTH, KV_WIDTH)),                       # rot_k
            _const_spec((Q_WIDTH, Q_WIDTH)),                         # gmean_q
            _const_spec((KV_WIDTH, KV_WIDTH)),                       # gmean_k
            _const_spec((SEQ, SEQ)),                                 # causal mask
            _const_spec((1, HIDDEN_SIZE)),                           # final norm w
            _layer_spec((1, HIDDEN_SIZE)),                           # ln1
            _layer_spec((HIDDEN_SIZE, Q_WIDTH)),                     # wq (fused heads)
            _layer_spec((HIDDEN_SIZE, KV_WIDTH)),                    # wk
            _layer_spec((HIDDEN_SIZE, KV_WIDTH)),                    # wv
            _layer_spec((HIDDEN_SIZE, HIDDEN_SIZE)),                 # wo
            _layer_spec((1, Q_WIDTH)),                               # q_norm (tiled)
            _layer_spec((1, KV_WIDTH)),                              # k_norm (tiled)
            _layer_spec((1, HIDDEN_SIZE)),                           # ln2
            _layer_spec((HIDDEN_SIZE, INTERMEDIATE_SIZE)),           # gate_proj
            _layer_spec((HIDDEN_SIZE, INTERMEDIATE_SIZE)),           # up_proj
            _layer_spec((INTERMEDIATE_SIZE, HIDDEN_SIZE)),           # down_proj
        ],
        out_specs=pl.BlockSpec((SEQ, HIDDEN_SIZE), lambda b, l: (b, 0)),
        scratch_shapes=[pltpu.VMEM((SEQ, HIDDEN_SIZE), jnp.float32)],
    )

    y = pl.pallas_call(
        qwen3_model_kernel,
        out_shape=jax.ShapeDtypeStruct((BATCH * SEQ, HIDDEN_SIZE), jnp.float32),
        grid_spec=grid_spec,
        compiler_params=pltpu.CompilerParams(
            # batch axis parallel (uses both TCs on v7x), layer axis sequential.
            dimension_semantics=("parallel", "arbitrary"),
            vmem_limit_bytes=32 * 1024 * 1024,
        ),
    )(ids_flat, params["embed"],
      cos_q, sin_q, cos_k, sin_k, rot_q, rot_k, gmean_q, gmean_k, mask,
      params["final_w"],
      params["ln1"], params["wq"], params["wk"], params["wv"], params["wo"],
      params["qn"], params["kn"], params["ln2"],
      params["wg"], params["wu"], params["wd"])

    return y.reshape(BATCH, SEQ, HIDDEN_SIZE)


# ------------------------------ parameter init -------------------------------
def init_params(key):
    """Weights stored pre-transposed (y = x @ W), heads fused along columns.

    Projection / MLP weights are bf16 (MXU operands); norm weights stay f32.
    NOTE for checkpoint loaders: the 1/sqrt(head_dim) attention scale is folded
    into the (head-tiled) q_norm weight here -- a loader must apply the same fold.
    """
    def lin(k, shape):
        return (0.02 * jax.random.normal(k, shape, jnp.float32)).astype(jnp.bfloat16)

    k_embed, k_layers = jax.random.split(key)
    embed = 0.02 * jax.random.normal(k_embed, (VOCAB_SIZE, HIDDEN_SIZE), jnp.float32)

    lkeys = jax.random.split(k_layers, NUM_LAYERS * 7).reshape(NUM_LAYERS, 7, 2)
    wq, wk, wv, wo, wg, wu, wd = [], [], [], [], [], [], []
    for li in range(NUM_LAYERS):
        k = lkeys[li]
        wq.append(lin(k[0], (HIDDEN_SIZE, Q_WIDTH)))
        wk.append(lin(k[1], (HIDDEN_SIZE, KV_WIDTH)))
        wv.append(lin(k[2], (HIDDEN_SIZE, KV_WIDTH)))
        wo.append(lin(k[3], (HIDDEN_SIZE, HIDDEN_SIZE)))
        wg.append(lin(k[4], (HIDDEN_SIZE, INTERMEDIATE_SIZE)))
        wu.append(lin(k[5], (HIDDEN_SIZE, INTERMEDIATE_SIZE)))
        wd.append(lin(k[6], (INTERMEDIATE_SIZE, HIDDEN_SIZE)))

    params = {
        "embed": embed,
        "ln1": jnp.ones((NUM_LAYERS, 1, HIDDEN_SIZE), jnp.float32),
        "ln2": jnp.ones((NUM_LAYERS, 1, HIDDEN_SIZE), jnp.float32),
        # q_norm weight tiled per head, with 1/sqrt(head_dim) folded in (exact).
        "qn": jnp.full((NUM_LAYERS, 1, Q_WIDTH),
                       1.0 / math.sqrt(HEAD_DIM), jnp.float32),
        "kn": jnp.ones((NUM_LAYERS, 1, KV_WIDTH), jnp.float32),
        "final_w": jnp.ones((1, HIDDEN_SIZE), jnp.float32),
        "wq": jnp.stack(wq), "wk": jnp.stack(wk), "wv": jnp.stack(wv),
        "wo": jnp.stack(wo), "wg": jnp.stack(wg), "wu": jnp.stack(wu),
        "wd": jnp.stack(wd),
    }
    return params


# ------------------------------------ main ------------------------------------
if __name__ == "__main__":
    key = jax.random.PRNGKey(0)
    pkey, ikey = jax.random.split(key)

    params = init_params(pkey)
    input_ids = jax.random.randint(ikey, (BATCH, SEQ), 0, VOCAB_SIZE,
                                   dtype=jnp.int32)

    # TODO(synk): attention/hidden dropout are identity (eval-mode semantics).
    out = qwen3_forward(input_ids, params)
    out = jax.block_until_ready(out)

    assert out.shape == (BATCH, SEQ, HIDDEN_SIZE)
    assert bool(jnp.all(jnp.isfinite(out)))
    print("KERNEL_OK")
</pallas_src>

<mosaic_0001>
module attributes {stable_mosaic.version = 11 : i64} {
  func.func @qwen3_model_kernel(%arg0: i32, %arg1: i32, %arg2: memref<32xi32, #tpu.memory_space<smem>>, %arg3: memref<64x128xf32, #tpu.memory_space<vmem>>, %arg4: memref<16x128xf32, #tpu.memory_space<vmem>>, %arg5: memref<16x128xf32, #tpu.memory_space<vmem>>, %arg6: memref<16x64xf32, #tpu.memory_space<vmem>>, %arg7: memref<16x64xf32, #tpu.memory_space<vmem>>, %arg8: memref<128x128xf32, #tpu.memory_space<vmem>>, %arg9: memref<64x64xf32, #tpu.memory_space<vmem>>, %arg10: memref<128x128xf32, #tpu.memory_space<vmem>>, %arg11: memref<64x64xf32, #tpu.memory_space<vmem>>, %arg12: memref<16x16xf32, #tpu.memory_space<vmem>>, %arg13: memref<1x128xf32, #tpu.memory_space<vmem>>, %arg14: memref<1x1x128xf32, #tpu.memory_space<vmem>>, %arg15: memref<1x128x128xbf16, #tpu.memory_space<vmem>>, %arg16: memref<1x128x64xbf16, #tpu.memory_space<vmem>>, %arg17: memref<1x128x64xbf16, #tpu.memory_space<vmem>>, %arg18: memref<1x128x128xbf16, #tpu.memory_space<vmem>>, %arg19: memref<1x1x128xf32, #tpu.memory_space<vmem>>, %arg20: memref<1x1x64xf32, #tpu.memory_space<vmem>>, %arg21: memref<1x1x128xf32, #tpu.memory_space<vmem>>, %arg22: memref<1x128x256xbf16, #tpu.memory_space<vmem>>, %arg23: memref<1x128x256xbf16, #tpu.memory_space<vmem>>, %arg24: memref<1x256x128xbf16, #tpu.memory_space<vmem>>, %arg25: memref<16x128xf32, #tpu.memory_space<vmem>>, %arg26: memref<16x128xf32, #tpu.memory_space<vmem>>) attributes {dimension_semantics = [#tpu.dimension_semantics<parallel>, #tpu.dimension_semantics<arbitrary>], iteration_bounds = array<i64: 2, 2>, scalar_prefetch = 0 : i64, scratch_operands = 1 : i64, tpu.core_type = #tpu.core_type<tc>, window_params = [{transform_indices = @transform_0, window_bounds = array<i64: 32>}, {pipeline_mode = #tpu.pipeline_mode<synchronous>, transform_indices = @transform_1, window_bounds = array<i64: 64, 128>}, {pipeline_mode = #tpu.pipeline_mode<synchronous>, transform_indices = @transform_2, window_bounds = array<i64: 16, 128>}, {pipeline_mode = #tpu.pipeline_mode<synchronous>, transform_indices = @transform_3, window_bounds = array<i64: 16, 128>}, {pipeline_mode = #tpu.pipeline_mode<synchronous>, transform_indices = @transform_4, window_bounds = array<i64: 16, 64>}, {pipeline_mode = #tpu.pipeline_mode<synchronous>, transform_indices = @transform_5, window_bounds = array<i64: 16, 64>}, {pipeline_mode = #tpu.pipeline_mode<synchronous>, transform_indices = @transform_6, window_bounds = array<i64: 128, 128>}, {pipeline_mode = #tpu.pipeline_mode<synchronous>, transform_indices = @transform_7, window_bounds = array<i64: 64, 64>}, {pipeline_mode = #tpu.pipeline_mode<synchronous>, transform_indices = @transform_8, window_bounds = array<i64: 128, 128>}, {pipeline_mode = #tpu.pipeline_mode<synchronous>, transform_indices = @transform_9, window_bounds = array<i64: 64, 64>}, {pipeline_mode = #tpu.pipeline_mode<synchronous>, transform_indices = @transform_10, window_bounds = array<i64: 16, 16>}, {pipeline_mode = #tpu.pipeline_mode<synchronous>, transform_indices = @transform_11, window_bounds = array<i64: 1, 128>}, {transform_indices = @transform_12, window_bounds = array<i64: 1, 1, 128>}, {transform_indices = @transform_13, window_bounds = array<i64: 1, 128, 128>}, {transform_indices = @transform_14, window_bounds = array<i64: 1, 128, 64>}, {transform_indices = @transform_15, window_bounds = array<i64: 1, 128, 64>}, {transform_indices = @transform_16, window_bounds = array<i64: 1, 128, 128>}, {transform_indices = @transform_17, window_bounds = array<i64: 1, 1, 128>}, {transform_indices = @transform_18, window_bounds = array<i64: 1, 1, 64>}, {transform_indices = @transform_19, window_bounds = array<i64: 1, 1, 128>}, {transform_indices = @transform_20, window_bounds = array<i64: 1, 128, 256>}, {transform_indices = @transform_21, window_bounds = array<i64: 1, 128, 256>}, {transform_indices = @transform_22, window_bounds = array<i64: 1, 256, 128>}, {transform_indices = @transform_23, window_bounds = array<i64: 16, 128>}]} {
    %c0_i32 = arith.constant 0 : i32
    %0 = arith.cmpi eq, %arg1, %c0_i32 : i32
    %1 = arith.extui %0 : i1 to i32
    %c0_i32_0 = arith.constant 0 : i32
    %2 = arith.cmpi ne, %1, %c0_i32_0 : i32
    scf.if %2 {
      %c16_i32 = arith.constant 16 : i32
      %179 = arith.muli %arg0, %c16_i32 : i32
      %c0_i32_91 = arith.constant 0 : i32
      %180 = arith.addi %179, %c0_i32_91 : i32
      %181 = arith.index_cast %180 : i32 to index
      %182 = memref.load %arg2[%181] : memref<32xi32, #tpu.memory_space<smem>>
      %183 = arith.index_cast %182 : i32 to index
      %c0_92 = arith.constant 0 : index
      %184 = vector.load %arg3[%183, %c0_92] : memref<64x128xf32, #tpu.memory_space<vmem>>, vector<1x128xf32>
      %c0_93 = arith.constant 0 : index
      %c0_94 = arith.constant 0 : index
      %185 = vector.load %arg26[%c0_93, %c0_94] : memref<16x128xf32, #tpu.memory_space<vmem>>, vector<1x128xf32>
      tpu.vector_store %arg26[%c0_93, %c0_94], %184 {strides = array<i32>} : memref<16x128xf32, #tpu.memory_space<vmem>>, vector<1x128xf32>,
      %c1_i32_95 = arith.constant 1 : i32
      %186 = arith.addi %179, %c1_i32_95 : i32
      %187 = arith.index_cast %186 : i32 to index
      %188 = memref.load %arg2[%187] : memref<32xi32, #tpu.memory_space<smem>>
      %189 = arith.index_cast %188 : i32 to index
      %c0_96 = arith.constant 0 : index
      %190 = vector.load %arg3[%189, %c0_96] : memref<64x128xf32, #tpu.memory_space<vmem>>, vector<1x128xf32>
      %c1 = arith.constant 1 : index
      %c0_97 = arith.constant 0 : index
      %191 = vector.load %arg26[%c1, %c0_97] : memref<16x128xf32, #tpu.memory_space<vmem>>, vector<1x128xf32>
      tpu.vector_store %arg26[%c1, %c0_97], %190 {strides = array<i32>} : memref<16x128xf32, #tpu.memory_space<vmem>>, vector<1x128xf32>,
      %c2_i32 = arith.constant 2 : i32
      %192 = arith.addi %179, %c2_i32 : i32
      %193 = arith.index_cast %192 : i32 to index
      %194 = memref.load %arg2[%193] : memref<32xi32, #tpu.memory_space<smem>>
      %195 = arith.index_cast %194 : i32 to index
      %c0_98 = arith.constant 0 : index
      %196 = vector.load %arg3[%195, %c0_98] : memref<64x128xf32, #tpu.memory_space<vmem>>, vector<1x128xf32>
      %c2 = arith.constant 2 : index
      %c0_99 = arith.constant 0 : index
      %197 = vector.load %arg26[%c2, %c0_99] : memref<16x128xf32, #tpu.memory_space<vmem>>, vector<1x128xf32>
      tpu.vector_store %arg26[%c2, %c0_99], %196 {strides = array<i32>} : memref<16x128xf32, #tpu.memory_space<vmem>>, vector<1x128xf32>,
      %c3_i32 = arith.constant 3 : i32
      %198 = arith.addi %179, %c3_i32 : i32
      %199 = arith.index_cast %198 : i32 to index
      %200 = memref.load %arg2[%199] : memref<32xi32, #tpu.memory_space<smem>>
      %201 = arith.index_cast %200 : i32 to index
      %c0_100 = arith.constant 0 : index
      %202 = vector.load %arg3[%201, %c0_100] : memref<64x128xf32, #tpu.memory_space<vmem>>, vector<1x128xf32>
      %c3 = arith.constant 3 : index
      %c0_101 = arith.constant 0 : index
      %203 = vector.load %arg26[%c3, %c0_101] : memref<16x128xf32, #tpu.memory_space<vmem>>, vector<1x128xf32>
      tpu.vector_store %arg26[%c3, %c0_101], %202 {strides = array<i32>} : memref<16x128xf32, #tpu.memory_space<vmem>>, vector<1x128xf32>,
      %c4_i32 = arith.constant 4 : i32
      %204 = arith.addi %179, %c4_i32 : i32
      %205 = arith.index_cast %204 : i32 to index
      %206 = memref.load %arg2[%205] : memref<32xi32, #tpu.memory_space<smem>>
      %207 = arith.index_cast %206 : i32 to index
      %c0_102 = arith.constant 0 : index
      %208 = vector.load %arg3[%207, %c0_102] : memref<64x128xf32, #tpu.memory_space<vmem>>, vector<1x128xf32>
      %c4 = arith.constant 4 : index
      %c0_103 = arith.constant 0 : index
      %209 = vector.load %arg26[%c4, %c0_103] : memref<16x128xf32, #tpu.memory_space<vmem>>, vector<1x128xf32>
      tpu.vector_store %arg26[%c4, %c0_103], %208 {strides = array<i32>} : memref<16x128xf32, #tpu.memory_space<vmem>>, vector<1x128xf32>,
      %c5_i32 = arith.constant 5 : i32
      %210 = arith.addi %179, %c5_i32 : i32
      %211 = arith.index_cast %210 : i32 to index
      %212 = memref.load %arg2[%211] : memref<32xi32, #tpu.memory_space<smem>>
      %213 = arith.index_cast %212 : i32 to index
      %c0_104 = arith.constant 0 : index
      %214 = vector.load %arg3[%213, %c0_104] : memref<64x128xf32, #tpu.memory_space<vmem>>, vector<1x128xf32>
      %c5 = arith.constant 5 : index
      %c0_105 = arith.constant 0 : index
      %215 = vector.load %arg26[%c5, %c0_105] : memref<16x128xf32, #tpu.memory_space<vmem>>, vector<1x128xf32>
      tpu.vector_store %arg26[%c5, %c0_105], %214 {strides = array<i32>} : memref<16x128xf32, #tpu.memory_space<vmem>>, vector<1x128xf32>,
      %c6_i32 = arith.constant 6 : i32
      %216 = arith.addi %179, %c6_i32 : i32
      %217 = arith.index_cast %216 : i32 to index
      %218 = memref.load %arg2[%217] : memref<32xi32, #tpu.memory_space<smem>>
      %219 = arith.index_cast %218 : i32 to index
      %c0_106 = arith.constant 0 : index
      %220 = vector.load %arg3[%219, %c0_106] : memref<64x128xf32, #tpu.memory_space<vmem>>, vector<1x128xf32>
      %c6 = arith.constant 6 : index
      %c0_107 = arith.constant 0 : index
      %221 = vector.load %arg26[%c6, %c0_107] : memref<16x128xf32, #tpu.memory_space<vmem>>, vector<1x128xf32>
      tpu.vector_store %arg26[%c6, %c0_107], %220 {strides = array<i32>} : memref<16x128xf32, #tpu.memory_space<vmem>>, vector<1x128xf32>,
      %c7_i32 = arith.constant 7 : i32
      %222 = arith.addi %179, %c7_i32 : i32
      %223 = arith.index_cast %222 : i32 to index
      %224 = memref.load %arg2[%223] : memref<32xi32, #tpu.memory_space<smem>>
      %225 = arith.index_cast %224 : i32 to index
      %c0_108 = arith.constant 0 : index
      %226 = vector.load %arg3[%225, %c0_108] : memref<64x128xf32, #tpu.memory_space<vmem>>, vector<1x128xf32>
      %c7 = arith.constant 7 : index
      %c0_109 = arith.constant 0 : index
      %227 = vector.load %arg26[%c7, %c0_109] : memref<16x128xf32, #tpu.memory_space<vmem>>, vector<1x128xf32>
      tpu.vector_store %arg26[%c7, %c0_109], %226 {strides = array<i32>} : memref<16x128xf32, #tpu.memory_space<vmem>>, vector<1x128xf32>,
      %c8_i32 = arith.constant 8 : i32
      %228 = arith.addi %179, %c8_i32 : i32
      %229 = arith.index_cast %228 : i32 to index
      %230 = memref.load %arg2[%229] : memref<32xi32, #tpu.memory_space<smem>>
      %231 = arith.index_cast %230 : i32 to index
      %c0_110 = arith.constant 0 : index
      %232 = vector.load %arg3[%231, %c0_110] : memref<64x128xf32, #tpu.memory_space<vmem>>, vector<1x128xf32>
      %c8 = arith.constant 8 : index
      %c0_111 = arith.constant 0 : index
      %233 = vector.load %arg26[%c8, %c0_111] : memref<16x128xf32, #tpu.memory_space<vmem>>, vector<1x128xf32>
      tpu.vector_store %arg26[%c8, %c0_111], %232 {strides = array<i32>} : memref<16x128xf32, #tpu.memory_space<vmem>>, vector<1x128xf32>,
      %c9_i32 = arith.constant 9 : i32
      %234 = arith.addi %179, %c9_i32 : i32
      %235 = arith.index_cast %234 : i32 to index
      %236 = memref.load %arg2[%235] : memref<32xi32, #tpu.memory_space<smem>>
      %237 = arith.index_cast %236 : i32 to index
      %c0_112 = arith.constant 0 : index
      %238 = vector.load %arg3[%237, %c0_112] : memref<64x128xf32, #tpu.memory_space<vmem>>, vector<1x128xf32>
      %c9 = arith.constant 9 : index
      %c0_113 = arith.constant 0 : index
      %239 = vector.load %arg26[%c9, %c0_113] : memref<16x128xf32, #tpu.memory_space<vmem>>, vector<1x128xf32>
      tpu.vector_store %arg26[%c9, %c0_113], %238 {strides = array<i32>} : memref<16x128xf32, #tpu.memory_space<vmem>>, vector<1x128xf32>,
      %c10_i32 = arith.constant 10 : i32
      %240 = arith.addi %179, %c10_i32 : i32
      %241 = arith.index_cast %240 : i32 to index
      %242 = memref.load %arg2[%241] : memref<32xi32, #tpu.memory_space<smem>>
      %243 = arith.index_cast %242 : i32 to index
      %c0_114 = arith.constant 0 : index
      %244 = vector.load %arg3[%243, %c0_114] : memref<64x128xf32, #tpu.memory_space<vmem>>, vector<1x128xf32>
      %c10 = arith.constant 10 : index
      %c0_115 = arith.constant 0 : index
      %245 = vector.load %arg26[%c10, %c0_115] : memref<16x128xf32, #tpu.memory_space<vmem>>, vector<1x128xf32>
      tpu.vector_store %arg26[%c10, %c0_115], %244 {strides = array<i32>} : memref<16x128xf32, #tpu.memory_space<vmem>>, vector<1x128xf32>,
      %c11_i32 = arith.constant 11 : i32
      %246 = arith.addi %179, %c11_i32 : i32
      %247 = arith.index_cast %246 : i32 to index
      %248 = memref.load %arg2[%247] : memref<32xi32, #tpu.memory_space<smem>>
      %249 = arith.index_cast %248 : i32 to index
      %c0_116 = arith.constant 0 : index
      %250 = vector.load %arg3[%249, %c0_116] : memref<64x128xf32, #tpu.memory_space<vmem>>, vector<1x128xf32>
      %c11 = arith.constant 11 : index
      %c0_117 = arith.constant 0 : index
      %251 = vector.load %arg26[%c11, %c0_117] : memref<16x128xf32, #tpu.memory_space<vmem>>, vector<1x128xf32>
      tpu.vector_store %arg26[%c11, %c0_117], %250 {strides = array<i32>} : memref<16x128xf32, #tpu.memory_space<vmem>>, vector<1x128xf32>,
      %c12_i32 = arith.constant 12 : i32
      %252 = arith.addi %179, %c12_i32 : i32
      %253 = arith.index_cast %252 : i32 to index
      %254 = memref.load %arg2[%253] : memref<32xi32, #tpu.memory_space<smem>>
      %255 = arith.index_cast %254 : i32 to index
      %c0_118 = arith.constant 0 : index
      %256 = vector.load %arg3[%255, %c0_118] : memref<64x128xf32, #tpu.memory_space<vmem>>, vector<1x128xf32>
      %c12 = arith.constant 12 : index
      %c0_119 = arith.constant 0 : index
      %257 = vector.load %arg26[%c12, %c0_119] : memref<16x128xf32, #tpu.memory_space<vmem>>, vector<1x128xf32>
      tpu.vector_store %arg26[%c12, %c0_119], %256 {strides = array<i32>} : memref<16x128xf32, #tpu.memory_space<vmem>>, vector<1x128xf32>,
      %c13_i32 = arith.constant 13 : i32
      %258 = arith.addi %179, %c13_i32 : i32
      %259 = arith.index_cast %258 : i32 to index
      %260 = memref.load %arg2[%259] : memref<32xi32, #tpu.memory_space<smem>>
      %261 = arith.index_cast %260 : i32 to index
      %c0_120 = arith.constant 0 : index
      %262 = vector.load %arg3[%261, %c0_120] : memref<64x128xf32, #tpu.memory_space<vmem>>, vector<1x128xf32>
      %c13 = arith.constant 13 : index
      %c0_121 = arith.constant 0 : index
      %263 = vector.load %arg26[%c13, %c0_121] : memref<16x128xf32, #tpu.memory_space<vmem>>, vector<1x128xf32>
      tpu.vector_store %arg26[%c13, %c0_121], %262 {strides = array<i32>} : memref<16x128xf32, #tpu.memory_space<vmem>>, vector<1x128xf32>,
      %c14_i32 = arith.constant 14 : i32
      %264 = arith.addi %179, %c14_i32 : i32
      %265 = arith.index_cast %264 : i32 to index
      %266 = memref.load %arg2[%265] : memref<32xi32, #tpu.memory_space<smem>>
      %267 = arith.index_cast %266 : i32 to index
      %c0_122 = arith.constant 0 : index
      %268 = vector.load %arg3[%267, %c0_122] : memref<64x128xf32, #tpu.memory_space<vmem>>, vector<1x128xf32>
      %c14 = arith.constant 14 : index
      %c0_123 = arith.constant 0 : index
      %269 = vector.load %arg26[%c14, %c0_123] : memref<16x128xf32, #tpu.memory_space<vmem>>, vector<1x128xf32>
      tpu.vector_store %arg26[%c14, %c0_123], %268 {strides = array<i32>} : memref<16x128xf32, #tpu.memory_space<vmem>>, vector<1x128xf32>,
      %c15_i32 = arith.constant 15 : i32
      %270 = arith.addi %179, %c15_i32 : i32
      %271 = arith.index_cast %270 : i32 to index
      %272 = memref.load %arg2[%271] : memref<32xi32, #tpu.memory_space<smem>>
      %273 = arith.index_cast %272 : i32 to index
      %c0_124 = arith.constant 0 : index
      %274 = vector.load %arg3[%273, %c0_124] : memref<64x128xf32, #tpu.memory_space<vmem>>, vector<1x128xf32>
      %c15 = arith.constant 15 : index
      %c0_125 = arith.constant 0 : index
      %275 = vector.load %arg26[%c15, %c0_125] : memref<16x128xf32, #tpu.memory_space<vmem>>, vector<1x128xf32>
      tpu.vector_store %arg26[%c15, %c0_125], %274 {strides = array<i32>} : memref<16x128xf32, #tpu.memory_space<vmem>>, vector<1x128xf32>,
    } else {
    }
    %c0 = arith.constant 0 : index
    %c0_1 = arith.constant 0 : index
    %3 = vector.load %arg26[%c0, %c0_1] : memref<16x128xf32, #tpu.memory_space<vmem>>, vector<16x128xf32>
    %c0_2 = arith.constant 0 : index
    %c0_3 = arith.constant 0 : index
    %4 = vector.load %arg4[%c0_2, %c0_3] : memref<16x128xf32, #tpu.memory_space<vmem>>, vector<16x128xf32>
    %c0_4 = arith.constant 0 : index
    %c0_5 = arith.constant 0 : index
    %5 = vector.load %arg5[%c0_4, %c0_5] : memref<16x128xf32, #tpu.memory_space<vmem>>, vector<16x128xf32>
    %c0_6 = arith.constant 0 : index
    %c0_7 = arith.constant 0 : index
    %6 = vector.load %arg6[%c0_6, %c0_7] : memref<16x64xf32, #tpu.memory_space<vmem>>, vector<16x64xf32>
    %c0_8 = arith.constant 0 : index
    %c0_9 = arith.constant 0 : index
    %7 = vector.load %arg7[%c0_8, %c0_9] : memref<16x64xf32, #tpu.memory_space<vmem>>, vector<16x64xf32>
    %c0_10 = arith.constant 0 : index
    %c0_11 = arith.constant 0 : index
    %8 = vector.load %arg12[%c0_10, %c0_11] : memref<16x16xf32, #tpu.memory_space<vmem>>, vector<16x16xf32>
    %c0_12 = arith.constant 0 : index
    %c0_13 = arith.constant 0 : index
    %c0_14 = arith.constant 0 : index
    %9 = vector.load %arg19[%c0_12, %c0_13, %c0_14] : memref<1x1x128xf32, #tpu.memory_space<vmem>>, vector<1x1x128xf32>
    %10 = vector.shape_cast %9 : vector<1x1x128xf32> to vector<1x128xf32>
    %c0_15 = arith.constant 0 : index
    %c0_16 = arith.constant 0 : index
    %c0_17 = arith.constant 0 : index
    %11 = vector.load %arg20[%c0_15, %c0_16, %c0_17] : memref<1x1x64xf32, #tpu.memory_space<vmem>>, vector<1x1x64xf32>
    %12 = vector.shape_cast %11 : vector<1x1x64xf32> to vector<1x64xf32>
    %c0_18 = arith.constant 0 : index
    %c0_19 = arith.constant 0 : index
    %c0_20 = arith.constant 0 : index
    %13 = vector.load %arg14[%c0_18, %c0_19, %c0_20] : memref<1x1x128xf32, #tpu.memory_space<vmem>>, vector<1x1x128xf32>
    %14 = vector.shape_cast %13 : vector<1x1x128xf32> to vector<1x128xf32>
    %15 = arith.mulf %3, %3 : vector<16x128xf32>
    %cst = arith.constant dense<0.000000e+00> : vector<16xf32>
    %16 = vector.multi_reduction <add>, %15, %cst [1] : vector<16x128xf32> to vector<16xf32>
    %17 = vector.shape_cast %16 : vector<16xf32> to vector<16x1xf32>
    %cst_21 = arith.constant 1.280000e+02 : f32
    %18 = vector.broadcast %cst_21 : f32 to vector<16x1xf32>
    %19 = arith.divf %17, %18 : vector<16x1xf32>
    %cst_22 = arith.constant 9.99999997E-7 : f32
    %20 = vector.broadcast %cst_22 : f32 to vector<16x1xf32>
    %21 = arith.addf %19, %20 : vector<16x1xf32>
    %22 = math.rsqrt %21 : vector<16x1xf32>
    %23 = vector.broadcast %22 : vector<16x1xf32> to vector<16x128xf32>
    %24 = arith.mulf %3, %23 : vector<16x128xf32>
    %25 = vector.broadcast %14 : vector<1x128xf32> to vector<16x128xf32>
    %26 = arith.mulf %25, %24 : vector<16x128xf32>
    %27 = arith.truncf %26 : vector<16x128xf32> to vector<16x128xbf16>
    %c0_23 = arith.constant 0 : index
    %c0_24 = arith.constant 0 : index
    %c0_25 = arith.constant 0 : index
    %28 = vector.load %arg15[%c0_23, %c0_24, %c0_25] : memref<1x128x128xbf16, #tpu.memory_space<vmem>>, vector<1x128x128xbf16>
    %29 = vector.shape_cast %28 : vector<1x128x128xbf16> to vector<128x128xbf16>
    %cst_26 = arith.constant dense<0.000000e+00> : vector<16x128xf32>
    %30 = tpu.matmul %27, %29, %cst_26 {dimension_numbers = #tpu.dot_dimension_numbers<[1], [0], [0], [1], [0, 0, 1, 1], [], []>} : vector<16x128xbf16>, vector<128x128xbf16>, vector<16x128xf32> -> vector<16x128xf32>
    %c0_27 = arith.constant 0 : index
    %c0_28 = arith.constant 0 : index
    %c0_29 = arith.constant 0 : index
    %31 = vector.load %arg16[%c0_27, %c0_28, %c0_29] : memref<1x128x64xbf16, #tpu.memory_space<vmem>>, vector<1x128x64xbf16>
    %32 = vector.shape_cast %31 : vector<1x128x64xbf16> to vector<128x64xbf16>
    %cst_30 = arith.constant dense<0.000000e+00> : vector<16x64xf32>
    %33 = tpu.matmul %27, %32, %cst_30 {dimension_numbers = #tpu.dot_dimension_numbers<[1], [0], [0], [1], [0, 0, 1, 1], [], []>} : vector<16x128xbf16>, vector<128x64xbf16>, vector<16x64xf32> -> vector<16x64xf32>
    %c0_31 = arith.constant 0 : index
    %c0_32 = arith.constant 0 : index
    %c0_33 = arith.constant 0 : index
    %34 = vector.load %arg17[%c0_31, %c0_32, %c0_33] : memref<1x128x64xbf16, #tpu.memory_space<vmem>>, vector<1x128x64xbf16>
    %35 = vector.shape_cast %34 : vector<1x128x64xbf16> to vector<128x64xbf16>
    %cst_34 = arith.constant dense<0.000000e+00> : vector<16x64xf32>
    %36 = tpu.matmul %27, %35, %cst_34 {dimension_numbers = #tpu.dot_dimension_numbers<[1], [0], [0], [1], [0, 0, 1, 1], [], []>} : vector<16x128xbf16>, vector<128x64xbf16>, vector<16x64xf32> -> vector<16x64xf32>
    %37 = arith.mulf %30, %30 : vector<16x128xf32>
    %c0_35 = arith.constant 0 : index
    %c0_36 = arith.constant 0 : index
    %38 = vector.load %arg10[%c0_35, %c0_36] : memref<128x128xf32, #tpu.memory_space<vmem>>, vector<128x128xf32>
    %cst_37 = arith.constant dense<0.000000e+00> : vector<16x128xf32>
    %39 = tpu.matmul %37, %38, %cst_37 {dimension_numbers = #tpu.dot_dimension_numbers<[1], [0], [0], [1], [0, 0, 1, 1], [], []>} : vector<16x128xf32>, vector<128x128xf32>, vector<16x128xf32> -> vector<16x128xf32>
    %40 = arith.mulf %33, %33 : vector<16x64xf32>
    %c0_38 = arith.constant 0 : index
    %c0_39 = arith.constant 0 : index
    %41 = vector.load %arg11[%c0_38, %c0_39] : memref<64x64xf32, #tpu.memory_space<vmem>>, vector<64x64xf32>
    %cst_40 = arith.constant dense<0.000000e+00> : vector<16x64xf32>
    %42 = tpu.matmul %40, %41, %cst_40 {dimension_numbers = #tpu.dot_dimension_numbers<[1], [0], [0], [1], [0, 0, 1, 1], [], []>} : vector<16x64xf32>, vector<64x64xf32>, vector<16x64xf32> -> vector<16x64xf32>
    %cst_41 = arith.constant 9.99999997E-7 : f32
    %43 = vector.broadcast %cst_41 : f32 to vector<16x128xf32>
    %44 = arith.addf %39, %43 : vector<16x128xf32>
    %45 = math.rsqrt %44 : vector<16x128xf32>
    %46 = arith.mulf %30, %45 : vector<16x128xf32>
    %47 = vector.broadcast %10 : vector<1x128xf32> to vector<16x128xf32>
    %48 = arith.mulf %46, %47 : vector<16x128xf32>
    %cst_42 = arith.constant 9.99999997E-7 : f32
    %49 = vector.broadcast %cst_42 : f32 to vector<16x64xf32>
    %50 = arith.addf %42, %49 : vector<16x64xf32>
    %51 = math.rsqrt %50 : vector<16x64xf32>
    %52 = arith.mulf %33, %51 : vector<16x64xf32>
    %53 = vector.broadcast %12 : vector<1x64xf32> to vector<16x64xf32>
    %54 = arith.mulf %52, %53 : vector<16x64xf32>
    %55 = arith.mulf %48, %4 : vector<16x128xf32>
    %c0_43 = arith.constant 0 : index
    %c0_44 = arith.constant 0 : index
    %56 = vector.load %arg8[%c0_43, %c0_44] : memref<128x128xf32, #tpu.memory_space<vmem>>, vector<128x128xf32>
    %cst_45 = arith.constant dense<0.000000e+00> : vector<16x128xf32>
    %57 = tpu.matmul %48, %56, %cst_45 {dimension_numbers = #tpu.dot_dimension_numbers<[1], [0], [0], [1], [0, 0, 1, 1], [], []>} : vector<16x128xf32>, vector<128x128xf32>, vector<16x128xf32> -> vector<16x128xf32>
    %58 = arith.mulf %57, %5 : vector<16x128xf32>
    %59 = arith.addf %55, %58 : vector<16x128xf32>
    %60 = arith.mulf %54, %6 : vector<16x64xf32>
    %c0_46 = arith.constant 0 : index
    %c0_47 = arith.constant 0 : index
    %61 = vector.load %arg9[%c0_46, %c0_47] : memref<64x64xf32, #tpu.memory_space<vmem>>, vector<64x64xf32>
    %cst_48 = arith.constant dense<0.000000e+00> : vector<16x64xf32>
    %62 = tpu.matmul %54, %61, %cst_48 {dimension_numbers = #tpu.dot_dimension_numbers<[1], [0], [0], [1], [0, 0, 1, 1], [], []>} : vector<16x64xf32>, vector<64x64xf32>, vector<16x64xf32> -> vector<16x64xf32>
    %63 = arith.mulf %62, %7 : vector<16x64xf32>
    %64 = arith.addf %60, %63 : vector<16x64xf32>
    %65 = arith.truncf %59 : vector<16x128xf32> to vector<16x128xbf16>
    %66 = arith.truncf %64 : vector<16x64xf32> to vector<16x64xbf16>
    %67 = arith.truncf %36 : vector<16x64xf32> to vector<16x64xbf16>
    %68 = vector.extract_strided_slice %65 {offsets = [0, 0], sizes = [16, 32], strides = [1, 1]} : vector<16x128xbf16> to vector<16x32xbf16>
    %69 = vector.extract_strided_slice %66 {offsets = [0, 0], sizes = [16, 32], strides = [1, 1]} : vector<16x64xbf16> to vector<16x32xbf16>
    %70 = vector.extract_strided_slice %67 {offsets = [0, 0], sizes = [16, 32], strides = [1, 1]} : vector<16x64xbf16> to vector<16x32xbf16>
    %cst_49 = arith.constant dense<0.000000e+00> : vector<16x16xf32>
    %71 = tpu.matmul %68, %69, %cst_49 {dimension_numbers = #tpu.dot_dimension_numbers<[1], [1], [0], [0], [0, 0, 1, 0], [], []>} : vector<16x32xbf16>, vector<16x32xbf16>, vector<16x16xf32> -> vector<16x16xf32>
    %72 = arith.addf %71, %8 : vector<16x16xf32>
    %cst_50 = arith.constant dense<0xFF800000> : vector<16xf32>
    %73 = vector.multi_reduction <maximumf>, %72, %cst_50 [1] : vector<16x16xf32> to vector<16xf32>
    %74 = vector.shape_cast %73 : vector<16xf32> to vector<16x1xf32>
    %75 = vector.broadcast %74 : vector<16x1xf32> to vector<16x16xf32>
    %76 = arith.subf %72, %75 : vector<16x16xf32>
    %77 = math.exp %76 : vector<16x16xf32>
    %cst_51 = arith.constant dense<0.000000e+00> : vector<16xf32>
    %78 = vector.multi_reduction <add>, %77, %cst_51 [1] : vector<16x16xf32> to vector<16xf32>
    %79 = vector.shape_cast %78 : vector<16xf32> to vector<16x1xf32>
    %80 = tpu.reciprocal %79 {approx = true} : vector<16x1xf32> -> vector<16x1xf32>
    %81 = vector.broadcast %80 : vector<16x1xf32> to vector<16x16xf32>
    %82 = arith.mulf %77, %81 : vector<16x16xf32>
    %83 = arith.truncf %82 : vector<16x16xf32> to vector<16x16xbf16>
    %cst_52 = arith.constant dense<0.000000e+00> : vector<16x32xf32>
    %84 = tpu.matmul %83, %70, %cst_52 {dimension_numbers = #tpu.dot_dimension_numbers<[1], [0], [0], [1], [0, 0, 1, 1], [], []>} : vector<16x16xbf16>, vector<16x32xbf16>, vector<16x32xf32> -> vector<16x32xf32>
    %85 = vector.extract_strided_slice %65 {offsets = [0, 32], sizes = [16, 32], strides = [1, 1]} : vector<16x128xbf16> to vector<16x32xbf16>
    %86 = vector.extract_strided_slice %66 {offsets = [0, 0], sizes = [16, 32], strides = [1, 1]} : vector<16x64xbf16> to vector<16x32xbf16>
    %87 = vector.extract_strided_slice %67 {offsets = [0, 0], sizes = [16, 32], strides = [1, 1]} : vector<16x64xbf16> to vector<16x32xbf16>
    %cst_53 = arith.constant dense<0.000000e+00> : vector<16x16xf32>
    %88 = tpu.matmul %85, %86, %cst_53 {dimension_numbers = #tpu.dot_dimension_numbers<[1], [1], [0], [0], [0, 0, 1, 0], [], []>} : vector<16x32xbf16>, vector<16x32xbf16>, vector<16x16xf32> -> vector<16x16xf32>
    %89 = arith.addf %88, %8 : vector<16x16xf32>
    %cst_54 = arith.constant dense<0xFF800000> : vector<16xf32>
    %90 = vector.multi_reduction <maximumf>, %89, %cst_54 [1] : vector<16x16xf32> to vector<16xf32>
    %91 = vector.shape_cast %90 : vector<16xf32> to vector<16x1xf32>
    %92 = vector.broadcast %91 : vector<16x1xf32> to vector<16x16xf32>
    %93 = arith.subf %89, %92 : vector<16x16xf32>
    %94 = math.exp %93 : vector<16x16xf32>
    %cst_55 = arith.constant dense<0.000000e+00> : vector<16xf32>
    %95 = vector.multi_reduction <add>, %94, %cst_55 [1] : vector<16x16xf32> to vector<16xf32>
    %96 = vector.shape_cast %95 : vector<16xf32> to vector<16x1xf32>
    %97 = tpu.reciprocal %96 {approx = true} : vector<16x1xf32> -> vector<16x1xf32>
    %98 = vector.broadcast %97 : vector<16x1xf32> to vector<16x16xf32>
    %99 = arith.mulf %94, %98 : vector<16x16xf32>
    %100 = arith.truncf %99 : vector<16x16xf32> to vector<16x16xbf16>
    %cst_56 = arith.constant dense<0.000000e+00> : vector<16x32xf32>
    %101 = tpu.matmul %100, %87, %cst_56 {dimension_numbers = #tpu.dot_dimension_numbers<[1], [0], [0], [1], [0, 0, 1, 1], [], []>} : vector<16x16xbf16>, vector<16x32xbf16>, vector<16x32xf32> -> vector<16x32xf32>
    %102 = vector.extract_strided_slice %65 {offsets = [0, 64], sizes = [16, 32], strides = [1, 1]} : vector<16x128xbf16> to vector<16x32xbf16>
    %103 = vector.extract_strided_slice %66 {offsets = [0, 32], sizes = [16, 32], strides = [1, 1]} : vector<16x64xbf16> to vector<16x32xbf16>
    %104 = vector.extract_strided_slice %67 {offsets = [0, 32], sizes = [16, 32], strides = [1, 1]} : vector<16x64xbf16> to vector<16x32xbf16>
    %cst_57 = arith.constant dense<0.000000e+00> : vector<16x16xf32>
    %105 = tpu.matmul %102, %103, %cst_57 {dimension_numbers = #tpu.dot_dimension_numbers<[1], [1], [0], [0], [0, 0, 1, 0], [], []>} : vector<16x32xbf16>, vector<16x32xbf16>, vector<16x16xf32> -> vector<16x16xf32>
    %106 = arith.addf %105, %8 : vector<16x16xf32>
    %cst_58 = arith.constant dense<0xFF800000> : vector<16xf32>
    %107 = vector.multi_reduction <maximumf>, %106, %cst_58 [1] : vector<16x16xf32> to vector<16xf32>
    %108 = vector.shape_cast %107 : vector<16xf32> to vector<16x1xf32>
    %109 = vector.broadcast %108 : vector<16x1xf32> to vector<16x16xf32>
    %110 = arith.subf %106, %109 : vector<16x16xf32>
    %111 = math.exp %110 : vector<16x16xf32>
    %cst_59 = arith.constant dense<0.000000e+00> : vector<16xf32>
    %112 = vector.multi_reduction <add>, %111, %cst_59 [1] : vector<16x16xf32> to vector<16xf32>
    %113 = vector.shape_cast %112 : vector<16xf32> to vector<16x1xf32>
    %114 = tpu.reciprocal %113 {approx = true} : vector<16x1xf32> -> vector<16x1xf32>
    %115 = vector.broadcast %114 : vector<16x1xf32> to vector<16x16xf32>
    %116 = arith.mulf %111, %115 : vector<16x16xf32>
    %117 = arith.truncf %116 : vector<16x16xf32> to vector<16x16xbf16>
    %cst_60 = arith.constant dense<0.000000e+00> : vector<16x32xf32>
    %118 = tpu.matmul %117, %104, %cst_60 {dimension_numbers = #tpu.dot_dimension_numbers<[1], [0], [0], [1], [0, 0, 1, 1], [], []>} : vector<16x16xbf16>, vector<16x32xbf16>, vector<16x32xf32> -> vector<16x32xf32>
    %119 = vector.extract_strided_slice %65 {offsets = [0, 96], sizes = [16, 32], strides = [1, 1]} : vector<16x128xbf16> to vector<16x32xbf16>
    %120 = vector.extract_strided_slice %66 {offsets = [0, 32], sizes = [16, 32], strides = [1, 1]} : vector<16x64xbf16> to vector<16x32xbf16>
    %121 = vector.extract_strided_slice %67 {offsets = [0, 32], sizes = [16, 32], strides = [1, 1]} : vector<16x64xbf16> to vector<16x32xbf16>
    %cst_61 = arith.constant dense<0.000000e+00> : vector<16x16xf32>
    %122 = tpu.matmul %119, %120, %cst_61 {dimension_numbers = #tpu.dot_dimension_numbers<[1], [1], [0], [0], [0, 0, 1, 0], [], []>} : vector<16x32xbf16>, vector<16x32xbf16>, vector<16x16xf32> -> vector<16x16xf32>
    %123 = arith.addf %122, %8 : vector<16x16xf32>
    %cst_62 = arith.constant dense<0xFF800000> : vector<16xf32>
    %124 = vector.multi_reduction <maximumf>, %123, %cst_62 [1] : vector<16x16xf32> to vector<16xf32>
    %125 = vector.shape_cast %124 : vector<16xf32> to vector<16x1xf32>
    %126 = vector.broadcast %125 : vector<16x1xf32> to vector<16x16xf32>
    %127 = arith.subf %123, %126 : vector<16x16xf32>
    %128 = math.exp %127 : vector<16x16xf32>
    %cst_63 = arith.constant dense<0.000000e+00> : vector<16xf32>
    %129 = vector.multi_reduction <add>, %128, %cst_63 [1] : vector<16x16xf32> to vector<16xf32>
    %130 = vector.shape_cast %129 : vector<16xf32> to vector<16x1xf32>
    %131 = tpu.reciprocal %130 {approx = true} : vector<16x1xf32> -> vector<16x1xf32>
    %132 = vector.broadcast %131 : vector<16x1xf32> to vector<16x16xf32>
    %133 = arith.mulf %128, %132 : vector<16x16xf32>
    %134 = arith.truncf %133 : vector<16x16xf32> to vector<16x16xbf16>
    %cst_64 = arith.constant dense<0.000000e+00> : vector<16x32xf32>
    %135 = tpu.matmul %134, %121, %cst_64 {dimension_numbers = #tpu.dot_dimension_numbers<[1], [0], [0], [1], [0, 0, 1, 1], [], []>} : vector<16x16xbf16>, vector<16x32xbf16>, vector<16x32xf32> -> vector<16x32xf32>
    %136 = tpu.concatenate %84, %101, %118, %135 in 1 : vector<16x32xf32>, vector<16x32xf32>, vector<16x32xf32>, vector<16x32xf32> -> vector<16x128xf32>
    %c0_65 = arith.constant 0 : index
    %c0_66 = arith.constant 0 : index
    %c0_67 = arith.constant 0 : index
    %137 = vector.load %arg18[%c0_65, %c0_66, %c0_67] : memref<1x128x128xbf16, #tpu.memory_space<vmem>>, vector<1x128x128xbf16>
    %138 = vector.shape_cast %137 : vector<1x128x128xbf16> to vector<128x128xbf16>
    %139 = arith.truncf %136 : vector<16x128xf32> to vector<16x128xbf16>
    %cst_68 = arith.constant dense<0.000000e+00> : vector<16x128xf32>
    %140 = tpu.matmul %139, %138, %cst_68 {dimension_numbers = #tpu.dot_dimension_numbers<[1], [0], [0], [1], [0, 0, 1, 1], [], []>} : vector<16x128xbf16>, vector<128x128xbf16>, vector<16x128xf32> -> vector<16x128xf32>
    %141 = arith.addf %3, %140 : vector<16x128xf32>
    %c0_69 = arith.constant 0 : index
    %c0_70 = arith.constant 0 : index
    %c0_71 = arith.constant 0 : index
    %142 = vector.load %arg21[%c0_69, %c0_70, %c0_71] : memref<1x1x128xf32, #tpu.memory_space<vmem>>, vector<1x1x128xf32>
    %143 = vector.shape_cast %142 : vector<1x1x128xf32> to vector<1x128xf32>
    %144 = arith.mulf %141, %141 : vector<16x128xf32>
    %cst_72 = arith.constant dense<0.000000e+00> : vector<16xf32>
    %145 = vector.multi_reduction <add>, %144, %cst_72 [1] : vector<16x128xf32> to vector<16xf32>
    %146 = vector.shape_cast %145 : vector<16xf32> to vector<16x1xf32>
    %cst_73 = arith.constant 1.280000e+02 : f32
    %147 = vector.broadcast %cst_73 : f32 to vector<16x1xf32>
    %148 = arith.divf %146, %147 : vector<16x1xf32>
    %cst_74 = arith.constant 9.99999997E-7 : f32
    %149 = vector.broadcast %cst_74 : f32 to vector<16x1xf32>
    %150 = arith.addf %148, %149 : vector<16x1xf32>
    %151 = math.rsqrt %150 : vector<16x1xf32>
    %152 = vector.broadcast %151 : vector<16x1xf32> to vector<16x128xf32>
    %153 = arith.mulf %141, %152 : vector<16x128xf32>
    %154 = vector.broadcast %143 : vector<1x128xf32> to vector<16x128xf32>
    %155 = arith.mulf %154, %153 : vector<16x128xf32>
    %156 = arith.truncf %155 : vector<16x128xf32> to vector<16x128xbf16>
    %c0_75 = arith.constant 0 : index
    %c0_76 = arith.constant 0 : index
    %c0_77 = arith.constant 0 : index
    %157 = vector.load %arg22[%c0_75, %c0_76, %c0_77] : memref<1x128x256xbf16, #tpu.memory_space<vmem>>, vector<1x128x256xbf16>
    %158 = vector.shape_cast %157 : vector<1x128x256xbf16> to vector<128x256xbf16>
    %cst_78 = arith.constant dense<0.000000e+00> : vector<16x256xf32>
    %159 = tpu.matmul %156, %158, %cst_78 {dimension_numbers = #tpu.dot_dimension_numbers<[1], [0], [0], [1], [0, 0, 1, 1], [], []>} : vector<16x128xbf16>, vector<128x256xbf16>, vector<16x256xf32> -> vector<16x256xf32>
    %c0_79 = arith.constant 0 : index
    %c0_80 = arith.constant 0 : index
    %c0_81 = arith.constant 0 : index
    %160 = vector.load %arg23[%c0_79, %c0_80, %c0_81] : memref<1x128x256xbf16, #tpu.memory_space<vmem>>, vector<1x128x256xbf16>
    %161 = vector.shape_cast %160 : vector<1x128x256xbf16> to vector<128x256xbf16>
    %cst_82 = arith.constant dense<0.000000e+00> : vector<16x256xf32>
    %162 = tpu.matmul %156, %161, %cst_82 {dimension_numbers = #tpu.dot_dimension_numbers<[1], [0], [0], [1], [0, 0, 1, 1], [], []>} : vector<16x128xbf16>, vector<128x256xbf16>, vector<16x256xf32> -> vector<16x256xf32>
    %163 = arith.negf %159 : vector<16x256xf32>
    %164 = math.exp %163 : vector<16x256xf32>
    %cst_83 = arith.constant 1.000000e+00 : f32
    %165 = vector.broadcast %cst_83 : f32 to vector<16x256xf32>
    %166 = arith.addf %165, %164 : vector<16x256xf32>
    %167 = arith.divf %165, %166 : vector<16x256xf32>
    %168 = arith.mulf %159, %167 : vector<16x256xf32>
    %169 = arith.mulf %168, %162 : vector<16x256xf32>
    %c0_84 = arith.constant 0 : index
    %c0_85 = arith.constant 0 : index
    %c0_86 = arith.constant 0 : index
    %170 = vector.load %arg24[%c0_84, %c0_85, %c0_86] : memref<1x256x128xbf16, #tpu.memory_space<vmem>>, vector<1x256x128xbf16>
    %171 = vector.shape_cast %170 : vector<1x256x128xbf16> to vector<256x128xbf16>
    %172 = arith.truncf %169 : vector<16x256xf32> to vector<16x256xbf16>
    %cst_87 = arith.constant dense<0.000000e+00> : vector<16x128xf32>
    %173 = tpu.matmul %172, %171, %cst_87 {dimension_numbers = #tpu.dot_dimension_numbers<[1], [0], [0], [1], [0, 0, 1, 1], [], []>} : vector<16x256xbf16>, vector<256x128xbf16>, vector<16x128xf32> -> vector<16x128xf32>
    %174 = arith.addf %141, %173 : vector<16x128xf32>
    %c0_88 = arith.constant 0 : index
    %c0_89 = arith.constant 0 : index
    %175 = vector.load %arg26[%c0_88, %c0_89] : memref<16x128xf32, #tpu.memory_space<vmem>>, vector<16x128xf32>
    tpu.vector_store %arg26[%c0_88, %c0_89], %174 {strides = array<i32>} : memref<16x128xf32, #tpu.memory_space<vmem>>, vector<16x128xf32>,
    %c1_i32 = arith.constant 1 : i32
    %176 = arith.cmpi eq, %arg1, %c1_i32 : i32
    %177 = arith.extui %176 : i1 to i32
    %c0_i32_90 = arith.constant 0 : i32
    %178 = arith.cmpi ne, %177, %c0_i32_90 : i32
    scf.if %178 {
      %c0_91 = arith.constant 0 : index
      %c0_92 = arith.constant 0 : index
      %179 = vector.load %arg13[%c0_91, %c0_92] : memref<1x128xf32, #tpu.memory_space<vmem>>, vector<1x128xf32>
      %180 = arith.mulf %174, %174 : vector<16x128xf32>
      %cst_93 = arith.constant dense<0.000000e+00> : vector<16xf32>
      %181 = vector.multi_reduction <add>, %180, %cst_93 [1] : vector<16x128xf32> to vector<16xf32>
      %182 = vector.shape_cast %181 : vector<16xf32> to vector<16x1xf32>
      %cst_94 = arith.constant 1.280000e+02 : f32
      %183 = vector.broadcast %cst_94 : f32 to vector<16x1xf32>
      %184 = arith.divf %182, %183 : vector<16x1xf32>
      %cst_95 = arith.constant 9.99999997E-7 : f32
      %185 = vector.broadcast %cst_95 : f32 to vector<16x1xf32>
      %186 = arith.addf %184, %185 : vector<16x1xf32>
      %187 = math.rsqrt %186 : vector<16x1xf32>
      %188 = vector.broadcast %187 : vector<16x1xf32> to vector<16x128xf32>
      %189 = arith.mulf %174, %188 : vector<16x128xf32>
      %190 = vector.broadcast %179 : vector<1x128xf32> to vector<16x128xf32>
      %191 = arith.mulf %190, %189 : vector<16x128xf32>
      %c0_96 = arith.constant 0 : index
      %c0_97 = arith.constant 0 : index
      %192 = vector.load %arg25[%c0_96, %c0_97] : memref<16x128xf32, #tpu.memory_space<vmem>>, vector<16x128xf32>
      tpu.vector_store %arg25[%c0_96, %c0_97], %191 {strides = array<i32>} : memref<16x128xf32, #tpu.memory_space<vmem>>, vector<16x128xf32>,
    } else {
    }
    return
  }
  func.func @transform_0(%arg0: i32, %arg1: i32) -> i32 {
    %c0_i32 = arith.constant 0 : i32
    %c0_i32_0 = arith.constant 0 : i32
    return %c0_i32 : i32
  }
  func.func @transform_1(%arg0: i32, %arg1: i32) -> (i32, i32) {
    %c0_i32 = arith.constant 0 : i32
    %c0_i32_0 = arith.constant 0 : i32
    %c0_i32_1 = arith.constant 0 : i32
    return %c0_i32, %c0_i32_0 : i32, i32
  }
  func.func @transform_2(%arg0: i32, %arg1: i32) -> (i32, i32) {
    %c0_i32 = arith.constant 0 : i32
    %c0_i32_0 = arith.constant 0 : i32
    %c0_i32_1 = arith.constant 0 : i32
    return %c0_i32, %c0_i32_0 : i32, i32
  }
  func.func @transform_3(%arg0: i32, %arg1: i32) -> (i32, i32) {
    %c0_i32 = arith.constant 0 : i32
    %c0_i32_0 = arith.constant 0 : i32
    %c0_i32_1 = arith.constant 0 : i32
    return %c0_i32, %c0_i32_0 : i32, i32
  }
  func.func @transform_4(%arg0: i32, %arg1: i32) -> (i32, i32) {
    %c0_i32 = arith.constant 0 : i32
    %c0_i32_0 = arith.constant 0 : i32
    %c0_i32_1 = arith.constant 0 : i32
    return %c0_i32, %c0_i32_0 : i32, i32
  }
  func.func @transform_5(%arg0: i32, %arg1: i32) -> (i32, i32) {
    %c0_i32 = arith.constant 0 : i32
    %c0_i32_0 = arith.constant 0 : i32
    %c0_i32_1 = arith.constant 0 : i32
    return %c0_i32, %c0_i32_0 : i32, i32
  }
  func.func @transform_6(%arg0: i32, %arg1: i32) -> (i32, i32) {
    %c0_i32 = arith.constant 0 : i32
    %c0_i32_0 = arith.constant 0 : i32
    %c0_i32_1 = arith.constant 0 : i32
    return %c0_i32, %c0_i32_0 : i32, i32
  }
  func.func @transform_7(%arg0: i32, %arg1: i32) -> (i32, i32) {
    %c0_i32 = arith.constant 0 : i32
    %c0_i32_0 = arith.constant 0 : i32
    %c0_i32_1 = arith.constant 0 : i32
    return %c0_i32, %c0_i32_0 : i32, i32
  }
  func.func @transform_8(%arg0: i32, %arg1: i32) -> (i32, i32) {
    %c0_i32 = arith.constant 0 : i32
    %c0_i32_0 = arith.constant 0 : i32
    %c0_i32_1 = arith.constant 0 : i32
    return %c0_i32, %c0_i32_0 : i32, i32
  }
  func.func @transform_9(%arg0: i32, %arg1: i32) -> (i32, i32) {
    %c0_i32 = arith.constant 0 : i32
    %c0_i32_0 = arith.constant 0 : i32
    %c0_i32_1 = arith.constant 0 : i32
    return %c0_i32, %c0_i32_0 : i32, i32
  }
  func.func @transform_10(%arg0: i32, %arg1: i32) -> (i32, i32) {
    %c0_i32 = arith.constant 0 : i32
    %c0_i32_0 = arith.constant 0 : i32
    %c0_i32_1 = arith.constant 0 : i32
    return %c0_i32, %c0_i32_0 : i32, i32
  }
  func.func @transform_11(%arg0: i32, %arg1: i32) -> (i32, i32) {
    %c0_i32 = arith.constant 0 : i32
    %c0_i32_0 = arith.constant 0 : i32
    %c0_i32_1 = arith.constant 0 : i32
    return %c0_i32, %c0_i32_0 : i32, i32
  }
  func.func @transform_12(%arg0: i32, %arg1: i32) -> (i32, i32, i32) {
    %c0_i32 = arith.constant 0 : i32
    %c0_i32_0 = arith.constant 0 : i32
    %c0_i32_1 = arith.constant 0 : i32
    return %arg1, %c0_i32, %c0_i32_0 : i32, i32, i32
  }
  func.func @transform_13(%arg0: i32, %arg1: i32) -> (i32, i32, i32) {
    %c0_i32 = arith.constant 0 : i32
    %c0_i32_0 = arith.constant 0 : i32
    %c0_i32_1 = arith.constant 0 : i32
    return %arg1, %c0_i32, %c0_i32_0 : i32, i32, i32
  }
  func.func @transform_14(%arg0: i32, %arg1: i32) -> (i32, i32, i32) {
    %c0_i32 = arith.constant 0 : i32
    %c0_i32_0 = arith.constant 0 : i32
    %c0_i32_1 = arith.constant 0 : i32
    return %arg1, %c0_i32, %c0_i32_0 : i32, i32, i32
  }
  func.func @transform_15(%arg0: i32, %arg1: i32) -> (i32, i32, i32) {
    %c0_i32 = arith.constant 0 : i32
    %c0_i32_0 = arith.constant 0 : i32
    %c0_i32_1 = arith.constant 0 : i32
    return %arg1, %c0_i32, %c0_i32_0 : i32, i32, i32
  }
  func.func @transform_16(%arg0: i32, %arg1: i32) -> (i32, i32, i32) {
    %c0_i32 = arith.constant 0 : i32
    %c0_i32_0 = arith.constant 0 : i32
    %c0_i32_1 = arith.constant 0 : i32
    return %arg1, %c0_i32, %c0_i32_0 : i32, i32, i32
  }
  func.func @transform_17(%arg0: i32, %arg1: i32) -> (i32, i32, i32) {
    %c0_i32 = arith.constant 0 : i32
    %c0_i32_0 = arith.constant 0 : i32
    %c0_i32_1 = arith.constant 0 : i32
    return %arg1, %c0_i32, %c0_i32_0 : i32, i32, i32
  }
  func.func @transform_18(%arg0: i32, %arg1: i32) -> (i32, i32, i32) {
    %c0_i32 = arith.constant 0 : i32
    %c0_i32_0 = arith.constant 0 : i32
    %c0_i32_1 = arith.constant 0 : i32
    return %arg1, %c0_i32, %c0_i32_0 : i32, i32, i32
  }
  func.func @transform_19(%arg0: i32, %arg1: i32) -> (i32, i32, i32) {
    %c0_i32 = arith.constant 0 : i32
    %c0_i32_0 = arith.constant 0 : i32
    %c0_i32_1 = arith.constant 0 : i32
    return %arg1, %c0_i32, %c0_i32_0 : i32, i32, i32
  }
  func.func @transform_20(%arg0: i32, %arg1: i32) -> (i32, i32, i32) {
    %c0_i32 = arith.constant 0 : i32
    %c0_i32_0 = arith.constant 0 : i32
    %c0_i32_1 = arith.constant 0 : i32
    return %arg1, %c0_i32, %c0_i32_0 : i32, i32, i32
  }
  func.func @transform_21(%arg0: i32, %arg1: i32) -> (i32, i32, i32) {
    %c0_i32 = arith.constant 0 : i32
    %c0_i32_0 = arith.constant 0 : i32
    %c0_i32_1 = arith.constant 0 : i32
    return %arg1, %c0_i32, %c0_i32_0 : i32, i32, i32
  }
  func.func @transform_22(%arg0: i32, %arg1: i32) -> (i32, i32, i32) {
    %c0_i32 = arith.constant 0 : i32
    %c0_i32_0 = arith.constant 0 : i32
    %c0_i32_1 = arith.constant 0 : i32
    return %arg1, %c0_i32, %c0_i32_0 : i32, i32, i32
  }
  func.func @transform_23(%arg0: i32, %arg1: i32) -> (i32, i32) {
    %c0_i32 = arith.constant 0 : i32
    %c0_i32_0 = arith.constant 0 : i32
    return %arg0, %c0_i32 : i32, i32
  }
}

</mosaic_0001>

<llo_original>
// kernel: tile.39
$region0: #{tile.39}
  %s0 = inlined_call_operand.vmem [shape: f32[16,2,32], index: 0, kind: input, shape index: {}]
  %s1 = inlined_call_operand.vmem [shape: f32[16,64], index: 1, kind: output, shape index: {}]
  $region1: #{tile.39} parent=0
    #allocation0 [shape = 'u8[65536]{0}', space=vmem, size = 0x10000, scoped, tag = 'scoped mem for input reshape']
    %s3 = ssub.s32 4, 1
    %s4 = scalar_lea.vmem %s0, 30
    %v5 = vld [vmem:[%s4] sm:%s3]
    %s6 = scalar_lea.vmem [#allocation0], 120
    %7 = vst [vmem:[%s6] sm:%s3] %v5
    %s8 = scalar_lea.vmem %s0, 28
    %v9 = vld [vmem:[%s8] sm:%s3]
    %s10 = scalar_lea.vmem [#allocation0], 112
    %11 = vst [vmem:[%s10] sm:%s3] %v9
    %s12 = scalar_lea.vmem %s0, 26
    %v13 = vld [vmem:[%s12] sm:%s3]
    %s14 = scalar_lea.vmem [#allocation0], 104
    %15 = vst [vmem:[%s14] sm:%s3] %v13
    %s16 = scalar_lea.vmem %s0, 24
    %v17 = vld [vmem:[%s16] sm:%s3]
    %s18 = scalar_lea.vmem [#allocation0], 96
    %19 = vst [vmem:[%s18] sm:%s3] %v17
    %s20 = scalar_lea.vmem %s0, 22
    %v21 = vld [vmem:[%s20] sm:%s3]
    %s22 = scalar_lea.vmem [#allocation0], 88
    %23 = vst [vmem:[%s22] sm:%s3] %v21
    %s24 = scalar_lea.vmem %s0, 20
    %v25 = vld [vmem:[%s24] sm:%s3]
    %s26 = scalar_lea.vmem [#allocation0], 80
    %27 = vst [vmem:[%s26] sm:%s3] %v25
    %s28 = scalar_lea.vmem %s0, 18
    %v29 = vld [vmem:[%s28] sm:%s3]
    %s30 = scalar_lea.vmem [#allocation0], 72
    %31 = vst [vmem:[%s30] sm:%s3] %v29
    %s32 = scalar_lea.vmem %s0, 16
    %v33 = vld [vmem:[%s32] sm:%s3]
    %s34 = scalar_lea.vmem [#allocation0], 64
    %35 = vst [vmem:[%s34] sm:%s3] %v33
    %s36 = scalar_lea.vmem %s0, 14
    %v37 = vld [vmem:[%s36] sm:%s3]
    %s38 = scalar_lea.vmem [#allocation0], 56
    %39 = vst [vmem:[%s38] sm:%s3] %v37
    %s40 = scalar_lea.vmem %s0, 12
    %v41 = vld [vmem:[%s40] sm:%s3]
    %s42 = scalar_lea.vmem [#allocation0], 48
    %43 = vst [vmem:[%s42] sm:%s3] %v41
    %s44 = scalar_lea.vmem %s0, 10
    %v45 = vld [vmem:[%s44] sm:%s3]
    %s46 = scalar_lea.vmem [#allocation0], 40
    %47 = vst [vmem:[%s46] sm:%s3] %v45
    %s48 = scalar_lea.vmem %s0, 8
    %v49 = vld [vmem:[%s48] sm:%s3]
    %s50 = scalar_lea.vmem [#allocation0], 32
    %51 = vst [vmem:[%s50] sm:%s3] %v49
    %s52 = scalar_lea.vmem %s0, 6
    %v53 = vld [vmem:[%s52] sm:%s3]
    %s54 = scalar_lea.vmem [#allocation0], 24
    %55 = vst [vmem:[%s54] sm:%s3] %v53
    %s56 = scalar_lea.vmem %s0, 4
    %v57 = vld [vmem:[%s56] sm:%s3]
    %s58 = scalar_lea.vmem [#allocation0], 16
    %59 = vst [vmem:[%s58] sm:%s3] %v57
    %s60 = scalar_lea.vmem %s0, 2
    %v61 = vld [vmem:[%s60] sm:%s3]
    %s62 = scalar_lea.vmem [#allocation0], 8
    %63 = vst [vmem:[%s62] sm:%s3] %v61
    %v64 = vld [vmem:[%s0] sm:%s3]
    %65 = vst [vmem:[#allocation0] sm:%s3] %v64
    %v66 = vld [vmem:[#allocation0] ss:$8 sm:$0xf]
    %v67 = vld [vmem:[#allocation0] ss:$8 sm:$0xf0]
    %vm68 = vcmask 1047556
    %v69 = vsel %vm68, %v67, %v66
    %vm70 = vcmask 261120
    %71 = vst.msk [vmem:[%s1] sm:$0xff] %vm70, %v69
    %s72 = scalar_lea.vmem [#allocation0], 64
    %v73 = vld [vmem:[%s72] ss:$8 sm:$0xf]
    %s74 = scalar_lea.vmem [#allocation0], 64
    %v75 = vld [vmem:[%s74] ss:$8 sm:$0xf0]
    %vm76 = vcmask 1047556
    %v77 = vsel %vm76, %v75, %v73
    %vm78 = vcmask 261120
    %s79 = scalar_lea.vmem %s1, 8
    %80 = vst.msk [vmem:[%s79] sm:$0xff] %vm78, %v77
    %s81 = scalar_lea.vmem [#allocation0], 1
    %v82 = vld [vmem:[%s81] ss:$8 sm:$0xf]
    %s83 = scalar_lea.vmem [#allocation0], 1
    %v84 = vld [vmem:[%s83] ss:$8 sm:$0xf0]
    %vm85 = vcmask 1047556
    %v86 = vsel %vm85, %v84, %v82
    %87 = vrot.lane.b32.xlu0 %v86, 32
    %v88 = vpop.permute.xlu0 %87
    %vm89 = vcmask 523520
    %90 = vst.msk [vmem:[%s1] sm:$0xff] %vm89, %v88
    %s91 = scalar_lea.vmem [#allocation0], 65
    %v92 = vld [vmem:[%s91] ss:$8 sm:$0xf]
    %s93 = scalar_lea.vmem [#allocation0], 65
    %v94 = vld [vmem:[%s93] ss:$8 sm:$0xf0]
    %vm95 = vcmask 1047556
    %v96 = vsel %vm95, %v94, %v92
    %97 = vrot.lane.b32.xlu0 %v96, 32
    %v98 = vpop.permute.xlu0 %97
    %vm99 = vcmask 523520
    %s100 = scalar_lea.vmem %s1, 8
    %101 = vst.msk [vmem:[%s100] sm:$0xff] %vm99, %v98

// kernel: tile.24
$region0: #{tile.24}
  %s0 = inlined_call_operand.vmem [shape: f32[16,4,32], index: 0, kind: input, shape index: {}]
  %s1 = inlined_call_operand.vmem [shape: f32[16,128], index: 1, kind: output, shape index: {}]
  $region1: #{tile.24} parent=0
    #allocation0 [shape = 'u8[65536]{0}', space=vmem, size = 0x10000, scoped, tag = 'scoped mem for input reshape']
    %s3 = ssub.s32 16, 1
    %s4 = scalar_lea.vmem %s0, 60
    %v5 = vld [vmem:[%s4] sm:%s3]
    %s6 = scalar_lea.vmem [#allocation0], 120
    %7 = vst [vmem:[%s6] sm:%s3] %v5
    %s8 = scalar_lea.vmem %s0, 56
    %v9 = vld [vmem:[%s8] sm:%s3]
    %s10 = scalar_lea.vmem [#allocation0], 112
    %11 = vst [vmem:[%s10] sm:%s3] %v9
    %s12 = scalar_lea.vmem %s0, 52
    %v13 = vld [vmem:[%s12] sm:%s3]
    %s14 = scalar_lea.vmem [#allocation0], 104
    %15 = vst [vmem:[%s14] sm:%s3] %v13
    %s16 = scalar_lea.vmem %s0, 48
    %v17 = vld [vmem:[%s16] sm:%s3]
    %s18 = scalar_lea.vmem [#allocation0], 96
    %19 = vst [vmem:[%s18] sm:%s3] %v17
    %s20 = scalar_lea.vmem %s0, 44
    %v21 = vld [vmem:[%s20] sm:%s3]
    %s22 = scalar_lea.vmem [#allocation0], 88
    %23 = vst [vmem:[%s22] sm:%s3] %v21
    %s24 = scalar_lea.vmem %s0, 40
    %v25 = vld [vmem:[%s24] sm:%s3]
    %s26 = scalar_lea.vmem [#allocation0], 80
    %27 = vst [vmem:[%s26] sm:%s3] %v25
    %s28 = scalar_lea.vmem %s0, 36
    %v29 = vld [vmem:[%s28] sm:%s3]
    %s30 = scalar_lea.vmem [#allocation0], 72
    %31 = vst [vmem:[%s30] sm:%s3] %v29
    %s32 = scalar_lea.vmem %s0, 32
    %v33 = vld [vmem:[%s32] sm:%s3]
    %s34 = scalar_lea.vmem [#allocation0], 64
    %35 = vst [vmem:[%s34] sm:%s3] %v33
    %s36 = scalar_lea.vmem %s0, 28
    %v37 = vld [vmem:[%s36] sm:%s3]
    %s38 = scalar_lea.vmem [#allocation0], 56
    %39 = vst [vmem:[%s38] sm:%s3] %v37
    %s40 = scalar_lea.vmem %s0, 24
    %v41 = vld [vmem:[%s40] sm:%s3]
    %s42 = scalar_lea.vmem [#allocation0], 48
    %43 = vst [vmem:[%s42] sm:%s3] %v41
    %s44 = scalar_lea.vmem %s0, 20
    %v45 = vld [vmem:[%s44] sm:%s3]
    %s46 = scalar_lea.vmem [#allocation0], 40
    %47 = vst [vmem:[%s46] sm:%s3] %v45
    %s48 = scalar_lea.vmem %s0, 16
    %v49 = vld [vmem:[%s48] sm:%s3]
    %s50 = scalar_lea.vmem [#allocation0], 32
    %51 = vst [vmem:[%s50] sm:%s3] %v49
    %s52 = scalar_lea.vmem %s0, 12
    %v53 = vld [vmem:[%s52] sm:%s3]
    %s54 = scalar_lea.vmem [#allocation0], 24
    %55 = vst [vmem:[%s54] sm:%s3] %v53
    %s56 = scalar_lea.vmem %s0, 8
    %v57 = vld [vmem:[%s56] sm:%s3]
    %s58 = scalar_lea.vmem [#allocation0], 16
    %59 = vst [vmem:[%s58] sm:%s3] %v57
    %s60 = scalar_lea.vmem %s0, 4
    %v61 = vld [vmem:[%s60] sm:%s3]
    %s62 = scalar_lea.vmem [#allocation0], 8
    %63 = vst [vmem:[%s62] sm:%s3] %v61
    %v64 = vld [vmem:[%s0] sm:%s3]
    %65 = vst [vmem:[#allocation0] sm:%s3] %v64
    %v66 = vld [vmem:[#allocation0] ss:$8 sm:$0xf]
    %v67 = vld [vmem:[#allocation0] ss:$8 sm:$0xf0]
    %vm68 = vcmask 1047556
    %v69 = vsel %vm68, %v67, %v66
    %vm70 = vcmask 261120
    %71 = vst.msk [vmem:[%s1] sm:$0xff] %vm70, %v69
    %s72 = scalar_lea.vmem [#allocation0], 64
    %v73 = vld [vmem:[%s72] ss:$8 sm:$0xf]
    %s74 = scalar_lea.vmem [#allocation0], 64
    %v75 = vld [vmem:[%s74] ss:$8 sm:$0xf0]
    %vm76 = vcmask 1047556
    %v77 = vsel %vm76, %v75, %v73
    %vm78 = vcmask 261120
    %s79 = scalar_lea.vmem %s1, 8
    %80 = vst.msk [vmem:[%s79] sm:$0xff] %vm78, %v77
    %s81 = scalar_lea.vmem [#allocation0], 3
    %v82 = vld [vmem:[%s81] ss:$8 sm:$0xf]
    %s83 = scalar_lea.vmem [#allocation0], 3
    %v84 = vld [vmem:[%s83] ss:$8 sm:$0xf0]
    %vm85 = vcmask 1047556
    %v86 = vsel %vm85, %v84, %v82
    %87 = vrot.lane.b32.xlu0 %v86, 96
    %v88 = vpop.permute.xlu0 %87
    %vm89 = vcmask 1048320
    %90 = vst.msk [vmem:[%s1] sm:$0xff] %vm89, %v88
    %s91 = scalar_lea.vmem [#allocation0], 67
    %v92 = vld [vmem:[%s91] ss:$8 sm:$0xf]
    %s93 = scalar_lea.vmem [#allocation0], 67
    %v94 = vld [vmem:[%s93] ss:$8 sm:$0xf0]
    %vm95 = vcmask 1047556
    %v96 = vsel %vm95, %v94, %v92
    %97 = vrot.lane.b32.xlu0 %v96, 96
    %v98 = vpop.permute.xlu0 %97
    %vm99 = vcmask 1048320
    %s100 = scalar_lea.vmem %s1, 8
    %101 = vst.msk [vmem:[%s100] sm:$0xff] %vm99, %v98
    %s102 = scalar_lea.vmem [#allocation0], 2
    %v103 = vld [vmem:[%s102] ss:$8 sm:$0xf]
    %s104 = scalar_lea.vmem [#allocation0], 2
    %v105 = vld [vmem:[%s104] ss:$8 sm:$0xf0]
    %vm106 = vcmask 1047556
    %v107 = vsel %vm106, %v105, %v103
    %108 = vrot.lane.b32.xlu0 %v107, 64
    %v109 = vpop.permute.xlu0 %108
    %vm110 = vcmask 785920
    %111 = vst.msk [vmem:[%s1] sm:$0xff] %vm110, %v109
    %s112 = scalar_lea.vmem [#allocation0], 66
    %v113 = vld [vmem:[%s112] ss:$8 sm:$0xf]
    %s114 = scalar_lea.vmem [#allocation0], 66
    %v115 = vld [vmem:[%s114] ss:$8 sm:$0xf0]
    %vm116 = vcmask 1047556
    %v117 = vsel %vm116, %v115, %v113
    %118 = vrot.lane.b32.xlu0 %v117, 64
    %v119 = vpop.permute.xlu0 %118
    %vm120 = vcmask 785920
    %s121 = scalar_lea.vmem %s1, 8
    %122 = vst.msk [vmem:[%s121] sm:$0xff] %vm120, %v119
    %s123 = scalar_lea.vmem [#allocation0], 1
    %v124 = vld [vmem:[%s123] ss:$8 sm:$0xf]
    %s125 = scalar_lea.vmem [#allocation0], 1
    %v126 = vld [vmem:[%s125] ss:$8 sm:$0xf0]
    %vm127 = vcmask 1047556
    %v128 = vsel %vm127, %v126, %v124
    %129 = vrot.lane.b32.xlu0 %v128, 32
    %v130 = vpop.permute.xlu0 %129
    %vm131 = vcmask 523520
    %132 = vst.msk [vmem:[%s1] sm:$0xff] %vm131, %v130
    %s133 = scalar_lea.vmem [#allocation0], 65
    %v134 = vld [vmem:[%s133] ss:$8 sm:$0xf]
    %s135 = scalar_lea.vmem [#allocation0], 65
    %v136 = vld [vmem:[%s135] ss:$8 sm:$0xf0]
    %vm137 = vcmask 1047556
    %v138 = vsel %vm137, %v136, %v134
    %139 = vrot.lane.b32.xlu0 %v138, 32
    %v140 = vpop.permute.xlu0 %139
    %vm141 = vcmask 523520
    %s142 = scalar_lea.vmem %s1, 8
    %143 = vst.msk [vmem:[%s142] sm:$0xff] %vm141, %v140

// kernel: qwen3_forward.1
$region0: #{qwen3_forward.1}
  #allocation0 [shape = 'u32[]', space=smem, size = 0x4, offset = 0x4, fixed_abs, tag = 'smem constant byte address 0x4 - core index']
  #allocation1 [shape = 'u32[72,128]{1,0:T(1,128)}', space=vmem, size = 0x9000, scoped, tag = 'internal scratch']
  #allocation2 [shape = 'f32[16,128]{1,0:T(8,128)}', space=vmem, size = 0x2000, scoped, tag = 'scratch operand']
  %s0 = inlined_call_operand.vmem [shape: s32[32], index: 0, kind: input, shape index: {}]
  %s1 = inlined_call_operand.vmem [shape: f32[64,128], index: 1, kind: input, shape index: {}]
  %s2 = inlined_call_operand.vmem [shape: f32[16,128], index: 2, kind: input, shape index: {}]
  %s3 = inlined_call_operand.vmem [shape: f32[16,128], index: 3, kind: input, shape index: {}]
  %s4 = inlined_call_operand.vmem [shape: f32[16,64], index: 4, kind: input, shape index: {}]
  %s5 = inlined_call_operand.vmem [shape: f32[16,64], index: 5, kind: input, shape index: {}]
  %s6 = inlined_call_operand.vmem [shape: f32[128,128], index: 6, kind: input, shape index: {}]
  %s7 = inlined_call_operand.vmem [shape: f32[64,64], index: 7, kind: input, shape index: {}]
  %s8 = inlined_call_operand.vmem [shape: f32[128,128], index: 8, kind: input, shape index: {}]
  %s9 = inlined_call_operand.vmem [shape: f32[64,64], index: 9, kind: input, shape index: {}]
  %s10 = inlined_call_operand.vmem [shape: f32[16,16], index: 10, kind: input, shape index: {}]
  %s11 = inlined_call_operand.vmem [shape: f32[1,128], index: 11, kind: input, shape index: {}]
  %s12 = inlined_call_operand.vmem [shape: f32[2,1,128], index: 12, kind: input, shape index: {}]
  %s13 = inlined_call_operand.vmem [shape: bf16[2,128,128], index: 13, kind: input, shape index: {}]
  %s14 = inlined_call_operand.vmem [shape: bf16[2,128,64], index: 14, kind: input, shape index: {}]
  %s15 = inlined_call_operand.vmem [shape: bf16[2,128,64], index: 15, kind: input, shape index: {}]
  %s16 = inlined_call_operand.vmem [shape: bf16[2,128,128], index: 16, kind: input, shape index: {}]
  %s17 = inlined_call_operand.vmem [shape: f32[2,1,128], index: 17, kind: input, shape index: {}]
  %s18 = inlined_call_operand.vmem [shape: f32[2,1,64], index: 18, kind: input, shape index: {}]
  %s19 = inlined_call_operand.vmem [shape: f32[2,1,128], index: 19, kind: input, shape index: {}]
  %s20 = inlined_call_operand.vmem [shape: bf16[2,128,256], index: 20, kind: input, shape index: {}]
  %s21 = inlined_call_operand.vmem [shape: bf16[2,128,256], index: 21, kind: input, shape index: {}]
  %s22 = inlined_call_operand.vmem [shape: bf16[2,256,128], index: 22, kind: input, shape index: {}]
  %s23 = inlined_call_operand.hbm [shape: f32[32,128], index: 23, kind: output, shape index: {}]
  %s24 = sld [smem:[#allocation0]]
  $region137: #{qwen3_forward.1} parent=0
    _
  %s26 = ssub.s32 1, %s24
  %s27 = scalar_select 0, %s26, %s24
  $region1: #{qwen3_forward.1} parent=0
    #allocation3 [shape = 'u8[512]{0}', space=smem, size = 0x200, scoped, tag = 'input window, operand 0, single buffered']
    #allocation4 [shape = 's32[2]{0}', space=sflag, size = 0x8, scoped, tag = 'scoped memory for qwen3_forward.1']
    #allocation5 [shape = 's32[2]{0}', space=sflag, size = 0x8, scoped, tag = 'scoped memory for qwen3_forward.1']
    #allocation6 [shape = 'u8[16384]{0}', space=vmem, size = 0x4000, scoped, tag = 'output window, operand 0']
    %28 = vsyncpa [#allocation5], 0
    %29 = vsyncpa [#allocation4], 0
    %s30 = scalar_lea.sflag [#allocation4], 1
    %31 = vsyncpa %s30, 0
    loop: start=0, step=1, limit=6
    $region2: #{qwen3_forward.1} parent=1 // loop_pre_header
      _
    $region3: #{qwen3_forward.1} parent=1 // loop_header
      %s33 = sphi 0, %s37
      %p34 = scmp.ge.s32.totalorder %s33, 6
      %s40 = sphi 0, %s52
      %s41 = sphi 0, %s48
      %s42 = sphi 0, %s40
      %s43 = sphi 0, %s41
      %s44 = sphi 0, %s42
      %s45 = sphi 0, %s43
      %s53 = sphi 0, %s53
      %s55 = sphi 0, %s53
      %s56 = sphi 0, %s55
      %s70 = sphi 0, %s56
      %s74 = sphi 0, %s74
      %s76 = sphi 0, %s74
      %s77 = sphi 0, %s76
      %s91 = sphi 0, %s77
      %s95 = sphi 0, %s95
      %s97 = sphi 0, %s95
      %s98 = sphi 0, %s97
      %s112 = sphi 0, %s98
      %s116 = sphi 0, %s116
      %s118 = sphi 0, %s116
      %s119 = sphi 0, %s118
      %s133 = sphi 0, %s119
      %s137 = sphi 0, %s137
      %s139 = sphi 0, %s137
      %s140 = sphi 0, %s139
      %s154 = sphi 0, %s140
      %s158 = sphi 0, %s158
      %s160 = sphi 0, %s158
      %s161 = sphi 0, %s160
      %s175 = sphi 0, %s161
      %s179 = sphi 0, %s179
      %s181 = sphi 0, %s179
      %s182 = sphi 0, %s181
      %s196 = sphi 0, %s182
      %s200 = sphi 0, %s200
      %s202 = sphi 0, %s200
      %s203 = sphi 0, %s202
      %s217 = sphi 0, %s203
      %s221 = sphi 0, %s221
      %s223 = sphi 0, %s221
      %s224 = sphi 0, %s223
      %s238 = sphi 0, %s224
      %s242 = sphi 0, %s242
      %s244 = sphi 0, %s242
      %s245 = sphi 0, %s244
      %s259 = sphi 0, %s245
      %s263 = sphi 0, %s263
      %s265 = sphi 0, %s263
      %s266 = sphi 0, %s265
      %s280 = sphi 0, %s266
      %s284 = sphi 0, %s284
      %s286 = sphi 0, %s284
      %s287 = sphi 0, %s286
      %s301 = sphi 0, %s287
      %s307 = sphi 0, %s309
      %s310 = sphi 0, %s307
      %s311 = sphi 0, %s310
      %s327 = sphi 0, %s311
      %s333 = sphi 0, %s335
      %s336 = sphi 0, %s333
      %s337 = sphi 0, %s336
      %s353 = sphi 0, %s337
      %s359 = sphi 0, %s361
      %s362 = sphi 0, %s359
      %s363 = sphi 0, %s362
      %s379 = sphi 0, %s363
      %s385 = sphi 0, %s387
      %s388 = sphi 0, %s385
      %s389 = sphi 0, %s388
      %s405 = sphi 0, %s389
      %s411 = sphi 0, %s413
      %s414 = sphi 0, %s411
      %s415 = sphi 0, %s414
      %s431 = sphi 0, %s415
      %s437 = sphi 0, %s439
      %s440 = sphi 0, %s437
      %s441 = sphi 0, %s440
      %s457 = sphi 0, %s441
      %s463 = sphi 0, %s465
      %s466 = sphi 0, %s463
      %s467 = sphi 0, %s466
      %s483 = sphi 0, %s467
      %s489 = sphi 0, %s491
      %s492 = sphi 0, %s489
      %s493 = sphi 0, %s492
      %s509 = sphi 0, %s493
      %s515 = sphi 0, %s517
      %s518 = sphi 0, %s515
      %s519 = sphi 0, %s518
      %s535 = sphi 0, %s519
      %s541 = sphi 0, %s543
      %s544 = sphi 0, %s541
      %s545 = sphi 0, %s544
      %s561 = sphi 0, %s545
      %s567 = sphi 0, %s569
      %s570 = sphi 0, %s567
      %s571 = sphi 0, %s570
      %s587 = sphi 0, %s571
      %s593 = sphi 0, %s595
      %s596 = sphi 0, %s593
      %s597 = sphi 0, %s596
      %s613 = sphi 0, %s597
    $region4: #{qwen3_forward.1} parent=1 // loop_header_branch
      %36 = sbr.rel (%p34) target = $region8
    $region5: #{qwen3_forward.1} parent=1 // loop_body
      %s38 = ssub.s32 %s33, 1
      %s39 = ssub.s32 %s33, 2
      %s46 = sadd.s32 1, %s41
      %p47 = scmp.ge.s32.totalorder %s46, 2
      %s48 = scalar_select %p47, 0, %s46
      %s49 = sadd.s32 1, %s40
      %s50 = scalar_select %p47, %s49, %s40
      %p51 = scmp.ge.s32.totalorder %s50, 2
      %s52 = scalar_select %p51, 0, %s50
      %s54 = sadd.s32 %s53, 1
      %p57 = scmp.eq.s32.totalorder %s33, 3
      %p58 = scmp.ne.s32.totalorder %s53, %s55
      %p59 = scmp.eq.s32.totalorder %s33, 0
      %p60 = por %p58, %p59
      %p61 = scmp.ne.s32.totalorder %s53, %s55
      %p62 = scmp.eq.s32.totalorder %s38, 3
      %p63 = por %p61, %p62
      %p64 = scmp.ne.s32.totalorder %s55, %s56
      %p65 = scmp.eq.s32.totalorder %s38, 0
      %p66 = por %p64, %p65
      %p67 = scmp.ne.s32.totalorder %s55, %s56
      %p68 = scmp.eq.s32.totalorder %s39, 3
      %p69 = por %p67, %p68
      %p71 = scmp.ne.s32.totalorder %s56, %s70
      %p72 = scmp.eq.s32.totalorder %s39, 0
      %p73 = por %p71, %p72
      %s75 = sadd.s32 %s74, 1
      %p78 = scmp.eq.s32.totalorder %s33, 3
      %p79 = scmp.ne.s32.totalorder %s74, %s76
      %p80 = scmp.eq.s32.totalorder %s33, 0
      %p81 = por %p79, %p80
      %p82 = scmp.ne.s32.totalorder %s74, %s76
      %p83 = scmp.eq.s32.totalorder %s38, 3
      %p84 = por %p82, %p83
      %p85 = scmp.ne.s32.totalorder %s76, %s77
      %p86 = scmp.eq.s32.totalorder %s38, 0
      %p87 = por %p85, %p86
      %p88 = scmp.ne.s32.totalorder %s76, %s77
      %p89 = scmp.eq.s32.totalorder %s39, 3
      %p90 = por %p88, %p89
      %p92 = scmp.ne.s32.totalorder %s77, %s91
      %p93 = scmp.eq.s32.totalorder %s39, 0
      %p94 = por %p92, %p93
      %s96 = sadd.s32 %s95, 1
      %p99 = scmp.eq.s32.totalorder %s33, 3
      %p100 = scmp.ne.s32.totalorder %s95, %s97
      %p101 = scmp.eq.s32.totalorder %s33, 0
      %p102 = por %p100, %p101
      %p103 = scmp.ne.s32.totalorder %s95, %s97
      %p104 = scmp.eq.s32.totalorder %s38, 3
      %p105 = por %p103, %p104
      %p106 = scmp.ne.s32.totalorder %s97, %s98
      %p107 = scmp.eq.s32.totalorder %s38, 0
      %p108 = por %p106, %p107
      %p109 = scmp.ne.s32.totalorder %s97, %s98
      %p110 = scmp.eq.s32.totalorder %s39, 3
      %p111 = por %p109, %p110
      %p113 = scmp.ne.s32.totalorder %s98, %s112
      %p114 = scmp.eq.s32.totalorder %s39, 0
      %p115 = por %p113, %p114
      %s117 = sadd.s32 %s116, 1
      %p120 = scmp.eq.s32.totalorder %s33, 3
      %p121 = scmp.ne.s32.totalorder %s116, %s118
      %p122 = scmp.eq.s32.totalorder %s33, 0
      %p123 = por %p121, %p122
      %p124 = scmp.ne.s32.totalorder %s116, %s118
      %p125 = scmp.eq.s32.totalorder %s38, 3
      %p126 = por %p124, %p125
      %p127 = scmp.ne.s32.totalorder %s118, %s119
      %p128 = scmp.eq.s32.totalorder %s38, 0
      %p129 = por %p127, %p128
      %p130 = scmp.ne.s32.totalorder %s118, %s119
      %p131 = scmp.eq.s32.totalorder %s39, 3
      %p132 = por %p130, %p131
      %p134 = scmp.ne.s32.totalorder %s119, %s133
      %p135 = scmp.eq.s32.totalorder %s39, 0
      %p136 = por %p134, %p135
      %s138 = sadd.s32 %s137, 1
      %p141 = scmp.eq.s32.totalorder %s33, 3
      %p142 = scmp.ne.s32.totalorder %s137, %s139
      %p143 = scmp.eq.s32.totalorder %s33, 0
      %p144 = por %p142, %p143
      %p145 = scmp.ne.s32.totalorder %s137, %s139
      %p146 = scmp.eq.s32.totalorder %s38, 3
      %p147 = por %p145, %p146
      %p148 = scmp.ne.s32.totalorder %s139, %s140
      %p149 = scmp.eq.s32.totalorder %s38, 0
      %p150 = por %p148, %p149
      %p151 = scmp.ne.s32.totalorder %s139, %s140
      %p152 = scmp.eq.s32.totalorder %s39, 3
      %p153 = por %p151, %p152
      %p155 = scmp.ne.s32.totalorder %s140, %s154
      %p156 = scmp.eq.s32.totalorder %s39, 0
      %p157 = por %p155, %p156
      %s159 = sadd.s32 %s158, 1
      %p162 = scmp.eq.s32.totalorder %s33, 3
      %p163 = scmp.ne.s32.totalorder %s158, %s160
      %p164 = scmp.eq.s32.totalorder %s33, 0
      %p165 = por %p163, %p164
      %p166 = scmp.ne.s32.totalorder %s158, %s160
      %p167 = scmp.eq.s32.totalorder %s38, 3
      %p168 = por %p166, %p167
      %p169 = scmp.ne.s32.totalorder %s160, %s161
      %p170 = scmp.eq.s32.totalorder %s38, 0
      %p171 = por %p169, %p170
      %p172 = scmp.ne.s32.totalorder %s160, %s161
      %p173 = scmp.eq.s32.totalorder %s39, 3
      %p174 = por %p172, %p173
      %p176 = scmp.ne.s32.totalorder %s161, %s175
      %p177 = scmp.eq.s32.totalorder %s39, 0
      %p178 = por %p176, %p177
      %s180 = sadd.s32 %s179, 1
      %p183 = scmp.eq.s32.totalorder %s33, 3
      %p184 = scmp.ne.s32.totalorder %s179, %s181
      %p185 = scmp.eq.s32.totalorder %s33, 0
      %p186 = por %p184, %p185
      %p187 = scmp.ne.s32.totalorder %s179, %s181
      %p188 = scmp.eq.s32.totalorder %s38, 3
      %p189 = por %p187, %p188
      %p190 = scmp.ne.s32.totalorder %s181, %s182
      %p191 = scmp.eq.s32.totalorder %s38, 0
      %p192 = por %p190, %p191
      %p193 = scmp.ne.s32.totalorder %s181, %s182
      %p194 = scmp.eq.s32.totalorder %s39, 3
      %p195 = por %p193, %p194
      %p197 = scmp.ne.s32.totalorder %s182, %s196
      %p198 = scmp.eq.s32.totalorder %s39, 0
      %p199 = por %p197, %p198
      %s201 = sadd.s32 %s200, 1
      %p204 = scmp.eq.s32.totalorder %s33, 3
      %p205 = scmp.ne.s32.totalorder %s200, %s202
      %p206 = scmp.eq.s32.totalorder %s33, 0
      %p207 = por %p205, %p206
      %p208 = scmp.ne.s32.totalorder %s200, %s202
      %p209 = scmp.eq.s32.totalorder %s38, 3
      %p210 = por %p208, %p209
      %p211 = scmp.ne.s32.totalorder %s202, %s203
      %p212 = scmp.eq.s32.totalorder %s38, 0
      %p213 = por %p211, %p212
      %p214 = scmp.ne.s32.totalorder %s202, %s203
      %p215 = scmp.eq.s32.totalorder %s39, 3
      %p216 = por %p214, %p215
      %p218 = scmp.ne.s32.totalorder %s203, %s217
      %p219 = scmp.eq.s32.totalorder %s39, 0
      %p220 = por %p218, %p219
      %s222 = sadd.s32 %s221, 1
      %p225 = scmp.eq.s32.totalorder %s33, 3
      %p226 = scmp.ne.s32.totalorder %s221, %s223
      %p227 = scmp.eq.s32.totalorder %s33, 0
      %p228 = por %p226, %p227
      %p229 = scmp.ne.s32.totalorder %s221, %s223
      %p230 = scmp.eq.s32.totalorder %s38, 3
      %p231 = por %p229, %p230
      %p232 = scmp.ne.s32.totalorder %s223, %s224
      %p233 = scmp.eq.s32.totalorder %s38, 0
      %p234 = por %p232, %p233
      %p235 = scmp.ne.s32.totalorder %s223, %s224
      %p236 = scmp.eq.s32.totalorder %s39, 3
      %p237 = por %p235, %p236
      %p239 = scmp.ne.s32.totalorder %s224, %s238
      %p240 = scmp.eq.s32.totalorder %s39, 0
      %p241 = por %p239, %p240
      %s243 = sadd.s32 %s242, 1
      %p246 = scmp.eq.s32.totalorder %s33, 3
      %p247 = scmp.ne.s32.totalorder %s242, %s244
      %p248 = scmp.eq.s32.totalorder %s33, 0
      %p249 = por %p247, %p248
      %p250 = scmp.ne.s32.totalorder %s242, %s244
      %p251 = scmp.eq.s32.totalorder %s38, 3
      %p252 = por %p250, %p251
      %p253 = scmp.ne.s32.totalorder %s244, %s245
      %p254 = scmp.eq.s32.totalorder %s38, 0
      %p255 = por %p253, %p254
      %p256 = scmp.ne.s32.totalorder %s244, %s245
      %p257 = scmp.eq.s32.totalorder %s39, 3
      %p258 = por %p256, %p257
      %p260 = scmp.ne.s32.totalorder %s245, %s259
      %p261 = scmp.eq.s32.totalorder %s39, 0
      %p262 = por %p260, %p261
      %s264 = sadd.s32 %s263, 1
      %p267 = scmp.eq.s32.totalorder %s33, 3
      %p268 = scmp.ne.s32.totalorder %s263, %s265
      %p269 = scmp.eq.s32.totalorder %s33, 0
      %p270 = por %p268, %p269
      %p271 = scmp.ne.s32.totalorder %s263, %s265
      %p272 = scmp.eq.s32.totalorder %s38, 3
      %p273 = por %p271, %p272
      %p274 = scmp.ne.s32.totalorder %s265, %s266
      %p275 = scmp.eq.s32.totalorder %s38, 0
      %p276 = por %p274, %p275
      %p277 = scmp.ne.s32.totalorder %s265, %s266
      %p278 = scmp.eq.s32.totalorder %s39, 3
      %p279 = por %p277, %p278
      %p281 = scmp.ne.s32.totalorder %s266, %s280
      %p282 = scmp.eq.s32.totalorder %s39, 0
      %p283 = por %p281, %p282
      %s285 = sadd.s32 %s284, 1
      %p288 = scmp.eq.s32.totalorder %s33, 3
      %p289 = scmp.ne.s32.totalorder %s284, %s286
      %p290 = scmp.eq.s32.totalorder %s33, 0
      %p291 = por %p289, %p290
      %p292 = scmp.ne.s32.totalorder %s284, %s286
      %p293 = scmp.eq.s32.totalorder %s38, 3
      %p294 = por %p292, %p293
      %p295 = scmp.ne.s32.totalorder %s286, %s287
      %p296 = scmp.eq.s32.totalorder %s38, 0
      %p297 = por %p295, %p296
      %p298 = scmp.ne.s32.totalorder %s286, %s287
      %p299 = scmp.eq.s32.totalorder %s39, 3
      %p300 = por %p298, %p299
      %p302 = scmp.ne.s32.totalorder %s287, %s301
      %p303 = scmp.eq.s32.totalorder %s39, 0
      %p304 = por %p302, %p303
      %s305 = ssub.s32 %s41, %s48
      %p306 = scmp.eq.s32.totalorder %s305, 0
      %s308 = sadd.s32 %s307, 1
      %s309 = scalar_select %p306, %s307, %s308
      %p312 = pneg %p306
      %p313 = scmp.eq.s32.totalorder %s33, 3
      %p314 = por %p312, %p313
      %p315 = scmp.ne.s32.totalorder %s307, %s310
      %p316 = scmp.eq.s32.totalorder %s33, 0
      %p317 = por %p315, %p316
      %p318 = scmp.ne.s32.totalorder %s307, %s310
      %p319 = scmp.eq.s32.totalorder %s38, 3
      %p320 = por %p318, %p319
      %p321 = scmp.ne.s32.totalorder %s310, %s311
      %p322 = scmp.eq.s32.totalorder %s38, 0
      %p323 = por %p321, %p322
      %p324 = scmp.ne.s32.totalorder %s310, %s311
      %p325 = scmp.eq.s32.totalorder %s39, 3
      %p326 = por %p324, %p325
      %p328 = scmp.ne.s32.totalorder %s311, %s327
      %p329 = scmp.eq.s32.totalorder %s39, 0
      %p330 = por %p328, %p329
      %s331 = ssub.s32 %s41, %s48
      %p332 = scmp.eq.s32.totalorder %s331, 0
      %s334 = sadd.s32 %s333, 1
      %s335 = scalar_select %p332, %s333, %s334
      %p338 = pneg %p332
      %p339 = scmp.eq.s32.totalorder %s33, 3
      %p340 = por %p338, %p339
      %p341 = scmp.ne.s32.totalorder %s333, %s336
      %p342 = scmp.eq.s32.totalorder %s33, 0
      %p343 = por %p341, %p342
      %p344 = scmp.ne.s32.totalorder %s333, %s336
      %p345 = scmp.eq.s32.totalorder %s38, 3
      %p346 = por %p344, %p345
      %p347 = scmp.ne.s32.totalorder %s336, %s337
      %p348 = scmp.eq.s32.totalorder %s38, 0
      %p349 = por %p347, %p348
      %p350 = scmp.ne.s32.totalorder %s336, %s337
      %p351 = scmp.eq.s32.totalorder %s39, 3
      %p352 = por %p350, %p351
      %p354 = scmp.ne.s32.totalorder %s337, %s353
      %p355 = scmp.eq.s32.totalorder %s39, 0
      %p356 = por %p354, %p355
      %s357 = ssub.s32 %s41, %s48
      %p358 = scmp.eq.s32.totalorder %s357, 0
      %s360 = sadd.s32 %s359, 1
      %s361 = scalar_select %p358, %s359, %s360
      %p364 = pneg %p358
      %p365 = scmp.eq.s32.totalorder %s33, 3
      %p366 = por %p364, %p365
      %p367 = scmp.ne.s32.totalorder %s359, %s362
      %p368 = scmp.eq.s32.totalorder %s33, 0
      %p369 = por %p367, %p368
      %p370 = scmp.ne.s32.totalorder %s359, %s362
      %p371 = scmp.eq.s32.totalorder %s38, 3
      %p372 = por %p370, %p371
      %p373 = scmp.ne.s32.totalorder %s362, %s363
      %p374 = scmp.eq.s32.totalorder %s38, 0
      %p375 = por %p373, %p374
      %p376 = scmp.ne.s32.totalorder %s362, %s363
      %p377 = scmp.eq.s32.totalorder %s39, 3
      %p378 = por %p376, %p377
      %p380 = scmp.ne.s32.totalorder %s363, %s379
      %p381 = scmp.eq.s32.totalorder %s39, 0
      %p382 = por %p380, %p381
      %s383 = ssub.s32 %s41, %s48
      %p384 = scmp.eq.s32.totalorder %s383, 0
      %s386 = sadd.s32 %s385, 1
      %s387 = scalar_select %p384, %s385, %s386
      %p390 = pneg %p384
      %p391 = scmp.eq.s32.totalorder %s33, 3
      %p392 = por %p390, %p391
      %p393 = scmp.ne.s32.totalorder %s385, %s388
      %p394 = scmp.eq.s32.totalorder %s33, 0
      %p395 = por %p393, %p394
      %p396 = scmp.ne.s32.totalorder %s385, %s388
      %p397 = scmp.eq.s32.totalorder %s38, 3
      %p398 = por %p396, %p397
      %p399 = scmp.ne.s32.totalorder %s388, %s389
      %p400 = scmp.eq.s32.totalorder %s38, 0
      %p401 = por %p399, %p400
      %p402 = scmp.ne.s32.totalorder %s388, %s389
      %p403 = scmp.eq.s32.totalorder %s39, 3
      %p404 = por %p402, %p403
      %p406 = scmp.ne.s32.totalorder %s389, %s405
      %p407 = scmp.eq.s32.totalorder %s39, 0
      %p408 = por %p406, %p407
      %s409 = ssub.s32 %s41, %s48
      %p410 = scmp.eq.s32.totalorder %s409, 0
      %s412 = sadd.s32 %s411, 1
      %s413 = scalar_select %p410, %s411, %s412
      %p416 = pneg %p410
      %p417 = scmp.eq.s32.totalorder %s33, 3
      %p418 = por %p416, %p417
      %p419 = scmp.ne.s32.totalorder %s411, %s414
      %p420 = scmp.eq.s32.totalorder %s33, 0
      %p421 = por %p419, %p420
      %p422 = scmp.ne.s32.totalorder %s411, %s414
      %p423 = scmp.eq.s32.totalorder %s38, 3
      %p424 = por %p422, %p423
      %p425 = scmp.ne.s32.totalorder %s414, %s415
      %p426 = scmp.eq.s32.totalorder %s38, 0
      %p427 = por %p425, %p426
      %p428 = scmp.ne.s32.totalorder %s414, %s415
      %p429 = scmp.eq.s32.totalorder %s39, 3
      %p430 = por %p428, %p429
      %p432 = scmp.ne.s32.totalorder %s415, %s431
      %p433 = scmp.eq.s32.totalorder %s39, 0
      %p434 = por %p432, %p433
      %s435 = ssub.s32 %s41, %s48
      %p436 = scmp.eq.s32.totalorder %s435, 0
      %s438 = sadd.s32 %s437, 1
      %s439 = scalar_select %p436, %s437, %s438
      %p442 = pneg %p436
      %p443 = scmp.eq.s32.totalorder %s33, 3
      %p444 = por %p442, %p443
      %p445 = scmp.ne.s32.totalorder %s437, %s440
      %p446 = scmp.eq.s32.totalorder %s33, 0
      %p447 = por %p445, %p446
      %p448 = scmp.ne.s32.totalorder %s437, %s440
      %p449 = scmp.eq.s32.totalorder %s38, 3
      %p450 = por %p448, %p449
      %p451 = scmp.ne.s32.totalorder %s440, %s441
      %p452 = scmp.eq.s32.totalorder %s38, 0
      %p453 = por %p451, %p452
      %p454 = scmp.ne.s32.totalorder %s440, %s441
      %p455 = scmp.eq.s32.totalorder %s39, 3
      %p456 = por %p454, %p455
      %p458 = scmp.ne.s32.totalorder %s441, %s457
      %p459 = scmp.eq.s32.totalorder %s39, 0
      %p460 = por %p458, %p459
      %s461 = ssub.s32 %s41, %s48
      %p462 = scmp.eq.s32.totalorder %s461, 0
      %s464 = sadd.s32 %s463, 1
      %s465 = scalar_select %p462, %s463, %s464
      %p468 = pneg %p462
      %p469 = scmp.eq.s32.totalorder %s33, 3
      %p470 = por %p468, %p469
      %p471 = scmp.ne.s32.totalorder %s463, %s466
      %p472 = scmp.eq.s32.totalorder %s33, 0
      %p473 = por %p471, %p472
      %p474 = scmp.ne.s32.totalorder %s463, %s466
      %p475 = scmp.eq.s32.totalorder %s38, 3
      %p476 = por %p474, %p475
      %p477 = scmp.ne.s32.totalorder %s466, %s467
      %p478 = scmp.eq.s32.totalorder %s38, 0
      %p479 = por %p477, %p478
      %p480 = scmp.ne.s32.totalorder %s466, %s467
      %p481 = scmp.eq.s32.totalorder %s39, 3
      %p482 = por %p480, %p481
      %p484 = scmp.ne.s32.totalorder %s467, %s483
      %p485 = scmp.eq.s32.totalorder %s39, 0
      %p486 = por %p484, %p485
      %s487 = ssub.s32 %s41, %s48
      %p488 = scmp.eq.s32.totalorder %s487, 0
      %s490 = sadd.s32 %s489, 1
      %s491 = scalar_select %p488, %s489, %s490
      %p494 = pneg %p488
      %p495 = scmp.eq.s32.totalorder %s33, 3
      %p496 = por %p494, %p495
      %p497 = scmp.ne.s32.totalorder %s489, %s492
      %p498 = scmp.eq.s32.totalorder %s33, 0
      %p499 = por %p497, %p498
      %p500 = scmp.ne.s32.totalorder %s489, %s492
      %p501 = scmp.eq.s32.totalorder %s38, 3
      %p502 = por %p500, %p501
      %p503 = scmp.ne.s32.totalorder %s492, %s493
      %p504 = scmp.eq.s32.totalorder %s38, 0
      %p505 = por %p503, %p504
      %p506 = scmp.ne.s32.totalorder %s492, %s493
      %p507 = scmp.eq.s32.totalorder %s39, 3
      %p508 = por %p506, %p507
      %p510 = scmp.ne.s32.totalorder %s493, %s509
      %p511 = scmp.eq.s32.totalorder %s39, 0
      %p512 = por %p510, %p511
      %s513 = ssub.s32 %s41, %s48
      %p514 = scmp.eq.s32.totalorder %s513, 0
      %s516 = sadd.s32 %s515, 1
      %s517 = scalar_select %p514, %s515, %s516
      %p520 = pneg %p514
      %p521 = scmp.eq.s32.totalorder %s33, 3
      %p522 = por %p520, %p521
      %p523 = scmp.ne.s32.totalorder %s515, %s518
      %p524 = scmp.eq.s32.totalorder %s33, 0
      %p525 = por %p523, %p524
      %p526 = scmp.ne.s32.totalorder %s515, %s518
      %p527 = scmp.eq.s32.totalorder %s38, 3
      %p528 = por %p526, %p527
      %p529 = scmp.ne.s32.totalorder %s518, %s519
      %p530 = scmp.eq.s32.totalorder %s38, 0
      %p531 = por %p529, %p530
      %p532 = scmp.ne.s32.totalorder %s518, %s519
      %p533 = scmp.eq.s32.totalorder %s39, 3
      %p534 = por %p532, %p533
      %p536 = scmp.ne.s32.totalorder %s519, %s535
      %p537 = scmp.eq.s32.totalorder %s39, 0
      %p538 = por %p536, %p537
      %s539 = ssub.s32 %s41, %s48
      %p540 = scmp.eq.s32.totalorder %s539, 0
      %s542 = sadd.s32 %s541, 1
      %s543 = scalar_select %p540, %s541, %s542
      %p546 = pneg %p540
      %p547 = scmp.eq.s32.totalorder %s33, 3
      %p548 = por %p546, %p547
      %p549 = scmp.ne.s32.totalorder %s541, %s544
      %p550 = scmp.eq.s32.totalorder %s33, 0
      %p551 = por %p549, %p550
      %p552 = scmp.ne.s32.totalorder %s541, %s544
      %p553 = scmp.eq.s32.totalorder %s38, 3
      %p554 = por %p552, %p553
      %p555 = scmp.ne.s32.totalorder %s544, %s545
      %p556 = scmp.eq.s32.totalorder %s38, 0
      %p557 = por %p555, %p556
      %p558 = scmp.ne.s32.totalorder %s544, %s545
      %p559 = scmp.eq.s32.totalorder %s39, 3
      %p560 = por %p558, %p559
      %p562 = scmp.ne.s32.totalorder %s545, %s561
      %p563 = scmp.eq.s32.totalorder %s39, 0
      %p564 = por %p562, %p563
      %s565 = ssub.s32 %s41, %s48
      %p566 = scmp.eq.s32.totalorder %s565, 0
      %s568 = sadd.s32 %s567, 1
      %s569 = scalar_select %p566, %s567, %s568
      %p572 = pneg %p566
      %p573 = scmp.eq.s32.totalorder %s33, 3
      %p574 = por %p572, %p573
      %p575 = scmp.ne.s32.totalorder %s567, %s570
      %p576 = scmp.eq.s32.totalorder %s33, 0
      %p577 = por %p575, %p576
      %p578 = scmp.ne.s32.totalorder %s567, %s570
      %p579 = scmp.eq.s32.totalorder %s38, 3
      %p580 = por %p578, %p579
      %p581 = scmp.ne.s32.totalorder %s570, %s571
      %p582 = scmp.eq.s32.totalorder %s38, 0
      %p583 = por %p581, %p582
      %p584 = scmp.ne.s32.totalorder %s570, %s571
      %p585 = scmp.eq.s32.totalorder %s39, 3
      %p586 = por %p584, %p585
      %p588 = scmp.ne.s32.totalorder %s571, %s587
      %p589 = scmp.eq.s32.totalorder %s39, 0
      %p590 = por %p588, %p589
      %s591 = ssub.s32 %s40, %s52
      %p592 = scmp.eq.s32.totalorder %s591, 0
      %s594 = sadd.s32 %s593, 1
      %s595 = scalar_select %p592, %s593, %s594
      %p598 = pneg %p592
      %p599 = scmp.eq.s32.totalorder %s33, 3
      %p600 = por %p598, %p599
      %p601 = scmp.ne.s32.totalorder %s593, %s596
      %p602 = scmp.eq.s32.totalorder %s33, 0
      %p603 = por %p601, %p602
      %p604 = scmp.ne.s32.totalorder %s593, %s596
      %p605 = scmp.eq.s32.totalorder %s38, 3
      %p606 = por %p604, %p605
      %p607 = scmp.ne.s32.totalorder %s596, %s597
      %p608 = scmp.eq.s32.totalorder %s38, 0
      %p609 = por %p607, %p608
      %p610 = scmp.ne.s32.totalorder %s596, %s597
      %p611 = scmp.eq.s32.totalorder %s39, 3
      %p612 = por %p610, %p611
      %p614 = scmp.ne.s32.totalorder %s597, %s613
      %p615 = scmp.eq.s32.totalorder %s39, 0
      %p616 = por %p614, %p615
      %p617 = scmp.le.s32.totalorder 1, %s33
      %p618 = scmp.lt.s32.totalorder %s33, 5
      %p619 = pnand %p617, %p618
      %p620 = pneg %p619
      // Predicated region
      $region9: #{qwen3_forward.1} parent=5 // pred_check
        _
      $region10: #{qwen3_forward.1} parent=5 // pred_check_branch
        %622 = sbr.rel (%p619) target = $region12
      $region11: #{qwen3_forward.1} parent=5 // pred_region
        %s623 = ssub.s32 %s33, 1
        // Predicated region
        $region13: #{qwen3_forward.1} parent=11 // pred_check
          %p624 = pneg %p66
        $region14: #{qwen3_forward.1} parent=11 // pred_check_branch
          %626 = sbr.rel (%p624) target = $region16
        $region15: #{qwen3_forward.1} parent=11 // pred_region
          %628 = vsyncadd [#allocation5], 0
          %s630 = sshll.u32 %s0, 4
          %s631 = int_to_ptr.vmem [resolvable:$true] %s630
          %633 = dma.vmem_to_smem %s631, 16, [#allocation3], [#allocation5]
        $region16: #{qwen3_forward.1} parent=11 // pred_fallthru
          _
        // Predicated region
        $region17: #{qwen3_forward.1} parent=11 // pred_check
          %p634 = pneg %p87
        $region18: #{qwen3_forward.1} parent=11 // pred_check_branch
          %636 = sbr.rel (%p634) target = $region20
        $region19: #{qwen3_forward.1} parent=11 // pred_region
          _
        $region20: #{qwen3_forward.1} parent=11 // pred_fallthru
          _
        // Predicated region
        $region21: #{qwen3_forward.1} parent=11 // pred_check
          %p637 = pneg %p108
        $region22: #{qwen3_forward.1} parent=11 // pred_check_branch
          %639 = sbr.rel (%p637) target = $region24
        $region23: #{qwen3_forward.1} parent=11 // pred_region
          _
        $region24: #{qwen3_forward.1} parent=11 // pred_fallthru
          _
        // Predicated region
        $region25: #{qwen3_forward.1} parent=11 // pred_check
          %p640 = pneg %p129
        $region26: #{qwen3_forward.1} parent=11 // pred_check_branch
          %642 = sbr.rel (%p640) target = $region28
        $region27: #{qwen3_forward.1} parent=11 // pred_region
          _
        $region28: #{qwen3_forward.1} parent=11 // pred_fallthru
          _
        // Predicated region
        $region29: #{qwen3_forward.1} parent=11 // pred_check
          %p643 = pneg %p150
        $region30: #{qwen3_forward.1} parent=11 // pred_check_branch
          %645 = sbr.rel (%p643) target = $region32
        $region31: #{qwen3_forward.1} parent=11 // pred_region
          _
        $region32: #{qwen3_forward.1} parent=11 // pred_fallthru
          _
        // Predicated region
        $region33: #{qwen3_forward.1} parent=11 // pred_check
          %p646 = pneg %p171
        $region34: #{qwen3_forward.1} parent=11 // pred_check_branch
          %648 = sbr.rel (%p646) target = $region36
        $region35: #{qwen3_forward.1} parent=11 // pred_region
          _
        $region36: #{qwen3_forward.1} parent=11 // pred_fallthru
          _
        // Predicated region
        $region37: #{qwen3_forward.1} parent=11 // pred_check
          %p649 = pneg %p192
        $region38: #{qwen3_forward.1} parent=11 // pred_check_branch
          %651 = sbr.rel (%p649) target = $region40
        $region39: #{qwen3_forward.1} parent=11 // pred_region
          _
        $region40: #{qwen3_forward.1} parent=11 // pred_fallthru
          _
        // Predicated region
        $region41: #{qwen3_forward.1} parent=11 // pred_check
          %p652 = pneg %p213
        $region42: #{qwen3_forward.1} parent=11 // pred_check_branch
          %654 = sbr.rel (%p652) target = $region44
        $region43: #{qwen3_forward.1} parent=11 // pred_region
          _
        $region44: #{qwen3_forward.1} parent=11 // pred_fallthru
          _
        // Predicated region
        $region45: #{qwen3_forward.1} parent=11 // pred_check
          %p655 = pneg %p234
        $region46: #{qwen3_forward.1} parent=11 // pred_check_branch
          %657 = sbr.rel (%p655) target = $region48
        $region47: #{qwen3_forward.1} parent=11 // pred_region
          _
        $region48: #{qwen3_forward.1} parent=11 // pred_fallthru
          _
        // Predicated region
        $region49: #{qwen3_forward.1} parent=11 // pred_check
          %p658 = pneg %p255
        $region50: #{qwen3_forward.1} parent=11 // pred_check_branch
          %660 = sbr.rel (%p658) target = $region52
        $region51: #{qwen3_forward.1} parent=11 // pred_region
          _
        $region52: #{qwen3_forward.1} parent=11 // pred_fallthru
          _
        // Predicated region
        $region53: #{qwen3_forward.1} parent=11 // pred_check
          %p661 = pneg %p276
        $region54: #{qwen3_forward.1} parent=11 // pred_check_branch
          %663 = sbr.rel (%p661) target = $region56
        $region55: #{qwen3_forward.1} parent=11 // pred_region
          _
        $region56: #{qwen3_forward.1} parent=11 // pred_fallthru
          _
        // Predicated region
        $region57: #{qwen3_forward.1} parent=11 // pred_check
          %p664 = pneg %p297
        $region58: #{qwen3_forward.1} parent=11 // pred_check_branch
          %666 = sbr.rel (%p664) target = $region60
        $region59: #{qwen3_forward.1} parent=11 // pred_region
          _
        $region60: #{qwen3_forward.1} parent=11 // pred_fallthru
          _
      $region12: #{qwen3_forward.1} parent=5 // pred_fallthru
        _
      %p667 = scmp.lt.s32.totalorder %s33, 4
      // Predicated region
      $region61: #{qwen3_forward.1} parent=5 // pred_check
        %p668 = pneg %p667
      $region62: #{qwen3_forward.1} parent=5 // pred_check_branch
        %670 = sbr.rel (%p668) target = $region64
      $region63: #{qwen3_forward.1} parent=5 // pred_region
        // Predicated region
        $region65: #{qwen3_forward.1} parent=63 // pred_check
          %p671 = pneg %p317
        $region66: #{qwen3_forward.1} parent=63 // pred_check_branch
          %673 = sbr.rel (%p671) target = $region68
        $region67: #{qwen3_forward.1} parent=63 // pred_region
          %p674 = scmp.lt.s32.totalorder %s41, 1
          %s675 = scalar_select %p674, %s41, 1
          %s676 = scalar_lea.vmem %s12, %s675
        $region68: #{qwen3_forward.1} parent=63 // pred_fallthru
          _
        // Predicated region
        $region69: #{qwen3_forward.1} parent=63 // pred_check
          %p677 = pneg %p343
        $region70: #{qwen3_forward.1} parent=63 // pred_check_branch
          %679 = sbr.rel (%p677) target = $region72
        $region71: #{qwen3_forward.1} parent=63 // pred_region
          %p680 = scmp.lt.s32.totalorder %s41, 1
          %s681 = scalar_select %p680, %s41, 1
          %s682 = smul.addr %s681, 16
          %s683 = smul.addr %s682, 4
          %s684 = scalar_lea.vmem %s13, %s683
        $region72: #{qwen3_forward.1} parent=63 // pred_fallthru
          _
        // Predicated region
        $region73: #{qwen3_forward.1} parent=63 // pred_check
          %p685 = pneg %p369
        $region74: #{qwen3_forward.1} parent=63 // pred_check_branch
          %687 = sbr.rel (%p685) target = $region76
        $region75: #{qwen3_forward.1} parent=63 // pred_region
          %p688 = scmp.lt.s32.totalorder %s41, 1
          %s689 = scalar_select %p688, %s41, 1
          %s690 = smul.addr %s689, 16
          %s691 = smul.addr %s690, 4
          %s692 = scalar_lea.vmem %s14, %s691
        $region76: #{qwen3_forward.1} parent=63 // pred_fallthru
          _
        // Predicated region
        $region77: #{qwen3_forward.1} parent=63 // pred_check
          %p693 = pneg %p395
        $region78: #{qwen3_forward.1} parent=63 // pred_check_branch
          %695 = sbr.rel (%p693) target = $region80
        $region79: #{qwen3_forward.1} parent=63 // pred_region
          %p696 = scmp.lt.s32.totalorder %s41, 1
          %s697 = scalar_select %p696, %s41, 1
          %s698 = smul.addr %s697, 16
          %s699 = smul.addr %s698, 4
          %s700 = scalar_lea.vmem %s15, %s699
        $region80: #{qwen3_forward.1} parent=63 // pred_fallthru
          _
        // Predicated region
        $region81: #{qwen3_forward.1} parent=63 // pred_check
          %p701 = pneg %p421
        $region82: #{qwen3_forward.1} parent=63 // pred_check_branch
          %703 = sbr.rel (%p701) target = $region84
        $region83: #{qwen3_forward.1} parent=63 // pred_region
          %p704 = scmp.lt.s32.totalorder %s41, 1
          %s705 = scalar_select %p704, %s41, 1
          %s706 = smul.addr %s705, 16
          %s707 = smul.addr %s706, 4
          %s708 = scalar_lea.vmem %s16, %s707
        $region84: #{qwen3_forward.1} parent=63 // pred_fallthru
          _
        // Predicated region
        $region85: #{qwen3_forward.1} parent=63 // pred_check
          %p709 = pneg %p447
        $region86: #{qwen3_forward.1} parent=63 // pred_check_branch
          %711 = sbr.rel (%p709) target = $region88
        $region87: #{qwen3_forward.1} parent=63 // pred_region
          %p712 = scmp.lt.s32.totalorder %s41, 1
          %s713 = scalar_select %p712, %s41, 1
          %s714 = scalar_lea.vmem %s17, %s713
        $region88: #{qwen3_forward.1} parent=63 // pred_fallthru
          _
        // Predicated region
        $region89: #{qwen3_forward.1} parent=63 // pred_check
          %p715 = pneg %p473
        $region90: #{qwen3_forward.1} parent=63 // pred_check_branch
          %717 = sbr.rel (%p715) target = $region92
        $region91: #{qwen3_forward.1} parent=63 // pred_region
          %p718 = scmp.lt.s32.totalorder %s41, 1
          %s719 = scalar_select %p718, %s41, 1
          %s720 = scalar_lea.vmem %s18, %s719
        $region92: #{qwen3_forward.1} parent=63 // pred_fallthru
          _
        // Predicated region
        $region93: #{qwen3_forward.1} parent=63 // pred_check
          %p721 = pneg %p499
        $region94: #{qwen3_forward.1} parent=63 // pred_check_branch
          %723 = sbr.rel (%p721) target = $region96
        $region95: #{qwen3_forward.1} parent=63 // pred_region
          %p724 = scmp.lt.s32.totalorder %s41, 1
          %s725 = scalar_select %p724, %s41, 1
          %s726 = scalar_lea.vmem %s19, %s725
        $region96: #{qwen3_forward.1} parent=63 // pred_fallthru
          _
        // Predicated region
        $region97: #{qwen3_forward.1} parent=63 // pred_check
          %p727 = pneg %p525
        $region98: #{qwen3_forward.1} parent=63 // pred_check_branch
          %729 = sbr.rel (%p727) target = $region100
        $region99: #{qwen3_forward.1} parent=63 // pred_region
          %p730 = scmp.lt.s32.totalorder %s41, 1
          %s731 = scalar_select %p730, %s41, 1
          %s732 = smul.addr %s731, 32
          %s733 = smul.addr %s732, 4
          %s734 = scalar_lea.vmem %s20, %s733
        $region100: #{qwen3_forward.1} parent=63 // pred_fallthru
          _
        // Predicated region
        $region101: #{qwen3_forward.1} parent=63 // pred_check
          %p735 = pneg %p551
        $region102: #{qwen3_forward.1} parent=63 // pred_check_branch
          %737 = sbr.rel (%p735) target = $region104
        $region103: #{qwen3_forward.1} parent=63 // pred_region
          %p738 = scmp.lt.s32.totalorder %s41, 1
          %s739 = scalar_select %p738, %s41, 1
          %s740 = smul.addr %s739, 32
          %s741 = smul.addr %s740, 4
          %s742 = scalar_lea.vmem %s21, %s741
        $region104: #{qwen3_forward.1} parent=63 // pred_fallthru
          _
        // Predicated region
        $region105: #{qwen3_forward.1} parent=63 // pred_check
          %p743 = pneg %p577
        $region106: #{qwen3_forward.1} parent=63 // pred_check_branch
          %745 = sbr.rel (%p743) target = $region108
        $region107: #{qwen3_forward.1} parent=63 // pred_region
          %p746 = scmp.lt.s32.totalorder %s41, 1
          %s747 = scalar_select %p746, %s41, 1
          %s748 = smul.addr %s747, 32
          %s749 = smul.addr %s748, 4
          %s750 = scalar_lea.vmem %s22, %s749
        $region108: #{qwen3_forward.1} parent=63 // pred_fallthru
          _
      $region64: #{qwen3_forward.1} parent=5 // pred_fallthru
        _
      %p751 = scmp.le.s32.totalorder 1, %s33
      %p752 = scmp.lt.s32.totalorder %s33, 5
      %p753 = pnand %p751, %p752
      %p754 = pneg %p753
      // Predicated region
      $region109: #{qwen3_forward.1} parent=5 // pred_check
        _
      $region110: #{qwen3_forward.1} parent=5 // pred_check_branch
        %756 = sbr.rel (%p753) target = $region112
      $region111: #{qwen3_forward.1} parent=5 // pred_region
        %s757 = ssub.s32 %s33, 1
        // Predicated region
        $region113: #{qwen3_forward.1} parent=111 // pred_check
          %p758 = pneg %p66
        $region114: #{qwen3_forward.1} parent=111 // pred_check_branch
          %760 = sbr.rel (%p758) target = $region116
        $region115: #{qwen3_forward.1} parent=111 // pred_region
          %762 = dma.done [#allocation5], 16
        $region116: #{qwen3_forward.1} parent=111 // pred_fallthru
          _
        %763 = sfence
        %p764 = pneg %p66
        %p765 = pneg %p63
        %p766 = pneg %p87
        %p767 = pneg %p84
        %p768 = pneg %p108
        %p769 = pneg %p105
        %p770 = pneg %p129
        %p771 = pneg %p126
        %p772 = pneg %p150
        %p773 = pneg %p147
        %p774 = pneg %p171
        %p775 = pneg %p168
        %p776 = pneg %p192
        %p777 = pneg %p189
        %p778 = pneg %p213
        %p779 = pneg %p210
        %p780 = pneg %p234
        %p781 = pneg %p231
        %p782 = pneg %p255
        %p783 = pneg %p252
        %p784 = pneg %p276
        %p785 = pneg %p273
        %p786 = pneg %p297
        %p787 = pneg %p294
        %p788 = scmp.lt.s32.totalorder %s43, 1
        %s789 = scalar_select %p788, %s43, 1
        %s790 = scalar_lea.vmem %s12, %s789
        %p791 = pneg %p323
        %p792 = pneg %p320
        %p793 = scmp.lt.s32.totalorder %s43, 1
        %s794 = scalar_select %p793, %s43, 1
        %s795 = smul.addr %s794, 16
        %s796 = smul.addr %s795, 4
        %s797 = scalar_lea.vmem %s13, %s796
        %p798 = pneg %p349
        %p799 = pneg %p346
        %p800 = scmp.lt.s32.totalorder %s43, 1
        %s801 = scalar_select %p800, %s43, 1
        %s802 = smul.addr %s801, 16
        %s803 = smul.addr %s802, 4
        %s804 = scalar_lea.vmem %s14, %s803
        %p805 = pneg %p375
        %p806 = pneg %p372
        %p807 = scmp.lt.s32.totalorder %s43, 1
        %s808 = scalar_select %p807, %s43, 1
        %s809 = smul.addr %s808, 16
        %s810 = smul.addr %s809, 4
        %s811 = scalar_lea.vmem %s15, %s810
        %p812 = pneg %p401
        %p813 = pneg %p398
        %p814 = scmp.lt.s32.totalorder %s43, 1
        %s815 = scalar_select %p814, %s43, 1
        %s816 = smul.addr %s815, 16
        %s817 = smul.addr %s816, 4
        %s818 = scalar_lea.vmem %s16, %s817
        %p819 = pneg %p427
        %p820 = pneg %p424
        %p821 = scmp.lt.s32.totalorder %s43, 1
        %s822 = scalar_select %p821, %s43, 1
        %s823 = scalar_lea.vmem %s17, %s822
        %p824 = pneg %p453
        %p825 = pneg %p450
        %p826 = scmp.lt.s32.totalorder %s43, 1
        %s827 = scalar_select %p826, %s43, 1
        %s828 = scalar_lea.vmem %s18, %s827
        %p829 = pneg %p479
        %p830 = pneg %p476
        %p831 = scmp.lt.s32.totalorder %s43, 1
        %s832 = scalar_select %p831, %s43, 1
        %s833 = scalar_lea.vmem %s19, %s832
        %p834 = pneg %p505
        %p835 = pneg %p502
        %p836 = scmp.lt.s32.totalorder %s43, 1
        %s837 = scalar_select %p836, %s43, 1
        %s838 = smul.addr %s837, 32
        %s839 = smul.addr %s838, 4
        %s840 = scalar_lea.vmem %s20, %s839
        %p841 = pneg %p531
        %p842 = pneg %p528
        %p843 = scmp.lt.s32.totalorder %s43, 1
        %s844 = scalar_select %p843, %s43, 1
        %s845 = smul.addr %s844, 32
        %s846 = smul.addr %s845, 4
        %s847 = scalar_lea.vmem %s21, %s846
        %p848 = pneg %p557
        %p849 = pneg %p554
        %p850 = scmp.lt.s32.totalorder %s43, 1
        %s851 = scalar_select %p850, %s43, 1
        %s852 = smul.addr %s851, 32
        %s853 = smul.addr %s852, 4
        %s854 = scalar_lea.vmem %s22, %s853
        %p855 = pneg %p583
        %p856 = pneg %p580
        %p857 = pneg %p609
        %p858 = pneg %p606
        %s859 = sand.u32 %s596, 1
        %s860 = scalar_lea.sflag [#allocation4], %s859
        %s861 = sand.u32 %s596, 1
        %s862 = smul.addr %s861, 16
        %s863 = scalar_lea.vmem [#allocation6], %s862
        %p864 = scmp.lt.s32.totalorder %s43, 1
        %s865 = scalar_select %p864, %s43, 1
        %s866 = scalar_lea.vmem %s12, %s865
        %p867 = scmp.lt.s32.totalorder %s43, 1
        %s868 = scalar_select %p867, %s43, 1
        %s869 = smul.addr %s868, 16
        %s870 = smul.addr %s869, 4
        %s871 = scalar_lea.vmem %s13, %s870
        %p872 = scmp.lt.s32.totalorder %s43, 1
        %s873 = scalar_select %p872, %s43, 1
        %s874 = smul.addr %s873, 16
        %s875 = smul.addr %s874, 4
        %s876 = scalar_lea.vmem %s14, %s875
        %p877 = scmp.lt.s32.totalorder %s43, 1
        %s878 = scalar_select %p877, %s43, 1
        %s879 = smul.addr %s878, 16
        %s880 = smul.addr %s879, 4
        %s881 = scalar_lea.vmem %s15, %s880
        %p882 = scmp.lt.s32.totalorder %s43, 1
        %s883 = scalar_select %p882, %s43, 1
        %s884 = smul.addr %s883, 16
        %s885 = smul.addr %s884, 4
        %s886 = scalar_lea.vmem %s16, %s885
        %p887 = scmp.lt.s32.totalorder %s43, 1
        %s888 = scalar_select %p887, %s43, 1
        %s889 = scalar_lea.vmem %s17, %s888
        %p890 = scmp.lt.s32.totalorder %s43, 1
        %s891 = scalar_select %p890, %s43, 1
        %s892 = scalar_lea.vmem %s18, %s891
        %p893 = scmp.lt.s32.totalorder %s43, 1
        %s894 = scalar_select %p893, %s43, 1
        %s895 = scalar_lea.vmem %s19, %s894
        %p896 = scmp.lt.s32.totalorder %s43, 1
        %s897 = scalar_select %p896, %s43, 1
        %s898 = smul.addr %s897, 32
        %s899 = smul.addr %s898, 4
        %s900 = scalar_lea.vmem %s20, %s899
        %p901 = scmp.lt.s32.totalorder %s43, 1
        %s902 = scalar_select %p901, %s43, 1
        %s903 = smul.addr %s902, 32
        %s904 = smul.addr %s903, 4
        %s905 = scalar_lea.vmem %s21, %s904
        %p906 = scmp.lt.s32.totalorder %s43, 1
        %s907 = scalar_select %p906, %s43, 1
        %s908 = smul.addr %s907, 32
        %s909 = smul.addr %s908, 4
        %s910 = scalar_lea.vmem %s22, %s909
        %s911 = smul.u32 2, %s42
        %p913 = scmp.eq.s32.totalorder %s43, 0
        // Predicated region
        $region117: #{qwen3_forward.1} parent=111 // pred_check
          %p914 = pneg %p913
        $region118: #{qwen3_forward.1} parent=111 // pred_check_branch
          %916 = sbr.rel (%p914) target = $region120
        $region119: #{qwen3_forward.1} parent=111 // pred_region
          %s917 = smul.u32 %s42, 16
          %s918 = sld [smem:[#allocation3 + %s917]]
          %s919 = scalar_lea.vmem %s1, %s918
          %v920 = vld [vmem:[%s919] sm:$0x1]
          %921 = vst [vmem:[#allocation2] sm:$0x1] %v920
          %s922 = sadd.s32 %s917, 1
          %s923 = sld [smem:[#allocation3 + %s922]]
          %s924 = scalar_lea.vmem %s1, %s923
          %v925 = vld [vmem:[%s924] sm:$0x1]
          %926 = vst [vmem:[#allocation2 + $0x1] sm:$0x1] %v925
          %s927 = sadd.s32 %s917, 2
          %s928 = sld [smem:[#allocation3 + %s927]]
          %s929 = scalar_lea.vmem %s1, %s928
          %v930 = vld [vmem:[%s929] sm:$0x1]
          %931 = vst [vmem:[#allocation2 + $0x2] sm:$0x1] %v930
          %s932 = sadd.s32 %s917, 3
          %s933 = sld [smem:[#allocation3 + %s932]]
          %s934 = scalar_lea.vmem %s1, %s933
          %v935 = vld [vmem:[%s934] sm:$0x1]
          %936 = vst [vmem:[#allocation2 + $0x3] sm:$0x1] %v935
          %s937 = sadd.s32 %s917, 4
          %s938 = sld [smem:[#allocation3 + %s937]]
          %s939 = scalar_lea.vmem %s1, %s938
          %v940 = vld [vmem:[%s939] sm:$0x1]
          %941 = vst [vmem:[#allocation2 + $0x4] sm:$0x1] %v940
          %s942 = sadd.s32 %s917, 5
          %s943 = sld [smem:[#allocation3 + %s942]]
          %s944 = scalar_lea.vmem %s1, %s943
          %v945 = vld [vmem:[%s944] sm:$0x1]
          %946 = vst [vmem:[#allocation2 + $0x5] sm:$0x1] %v945
          %s947 = sadd.s32 %s917, 6
          %s948 = sld [smem:[#allocation3 + %s947]]
          %s949 = scalar_lea.vmem %s1, %s948
          %v950 = vld [vmem:[%s949] sm:$0x1]
          %951 = vst [vmem:[#allocation2 + $0x6] sm:$0x1] %v950
          %s952 = sadd.s32 %s917, 7
          %s953 = sld [smem:[#allocation3 + %s952]]
          %s954 = scalar_lea.vmem %s1, %s953
          %v955 = vld [vmem:[%s954] sm:$0x1]
          %956 = vst [vmem:[#allocation2 + $0x7] sm:$0x1] %v955
          %s957 = sadd.s32 %s917, 8
          %s958 = sld [smem:[#allocation3 + %s957]]
          %s959 = scalar_lea.vmem %s1, %s958
          %v960 = vld [vmem:[%s959] sm:$0x1]
          %961 = vst [vmem:[#allocation2 + $0x8] sm:$0x1] %v960
          %s962 = sadd.s32 %s917, 9
          %s963 = sld [smem:[#allocation3 + %s962]]
          %s964 = scalar_lea.vmem %s1, %s963
          %v965 = vld [vmem:[%s964] sm:$0x1]
          %966 = vst [vmem:[#allocation2 + $0x9] sm:$0x1] %v965
          %s967 = sadd.s32 %s917, 10
          %s968 = sld [smem:[#allocation3 + %s967]]
          %s969 = scalar_lea.vmem %s1, %s968
          %v970 = vld [vmem:[%s969] sm:$0x1]
          %971 = vst [vmem:[#allocation2 + $0xa] sm:$0x1] %v970
          %s972 = sadd.s32 %s917, 11
          %s973 = sld [smem:[#allocation3 + %s972]]
          %s974 = scalar_lea.vmem %s1, %s973
          %v975 = vld [vmem:[%s974] sm:$0x1]
          %976 = vst [vmem:[#allocation2 + $0xb] sm:$0x1] %v975
          %s977 = sadd.s32 %s917, 12
          %s978 = sld [smem:[#allocation3 + %s977]]
          %s979 = scalar_lea.vmem %s1, %s978
          %v980 = vld [vmem:[%s979] sm:$0x1]
          %981 = vst [vmem:[#allocation2 + $0xc] sm:$0x1] %v980
          %s982 = sadd.s32 %s917, 13
          %s983 = sld [smem:[#allocation3 + %s982]]
          %s984 = scalar_lea.vmem %s1, %s983
          %v985 = vld [vmem:[%s984] sm:$0x1]
          %986 = vst [vmem:[#allocation2 + $0xd] sm:$0x1] %v985
          %s987 = sadd.s32 %s917, 14
          %s988 = sld [smem:[#allocation3 + %s987]]
          %s989 = scalar_lea.vmem %s1, %s988
          %v990 = vld [vmem:[%s989] sm:$0x1]
          %991 = vst [vmem:[#allocation2 + $0xe] sm:$0x1] %v990
          %s992 = sadd.s32 %s917, 15
          %s993 = sld [smem:[#allocation3 + %s992]]
          %s994 = scalar_lea.vmem %s1, %s993
          %v995 = vld [vmem:[%s994] sm:$0x1]
          %996 = vst [vmem:[#allocation2 + $0xf] sm:$0x1] %v995
        $region120: #{qwen3_forward.1} parent=111 // pred_fallthru
          _
        %v997 = vld [vmem:[#allocation2] sm:$0xff]
        %v998 = vld [vmem:[#allocation2 + $0x8] sm:$0xff]
        %v999 = vld [vmem:[%s2] sm:$0xff]
        %v1000 = vld [vmem:[%s2 + $0x8] sm:$0xff]
        %v1001 = vld [vmem:[%s3] sm:$0xff]
        %v1002 = vld [vmem:[%s3 + $0x8] sm:$0xff]
        %v1003 = vld [vmem:[%s4] sm:$0xff]
        %v1004 = vld [vmem:[%s4 + $0x8] sm:$0xff]
        %v1005 = vld [vmem:[%s5] sm:$0xff]
        %v1006 = vld [vmem:[%s5 + $0x8] sm:$0xff]
        %v1007 = vld [vmem:[%s10] sm:$0xff]
        %v1008 = vld [vmem:[%s10 + $0x8] sm:$0xff]
        %v1009 = vld [vmem:[%s889] sm:$0x1]
        %v1010 = vld [vmem:[%s892] sm:$0x1]
        %v1011 = vld [vmem:[%s866] sm:$0x1]
        %v1012 = vmul.f32 %v997, %v997
        %v1013 = vmul.f32 %v998, %v998
        %1014 = vadd.xlane.f32.xlu0 %v1012
        %v1015 = vpop.xlane.xlu0 %1014
        %1016 = vadd.xlane.f32.xlu0 %v1013
        %v1017 = vpop.xlane.xlu0 %1016
        %v1018 = vrcp.pop 128.0
        %v1019 = vmul.f32 128.0, %v1018
        %v1020 = vsub.f32 1.0, %v1019
        %v1021 = vmul.f32 %v1018, %v1020
        %v1022 = vadd.f32 %v1018, %v1021
        %vm1023 = vweird.f32 %v1018
        %v1024 = vsel %vm1023, %v1018, %v1022
        %v1025 = vmul.f32 %v1015, %v1024
        %v1026 = vmul.f32 %v1017, %v1024
        %v1027 = vadd.f32 %v1025, 1e-06
        %v1028 = vadd.f32 %v1026, 1e-06
        %v1029 = vrsqrt.pop %v1027
        %v1030 = vmul.f32 %v1029, %v1027
        %v1031 = vmul.f32 %v1030, %v1029
        %v1032 = vmul.f32 0.5, %v1031
        %v1033 = vsub.f32 1.5, %v1032
        %v1034 = vmul.f32 %v1029, %v1033
        %vm1035 = vweird.f32 %v1027
        %vm1036 = vweird.f32 %v1029
        %vm1037 = vmor %vm1035, %vm1036
        %v1038 = vsel %vm1037, %v1029, %v1034
        %v1039 = vrsqrt.pop %v1028
        %v1040 = vmul.f32 %v1039, %v1028
        %v1041 = vmul.f32 %v1040, %v1039
        %v1042 = vmul.f32 0.5, %v1041
        %v1043 = vsub.f32 1.5, %v1042
        %v1044 = vmul.f32 %v1039, %v1043
        %vm1045 = vweird.f32 %v1028
        %vm1046 = vweird.f32 %v1039
        %vm1047 = vmor %vm1045, %vm1046
        %v1048 = vsel %vm1047, %v1039, %v1044
        %v1049 = vmul.f32 %v997, %v1038
        %v1050 = vmul.f32 %v998, %v1048
        %v1052 = vperm.slane %v1011, 0
        %v1054 = vmul.f32 %v1052, %v1049
        %v1055 = vmul.f32 %v1052, %v1050
        %v1056 = vpack.c.bf16 %v1055, %v1054
        %v1057 = vld [vmem:[%s871] sm:$0xf]
        %v1058 = vld [vmem:[%s871 + $0x4] sm:$0xf]
        %v1059 = vld [vmem:[%s871 + $0x8] sm:$0xf]
        %v1060 = vld [vmem:[%s871 + $0xc] sm:$0xf]
        %v1061 = vld [vmem:[%s871 + $0x10] sm:$0xf]
        %v1062 = vld [vmem:[%s871 + $0x14] sm:$0xf]
        %v1063 = vld [vmem:[%s871 + $0x18] sm:$0xf]
        %v1064 = vld [vmem:[%s871 + $0x1c] sm:$0xf]
        %v1065 = vld [vmem:[%s871 + $0x20] sm:$0xf]
        %v1066 = vld [vmem:[%s871 + $0x24] sm:$0xf]
        %v1067 = vld [vmem:[%s871 + $0x28] sm:$0xf]
        %v1068 = vld [vmem:[%s871 + $0x2c] sm:$0xf]
        %v1069 = vld [vmem:[%s871 + $0x30] sm:$0xf]
        %v1070 = vld [vmem:[%s871 + $0x34] sm:$0xf]
        %v1071 = vld [vmem:[%s871 + $0x38] sm:$0xf]
        %v1072 = vld [vmem:[%s871 + $0x3c] sm:$0xf]
        %v1089 = vunpack.c.l.b16 %v1057
        %v1090 = vunpack.c.l.b16 %v1058
        %v1091 = vunpack.c.l.b16 %v1059
        %v1092 = vunpack.c.l.b16 %v1060
        %v1093 = vunpack.c.l.b16 %v1061
        %v1094 = vunpack.c.l.b16 %v1062
        %v1095 = vunpack.c.l.b16 %v1063
        %v1096 = vunpack.c.l.b16 %v1064
        %v1097 = vunpack.c.l.b16 %v1065
        %v1098 = vunpack.c.l.b16 %v1066
        %v1099 = vunpack.c.l.b16 %v1067
        %v1100 = vunpack.c.l.b16 %v1068
        %v1101 = vunpack.c.l.b16 %v1069
        %v1102 = vunpack.c.l.b16 %v1070
        %v1103 = vunpack.c.l.b16 %v1071
        %v1104 = vunpack.c.l.b16 %v1072
        %v1105 = vpack.c.b16 %v1090, %v1089
        %v1106 = vpack.c.b16 %v1092, %v1091
        %v1107 = vpack.c.b16 %v1094, %v1093
        %v1108 = vpack.c.b16 %v1096, %v1095
        %v1109 = vpack.c.b16 %v1098, %v1097
        %v1110 = vpack.c.b16 %v1100, %v1099
        %v1111 = vpack.c.b16 %v1102, %v1101
        %v1112 = vpack.c.b16 %v1104, %v1103
        %1121 = vmatpush.bf16.msra.mxu0 %v1112
        %1122 = vmatpush.bf16.msra.mxu0 %v1111
        %1123 = vmatpush.bf16.msra.mxu0 %v1110
        %1124 = vmatpush.bf16.msra.mxu0 %v1109
        %1125 = vmatpush.bf16.msra.mxu0 %v1108
        %1126 = vmatpush.bf16.msra.mxu0 %v1107
        %1127 = vmatpush.bf16.msra.mxu0 %v1106
        %1128 = vmatpush.bf16.msra.mxu0 %v1105
        %1129 = vmatmul.bf16.gmra.mxu0 %v1056
        %v1130 = vpop.f32.mrf.mxu0
        %v1131 = vadd.f32 0.0, %v1130
        %v1132 = vpop.f32.mrf.mxu0
        %v1133 = vadd.f32 0.0, %v1132
        %1134 = vdwg.mxu0
        %v1135 = vld [vmem:[%s876] sm:$0xf]
        %v1136 = vld [vmem:[%s876 + $0x4] sm:$0xf]
        %v1137 = vld [vmem:[%s876 + $0x8] sm:$0xf]
        %v1138 = vld [vmem:[%s876 + $0xc] sm:$0xf]
        %v1139 = vld [vmem:[%s876 + $0x10] sm:$0xf]
        %v1140 = vld [vmem:[%s876 + $0x14] sm:$0xf]
        %v1141 = vld [vmem:[%s876 + $0x18] sm:$0xf]
        %v1142 = vld [vmem:[%s876 + $0x1c] sm:$0xf]
        %v1143 = vld [vmem:[%s876 + $0x20] sm:$0xf]
        %v1144 = vld [vmem:[%s876 + $0x24] sm:$0xf]
        %v1145 = vld [vmem:[%s876 + $0x28] sm:$0xf]
        %v1146 = vld [vmem:[%s876 + $0x2c] sm:$0xf]
        %v1147 = vld [vmem:[%s876 + $0x30] sm:$0xf]
        %v1148 = vld [vmem:[%s876 + $0x34] sm:$0xf]
        %v1149 = vld [vmem:[%s876 + $0x38] sm:$0xf]
        %v1150 = vld [vmem:[%s876 + $0x3c] sm:$0xf]
        %v1167 = vunpack.c.l.b16 %v1135
        %v1168 = vunpack.c.l.b16 %v1136
        %v1169 = vunpack.c.l.b16 %v1137
        %v1170 = vunpack.c.l.b16 %v1138
        %v1171 = vunpack.c.l.b16 %v1139
        %v1172 = vunpack.c.l.b16 %v1140
        %v1173 = vunpack.c.l.b16 %v1141
        %v1174 = vunpack.c.l.b16 %v1142
        %v1175 = vunpack.c.l.b16 %v1143
        %v1176 = vunpack.c.l.b16 %v1144
        %v1177 = vunpack.c.l.b16 %v1145
        %v1178 = vunpack.c.l.b16 %v1146
        %v1179 = vunpack.c.l.b16 %v1147
        %v1180 = vunpack.c.l.b16 %v1148
        %v1181 = vunpack.c.l.b16 %v1149
        %v1182 = vunpack.c.l.b16 %v1150
        %v1183 = vpack.c.b16 %v1168, %v1167
        %v1184 = vpack.c.b16 %v1170, %v1169
        %v1185 = vpack.c.b16 %v1172, %v1171
        %v1186 = vpack.c.b16 %v1174, %v1173
        %v1187 = vpack.c.b16 %v1176, %v1175
        %v1188 = vpack.c.b16 %v1178, %v1177
        %v1189 = vpack.c.b16 %v1180, %v1179
        %v1190 = vpack.c.b16 %v1182, %v1181
        %1199 = vmatpush.bf16.msra.mxu0 %v1190
        %1200 = vmatpush.bf16.msra.mxu0 %v1189
        %1201 = vmatpush.bf16.msra.mxu0 %v1188
        %1202 = vmatpush.bf16.msra.mxu0 %v1187
        %1203 = vmatpush.bf16.msra.mxu0 %v1186
        %1204 = vmatpush.bf16.msra.mxu0 %v1185
        %1205 = vmatpush.bf16.msra.mxu0 %v1184
        %1206 = vmatpush.bf16.msra.mxu0 %v1183
        %1207 = vmatmul.bf16.gmra.mxu0 %v1056
        %v1208 = vpop.f32.mrf.mxu0
        %v1209 = vadd.f32 0.0, %v1208
        %v1210 = vpop.f32.mrf.mxu0
        %v1211 = vadd.f32 0.0, %v1210
        %1212 = vdwg.mxu0
        %v1213 = vld [vmem:[%s881] sm:$0xf]
        %v1214 = vld [vmem:[%s881 + $0x4] sm:$0xf]
        %v1215 = vld [vmem:[%s881 + $0x8] sm:$0xf]
        %v1216 = vld [vmem:[%s881 + $0xc] sm:$0xf]
        %v1217 = vld [vmem:[%s881 + $0x10] sm:$0xf]
        %v1218 = vld [vmem:[%s881 + $0x14] sm:$0xf]
        %v1219 = vld [vmem:[%s881 + $0x18] sm:$0xf]
        %v1220 = vld [vmem:[%s881 + $0x1c] sm:$0xf]
        %v1221 = vld [vmem:[%s881 + $0x20] sm:$0xf]
        %v1222 = vld [vmem:[%s881 + $0x24] sm:$0xf]
        %v1223 = vld [vmem:[%s881 + $0x28] sm:$0xf]
        %v1224 = vld [vmem:[%s881 + $0x2c] sm:$0xf]
        %v1225 = vld [vmem:[%s881 + $0x30] sm:$0xf]
        %v1226 = vld [vmem:[%s881 + $0x34] sm:$0xf]
        %v1227 = vld [vmem:[%s881 + $0x38] sm:$0xf]
        %v1228 = vld [vmem:[%s881 + $0x3c] sm:$0xf]
        %v1245 = vunpack.c.l.b16 %v1213
        %v1246 = vunpack.c.l.b16 %v1214
        %v1247 = vunpack.c.l.b16 %v1215
        %v1248 = vunpack.c.l.b16 %v1216
        %v1249 = vunpack.c.l.b16 %v1217
        %v1250 = vunpack.c.l.b16 %v1218
        %v1251 = vunpack.c.l.b16 %v1219
        %v1252 = vunpack.c.l.b16 %v1220
        %v1253 = vunpack.c.l.b16 %v1221
        %v1254 = vunpack.c.l.b16 %v1222
        %v1255 = vunpack.c.l.b16 %v1223
        %v1256 = vunpack.c.l.b16 %v1224
        %v1257 = vunpack.c.l.b16 %v1225
        %v1258 = vunpack.c.l.b16 %v1226
        %v1259 = vunpack.c.l.b16 %v1227
        %v1260 = vunpack.c.l.b16 %v1228
        %v1261 = vpack.c.b16 %v1246, %v1245
        %v1262 = vpack.c.b16 %v1248, %v1247
        %v1263 = vpack.c.b16 %v1250, %v1249
        %v1264 = vpack.c.b16 %v1252, %v1251
        %v1265 = vpack.c.b16 %v1254, %v1253
        %v1266 = vpack.c.b16 %v1256, %v1255
        %v1267 = vpack.c.b16 %v1258, %v1257
        %v1268 = vpack.c.b16 %v1260, %v1259
        %1277 = vmatpush.bf16.msra.mxu0 %v1268
        %1278 = vmatpush.bf16.msra.mxu0 %v1267
        %1279 = vmatpush.bf16.msra.mxu0 %v1266
        %1280 = vmatpush.bf16.msra.mxu0 %v1265
        %1281 = vmatpush.bf16.msra.mxu0 %v1264
        %1282 = vmatpush.bf16.msra.mxu0 %v1263
        %1283 = vmatpush.bf16.msra.mxu0 %v1262
        %1284 = vmatpush.bf16.msra.mxu0 %v1261
        %1285 = vmatmul.bf16.gmra.mxu0 %v1056
        %v1286 = vpop.f32.mrf.mxu0
        %v1287 = vadd.f32 0.0, %v1286
        %v1288 = vpop.f32.mrf.mxu0
        %v1289 = vadd.f32 0.0, %v1288
        %1290 = vdwg.mxu0
        %v1291 = vmul.f32 %v1131, %v1131
        %v1292 = vmul.f32 %v1133, %v1133
        %v1293 = vld [vmem:[%s8] sm:$0xff]
        %v1294 = vld [vmem:[%s8 + $0x8] sm:$0xff]
        %v1295 = vld [vmem:[%s8 + $0x10] sm:$0xff]
        %v1296 = vld [vmem:[%s8 + $0x18] sm:$0xff]
        %v1297 = vld [vmem:[%s8 + $0x20] sm:$0xff]
        %v1298 = vld [vmem:[%s8 + $0x28] sm:$0xff]
        %v1299 = vld [vmem:[%s8 + $0x30] sm:$0xff]
        %v1300 = vld [vmem:[%s8 + $0x38] sm:$0xff]
        %v1301 = vld [vmem:[%s8 + $0x40] sm:$0xff]
        %v1302 = vld [vmem:[%s8 + $0x48] sm:$0xff]
        %v1303 = vld [vmem:[%s8 + $0x50] sm:$0xff]
        %v1304 = vld [vmem:[%s8 + $0x58] sm:$0xff]
        %v1305 = vld [vmem:[%s8 + $0x60] sm:$0xff]
        %v1306 = vld [vmem:[%s8 + $0x68] sm:$0xff]
        %v1307 = vld [vmem:[%s8 + $0x70] sm:$0xff]
        %v1308 = vld [vmem:[%s8 + $0x78] sm:$0xff]
        %v1309 = vmul.f32 %v1209, %v1209
        %v1310 = vmul.f32 %v1211, %v1211
        %v1311 = vld [vmem:[%s9] sm:$0xff]
        %v1312 = vld [vmem:[%s9 + $0x8] sm:$0xff]
        %v1313 = vld [vmem:[%s9 + $0x10] sm:$0xff]
        %v1314 = vld [vmem:[%s9 + $0x18] sm:$0xff]
        %v1315 = vld [vmem:[%s9 + $0x20] sm:$0xff]
        %v1316 = vld [vmem:[%s9 + $0x28] sm:$0xff]
        %v1317 = vld [vmem:[%s9 + $0x30] sm:$0xff]
        %v1318 = vld [vmem:[%s9 + $0x38] sm:$0xff]
        %1319 = vmatpush.msra.mxu0 %v1308
        %1320 = vmatpush.msra.mxu0 %v1307
        %1321 = vmatpush.msra.mxu0 %v1306
        %1322 = vmatpush.msra.mxu0 %v1305
        %1323 = vmatpush.msra.mxu0 %v1304
        %1324 = vmatpush.msra.mxu0 %v1303
        %1325 = vmatpush.msra.mxu0 %v1302
        %1326 = vmatpush.msra.mxu0 %v1301
        %1327 = vmatpush.msra.mxu0 %v1300
        %1328 = vmatpush.msra.mxu0 %v1299
        %1329 = vmatpush.msra.mxu0 %v1298
        %1330 = vmatpush.msra.mxu0 %v1297
        %1331 = vmatpush.msra.mxu0 %v1296
        %1332 = vmatpush.msra.mxu0 %v1295
        %1333 = vmatpush.msra.mxu0 %v1294
        %1334 = vmatpush.msra.mxu0 %v1293
        %1335 = vmatmul.f32.gmra.mxu0 %v1291
        %v1336 = vpop.f32.mrf.mxu0
        %v1337 = vadd.f32 1e-06, %v1336
        %1338 = vmatmul.f32.gmra.mxu0 %v1292
        %v1339 = vpop.f32.mrf.mxu0
        %v1340 = vadd.f32 1e-06, %v1339
        %1341 = vdwg.mxu0
        %v1342 = vrsqrt.pop %v1337
        %v1343 = vmul.f32 %v1342, %v1337
        %v1344 = vmul.f32 %v1343, %v1342
        %v1345 = vmul.f32 0.5, %v1344
        %v1346 = vsub.f32 1.5, %v1345
        %v1347 = vmul.f32 %v1342, %v1346
        %vm1348 = vweird.f32 %v1337
        %vm1349 = vweird.f32 %v1342
        %vm1350 = vmor %vm1348, %vm1349
        %v1351 = vsel %vm1350, %v1342, %v1347
        %v1352 = vrsqrt.pop %v1340
        %v1353 = vmul.f32 %v1352, %v1340
        %v1354 = vmul.f32 %v1353, %v1352
        %v1355 = vmul.f32 0.5, %v1354
        %v1356 = vsub.f32 1.5, %v1355
        %v1357 = vmul.f32 %v1352, %v1356
        %vm1358 = vweird.f32 %v1340
        %vm1359 = vweird.f32 %v1352
        %vm1360 = vmor %vm1358, %vm1359
        %v1361 = vsel %vm1360, %v1352, %v1357
        %v1362 = vmul.f32 %v1131, %v1351
        %v1363 = vmul.f32 %v1133, %v1361
        %v1365 = vperm.slane %v1009, 0
        %v1367 = vmul.f32 %v1362, %v1365
        %v1368 = vmul.f32 %v1363, %v1365
        %vm1369 = vcmask 523264
        %v1371 = vsel %vm1369, %v1309, 0
        %v1374 = vsel %vm1369, %v1310, 0
        %1376 = vmatpush.msra.mxu0 0.0
        %1377 = vmatpush.msra.mxu0 0.0
        %1378 = vmatpush.msra.mxu0 0.0
        %1379 = vmatpush.msra.mxu0 0.0
        %1380 = vmatpush.msra.mxu0 0.0
        %1381 = vmatpush.msra.mxu0 0.0
        %1382 = vmatpush.msra.mxu0 0.0
        %1383 = vmatpush.msra.mxu0 0.0
        %1384 = vmatpush.msra.mxu0 %v1318
        %1385 = vmatpush.msra.mxu0 %v1317
        %1386 = vmatpush.msra.mxu0 %v1316
        %1387 = vmatpush.msra.mxu0 %v1315
        %1388 = vmatpush.msra.mxu0 %v1314
        %1389 = vmatpush.msra.mxu0 %v1313
        %1390 = vmatpush.msra.mxu0 %v1312
        %1391 = vmatpush.msra.mxu0 %v1311
        %1392 = vmatmul.f32.gmra.mxu0 %v1371
        %v1393 = vpop.f32.mrf.mxu0
        %v1394 = vadd.f32 1e-06, %v1393
        %1395 = vmatmul.f32.gmra.mxu0 %v1374
        %v1396 = vpop.f32.mrf.mxu0
        %v1397 = vadd.f32 1e-06, %v1396
        %1398 = vdwg.mxu0
        %v1399 = vrsqrt.pop %v1394
        %v1400 = vmul.f32 %v1399, %v1394
        %v1401 = vmul.f32 %v1400, %v1399
        %v1402 = vmul.f32 0.5, %v1401
        %v1403 = vsub.f32 1.5, %v1402
        %v1404 = vmul.f32 %v1399, %v1403
        %vm1405 = vweird.f32 %v1394
        %vm1406 = vweird.f32 %v1399
        %vm1407 = vmor %vm1405, %vm1406
        %v1408 = vsel %vm1407, %v1399, %v1404
        %v1409 = vrsqrt.pop %v1397
        %v1410 = vmul.f32 %v1409, %v1397
        %v1411 = vmul.f32 %v1410, %v1409
        %v1412 = vmul.f32 0.5, %v1411
        %v1413 = vsub.f32 1.5, %v1412
        %v1414 = vmul.f32 %v1409, %v1413
        %vm1415 = vweird.f32 %v1397
        %vm1416 = vweird.f32 %v1409
        %vm1417 = vmor %vm1415, %vm1416
        %v1418 = vsel %vm1417, %v1409, %v1414
        %v1419 = vmul.f32 %v1209, %v1408
        %v1420 = vmul.f32 %v1211, %v1418
        %v1422 = vperm.slane %v1010, 0
        %v1424 = vmul.f32 %v1419, %v1422
        %v1425 = vmul.f32 %v1420, %v1422
        %v1426 = vmul.f32 %v1367, %v999
        %v1427 = vmul.f32 %v1368, %v1000
        %v1428 = vld [vmem:[%s6] sm:$0xff]
        %v1429 = vld [vmem:[%s6 + $0x8] sm:$0xff]
        %v1430 = vld [vmem:[%s6 + $0x10] sm:$0xff]
        %v1431 = vld [vmem:[%s6 + $0x18] sm:$0xff]
        %v1432 = vld [vmem:[%s6 + $0x20] sm:$0xff]
        %v1433 = vld [vmem:[%s6 + $0x28] sm:$0xff]
        %v1434 = vld [vmem:[%s6 + $0x30] sm:$0xff]
        %v1435 = vld [vmem:[%s6 + $0x38] sm:$0xff]
        %v1436 = vld [vmem:[%s6 + $0x40] sm:$0xff]
        %v1437 = vld [vmem:[%s6 + $0x48] sm:$0xff]
        %v1438 = vld [vmem:[%s6 + $0x50] sm:$0xff]
        %v1439 = vld [vmem:[%s6 + $0x58] sm:$0xff]
        %v1440 = vld [vmem:[%s6 + $0x60] sm:$0xff]
        %v1441 = vld [vmem:[%s6 + $0x68] sm:$0xff]
        %v1442 = vld [vmem:[%s6 + $0x70] sm:$0xff]
        %v1443 = vld [vmem:[%s6 + $0x78] sm:$0xff]
        %1444 = vmatpush.msra.mxu0 %v1443
        %1445 = vmatpush.msra.mxu0 %v1442
        %1446 = vmatpush.msra.mxu0 %v1441
        %1447 = vmatpush.msra.mxu0 %v1440
        %1448 = vmatpush.msra.mxu0 %v1439
        %1449 = vmatpush.msra.mxu0 %v1438
        %1450 = vmatpush.msra.mxu0 %v1437
        %1451 = vmatpush.msra.mxu0 %v1436
        %1452 = vmatpush.msra.mxu0 %v1435
        %1453 = vmatpush.msra.mxu0 %v1434
        %1454 = vmatpush.msra.mxu0 %v1433
        %1455 = vmatpush.msra.mxu0 %v1432
        %1456 = vmatpush.msra.mxu0 %v1431
        %1457 = vmatpush.msra.mxu0 %v1430
        %1458 = vmatpush.msra.mxu0 %v1429
        %1459 = vmatpush.msra.mxu0 %v1428
        %1460 = vmatmul.f32.gmra.mxu0 %v1367
        %v1461 = vpop.f32.mrf.mxu0
        %v1462 = vadd.f32 0.0, %v1461
        %1463 = vmatmul.f32.gmra.mxu0 %v1368
        %v1464 = vpop.f32.mrf.mxu0
        %v1465 = vadd.f32 0.0, %v1464
        %1466 = vdwg.mxu0
        %v1467 = vmul.f32 %v1462, %v1001
        %v1468 = vmul.f32 %v1465, %v1002
        %v1469 = vadd.f32 %v1426, %v1467
        %v1470 = vadd.f32 %v1427, %v1468
        %v1471 = vmul.f32 %v1424, %v1003
        %v1472 = vmul.f32 %v1425, %v1004
        %v1473 = vld [vmem:[%s7] sm:$0xff]
        %v1474 = vld [vmem:[%s7 + $0x8] sm:$0xff]
        %v1475 = vld [vmem:[%s7 + $0x10] sm:$0xff]
        %v1476 = vld [vmem:[%s7 + $0x18] sm:$0xff]
        %v1477 = vld [vmem:[%s7 + $0x20] sm:$0xff]
        %v1478 = vld [vmem:[%s7 + $0x28] sm:$0xff]
        %v1479 = vld [vmem:[%s7 + $0x30] sm:$0xff]
        %v1480 = vld [vmem:[%s7 + $0x38] sm:$0xff]
        %v1482 = vsel %vm1369, %v1424, 0
        %v1485 = vsel %vm1369, %v1425, 0
        %1487 = vmatpush.msra.mxu0 0.0
        %1488 = vmatpush.msra.mxu0 0.0
        %1489 = vmatpush.msra.mxu0 0.0
        %1490 = vmatpush.msra.mxu0 0.0
        %1491 = vmatpush.msra.mxu0 0.0
        %1492 = vmatpush.msra.mxu0 0.0
        %1493 = vmatpush.msra.mxu0 0.0
        %1494 = vmatpush.msra.mxu0 0.0
        %1495 = vmatpush.msra.mxu0 %v1480
        %1496 = vmatpush.msra.mxu0 %v1479
        %1497 = vmatpush.msra.mxu0 %v1478
        %1498 = vmatpush.msra.mxu0 %v1477
        %1499 = vmatpush.msra.mxu0 %v1476
        %1500 = vmatpush.msra.mxu0 %v1475
        %1501 = vmatpush.msra.mxu0 %v1474
        %1502 = vmatpush.msra.mxu0 %v1473
        %1503 = vmatmul.f32.gmra.mxu0 %v1482
        %v1504 = vpop.f32.mrf.mxu0
        %v1505 = vadd.f32 0.0, %v1504
        %1506 = vmatmul.f32.gmra.mxu0 %v1485
        %v1507 = vpop.f32.mrf.mxu0
        %v1508 = vadd.f32 0.0, %v1507
        %1509 = vdwg.mxu0
        %v1510 = vmul.f32 %v1505, %v1005
        %v1511 = vmul.f32 %v1508, %v1006
        %v1512 = vadd.f32 %v1471, %v1510
        %v1513 = vadd.f32 %v1472, %v1511
        %v1514 = vpack.c.bf16 %v1469, %v1469
        %v1515 = vpack.c.bf16 %v1470, %v1470
        %v1516 = vpack.c.bf16 %v1512, %v1512
        %v1517 = vpack.c.bf16 %v1513, %v1513
        %v1518 = vpack.c.bf16 %v1287, %v1287
        %v1519 = vpack.c.bf16 %v1289, %v1289
        %v1522 = vunpack.c.l.b16 %v1514
        %v1523 = vunpack.c.l.b16 %v1515
        %v1524 = vpack.c.b16 %v1523, %v1522
        %v1527 = vunpack.c.l.b16 %v1516
        %v1528 = vunpack.c.l.b16 %v1517
        %v1529 = vpack.c.b16 %v1528, %v1527
        %vm1530 = vcmask 261120
        %v1532 = vsel %vm1530, %v1524, 0
        %v1535 = vsel %vm1530, %v1529, 0
        %1537 = vmatpush.bf16.xpose.msra.mxu0 0
        %1538 = vmatpush.bf16.xpose.msra.mxu0 0
        %1539 = vmatpush.bf16.xpose.msra.mxu0 0
        %1540 = vmatpush.bf16.xpose.msra.mxu0 0
        %1541 = vmatpush.bf16.xpose.msra.mxu0 0
        %1542 = vmatpush.bf16.xpose.msra.mxu0 0
        %1543 = vmatpush.bf16.xpose.msra.mxu0 0
        %1544 = vmatpush.bf16.xpose.msra.mxu0 %v1535
        %1545 = vmatmul.bf16.gmra.mxu0 %v1532
        %v1546 = vpop.f32.mrf.mxu0
        %v1547 = vadd.f32 %v1007, %v1546
        %v1548 = vpop.f32.mrf.mxu0
        %v1549 = vadd.f32 %v1008, %v1548
        %1550 = vdwg.mxu0
        %vm1551 = vcmask 130048
        %v1552 = vsel %vm1551, %v1547, -inf
        %1553 = vmax.xlane.f32.xlu0 %v1552
        %v1554 = vpop.xlane.xlu0 %1553
        %v1555 = vsel %vm1551, %v1549, -inf
        %1556 = vmax.xlane.f32.xlu0 %v1555
        %v1557 = vpop.xlane.xlu0 %1556
        %v1558 = vsub.f32 %v1547, %v1554
        %v1559 = vsub.f32 %v1549, %v1557
        %v1560 = vmul.f32 %v1558, 1.442695
        %v1561 = vpow.pop %v1560
        %v1562 = vmul.f32 %v1559, 1.442695
        %v1563 = vpow.pop %v1562
        %v1564 = vsel %vm1551, %v1561, 0.0
        %1565 = vadd.xlane.f32.xlu0 %v1564
        %v1566 = vpop.xlane.xlu0 %1565
        %v1567 = vsel %vm1551, %v1563, 0.0
        %1568 = vadd.xlane.f32.xlu0 %v1567
        %v1569 = vpop.xlane.xlu0 %1568
        %v1570 = vrcp.pop %v1566
        %v1571 = vrcp.pop %v1569
        %v1572 = vmul.f32 %v1561, %v1570
        %v1573 = vmul.f32 %v1563, %v1571
        %v1574 = vpack.c.bf16 %v1573, %v1572
        %v1577 = vunpack.c.l.b16 %v1518
        %v1578 = vunpack.c.l.b16 %v1519
        %v1579 = vpack.c.b16 %v1578, %v1577
        %v1582 = vsel %vm1551, %v1574, 0
        %1584 = vmatpush.bf16.msra.mxu0 0
        %1585 = vmatpush.bf16.msra.mxu0 0
        %1586 = vmatpush.bf16.msra.mxu0 0
        %1587 = vmatpush.bf16.msra.mxu0 0
        %1588 = vmatpush.bf16.msra.mxu0 0
        %1589 = vmatpush.bf16.msra.mxu0 0
        %1590 = vmatpush.bf16.msra.mxu0 0
        %1591 = vmatpush.bf16.msra.mxu0 %v1579
        %1592 = vmatmul.bf16.gmra.mxu0 %v1582
        %v1593 = vpop.f32.mrf.mxu0
        %v1594 = vadd.f32 0.0, %v1593
        %v1595 = vpop.f32.mrf.mxu0
        %v1596 = vadd.f32 0.0, %v1595
        %1597 = vdwg.mxu0
        %1598 = vrot.lane.b32.xlu0 %v1524, 96
        %v1599 = vpop.permute.xlu0 %1598
        %v1601 = vsel %vm1530, %v1599, 0
        %1603 = vmatpush.bf16.xpose.msra.mxu0 0
        %1604 = vmatpush.bf16.xpose.msra.mxu0 0
        %1605 = vmatpush.bf16.xpose.msra.mxu0 0
        %1606 = vmatpush.bf16.xpose.msra.mxu0 0
        %1607 = vmatpush.bf16.xpose.msra.mxu0 0
        %1608 = vmatpush.bf16.xpose.msra.mxu0 0
        %1609 = vmatpush.bf16.xpose.msra.mxu0 0
        %1610 = vmatpush.bf16.xpose.msra.mxu0 %v1535
        %1611 = vmatmul.bf16.gmra.mxu0 %v1601
        %v1612 = vpop.f32.mrf.mxu0
        %v1613 = vadd.f32 %v1007, %v1612
        %v1614 = vpop.f32.mrf.mxu0
        %v1615 = vadd.f32 %v1008, %v1614
        %1616 = vdwg.mxu0
        %v1617 = vsel %vm1551, %v1613, -inf
        %1618 = vmax.xlane.f32.xlu0 %v1617
        %v1619 = vpop.xlane.xlu0 %1618
        %v1620 = vsel %vm1551, %v1615, -inf
        %1621 = vmax.xlane.f32.xlu0 %v1620
        %v1622 = vpop.xlane.xlu0 %1621
        %v1623 = vsub.f32 %v1613, %v1619
        %v1624 = vsub.f32 %v1615, %v1622
        %v1625 = vmul.f32 %v1623, 1.442695
        %v1626 = vpow.pop %v1625
        %v1627 = vmul.f32 %v1624, 1.442695
        %v1628 = vpow.pop %v1627
        %v1629 = vsel %vm1551, %v1626, 0.0
        %1630 = vadd.xlane.f32.xlu0 %v1629
        %v1631 = vpop.xlane.xlu0 %1630
        %v1632 = vsel %vm1551, %v1628, 0.0
        %1633 = vadd.xlane.f32.xlu0 %v1632
        %v1634 = vpop.xlane.xlu0 %1633
        %v1635 = vrcp.pop %v1631
        %v1636 = vrcp.pop %v1634
        %v1637 = vmul.f32 %v1626, %v1635
        %v1638 = vmul.f32 %v1628, %v1636
        %v1639 = vpack.c.bf16 %v1638, %v1637
        %v1641 = vsel %vm1551, %v1639, 0
        %1643 = vmatpush.bf16.msra.mxu0 0
        %1644 = vmatpush.bf16.msra.mxu0 0
        %1645 = vmatpush.bf16.msra.mxu0 0
        %1646 = vmatpush.bf16.msra.mxu0 0
        %1647 = vmatpush.bf16.msra.mxu0 0
        %1648 = vmatpush.bf16.msra.mxu0 0
        %1649 = vmatpush.bf16.msra.mxu0 0
        %1650 = vmatpush.bf16.msra.mxu0 %v1579
        %1651 = vmatmul.bf16.gmra.mxu0 %v1641
        %v1652 = vpop.f32.mrf.mxu0
        %v1653 = vadd.f32 0.0, %v1652
        %v1654 = vpop.f32.mrf.mxu0
        %v1655 = vadd.f32 0.0, %v1654
        %1656 = vdwg.mxu0
        %1657 = vrot.lane.b32.xlu0 %v1524, 64
        %v1658 = vpop.permute.xlu0 %1657
        %1659 = vrot.lane.b32.xlu0 %v1529, 96
        %v1660 = vpop.permute.xlu0 %1659
        %v1662 = vsel %vm1530, %v1658, 0
        %v1665 = vsel %vm1530, %v1660, 0
        %1667 = vmatpush.bf16.xpose.msra.mxu0 0
        %1668 = vmatpush.bf16.xpose.msra.mxu0 0
        %1669 = vmatpush.bf16.xpose.msra.mxu0 0
        %1670 = vmatpush.bf16.xpose.msra.mxu0 0
        %1671 = vmatpush.bf16.xpose.msra.mxu0 0
        %1672 = vmatpush.bf16.xpose.msra.mxu0 0
        %1673 = vmatpush.bf16.xpose.msra.mxu0 0
        %1674 = vmatpush.bf16.xpose.msra.mxu0 %v1665
        %1675 = vmatmul.bf16.gmra.mxu0 %v1662
        %v1676 = vpop.f32.mrf.mxu0
        %v1677 = vadd.f32 %v1007, %v1676
        %v1678 = vpop.f32.mrf.mxu0
        %v1679 = vadd.f32 %v1008, %v1678
        %1680 = vdwg.mxu0
        %v1681 = vsel %vm1551, %v1677, -inf
        %1682 = vmax.xlane.f32.xlu0 %v1681
        %v1683 = vpop.xlane.xlu0 %1682
        %v1684 = vsel %vm1551, %v1679, -inf
        %1685 = vmax.xlane.f32.xlu0 %v1684
        %v1686 = vpop.xlane.xlu0 %1685
        %v1687 = vsub.f32 %v1677, %v1683
        %v1688 = vsub.f32 %v1679, %v1686
        %v1689 = vmul.f32 %v1687, 1.442695
        %v1690 = vpow.pop %v1689
        %v1691 = vmul.f32 %v1688, 1.442695
        %v1692 = vpow.pop %v1691
        %v1693 = vsel %vm1551, %v1690, 0.0
        %1694 = vadd.xlane.f32.xlu0 %v1693
        %v1695 = vpop.xlane.xlu0 %1694
        %v1696 = vsel %vm1551, %v1692, 0.0
        %1697 = vadd.xlane.f32.xlu0 %v1696
        %v1698 = vpop.xlane.xlu0 %1697
        %v1699 = vrcp.pop %v1695
        %v1700 = vrcp.pop %v1698
        %v1701 = vmul.f32 %v1690, %v1699
        %v1702 = vmul.f32 %v1692, %v1700
        %v1703 = vpack.c.bf16 %v1702, %v1701
        %1704 = vrot.lane.b32.xlu0 %v1579, 96
        %v1705 = vpop.permute.xlu0 %1704
        %v1708 = vsel %vm1551, %v1703, 0
        %1710 = vmatpush.bf16.msra.mxu0 0
        %1711 = vmatpush.bf16.msra.mxu0 0
        %1712 = vmatpush.bf16.msra.mxu0 0
        %1713 = vmatpush.bf16.msra.mxu0 0
        %1714 = vmatpush.bf16.msra.mxu0 0
        %1715 = vmatpush.bf16.msra.mxu0 0
        %1716 = vmatpush.bf16.msra.mxu0 0
        %1717 = vmatpush.bf16.msra.mxu0 %v1705
        %1718 = vmatmul.bf16.gmra.mxu0 %v1708
        %v1719 = vpop.f32.mrf.mxu0
        %v1720 = vadd.f32 0.0, %v1719
        %v1721 = vpop.f32.mrf.mxu0
        %v1722 = vadd.f32 0.0, %v1721
        %1723 = vdwg.mxu0
        %1724 = vrot.lane.b32.xlu0 %v1524, 32
        %v1725 = vpop.permute.xlu0 %1724
        %v1727 = vsel %vm1530, %v1725, 0
        %1729 = vmatpush.bf16.xpose.msra.mxu0 0
        %1730 = vmatpush.bf16.xpose.msra.mxu0 0
        %1731 = vmatpush.bf16.xpose.msra.mxu0 0
        %1732 = vmatpush.bf16.xpose.msra.mxu0 0
        %1733 = vmatpush.bf16.xpose.msra.mxu0 0
        %1734 = vmatpush.bf16.xpose.msra.mxu0 0
        %1735 = vmatpush.bf16.xpose.msra.mxu0 0
        %1736 = vmatpush.bf16.xpose.msra.mxu0 %v1665
        %1737 = vmatmul.bf16.gmra.mxu0 %v1727
        %v1738 = vpop.f32.mrf.mxu0
        %v1739 = vadd.f32 %v1007, %v1738
        %v1740 = vpop.f32.mrf.mxu0
        %v1741 = vadd.f32 %v1008, %v1740
        %1742 = vdwg.mxu0
        %v1743 = vsel %vm1551, %v1739, -inf
        %1744 = vmax.xlane.f32.xlu0 %v1743
        %v1745 = vpop.xlane.xlu0 %1744
        %v1746 = vsel %vm1551, %v1741, -inf
        %1747 = vmax.xlane.f32.xlu0 %v1746
        %v1748 = vpop.xlane.xlu0 %1747
        %v1749 = vsub.f32 %v1739, %v1745
        %v1750 = vsub.f32 %v1741, %v1748
        %v1751 = vmul.f32 %v1749, 1.442695
        %v1752 = vpow.pop %v1751
        %v1753 = vmul.f32 %v1750, 1.442695
        %v1754 = vpow.pop %v1753
        %v1755 = vsel %vm1551, %v1752, 0.0
        %1756 = vadd.xlane.f32.xlu0 %v1755
        %v1757 = vpop.xlane.xlu0 %1756
        %v1758 = vsel %vm1551, %v1754, 0.0
        %1759 = vadd.xlane.f32.xlu0 %v1758
        %v1760 = vpop.xlane.xlu0 %1759
        %v1761 = vrcp.pop %v1757
        %v1762 = vrcp.pop %v1760
        %v1763 = vmul.f32 %v1752, %v1761
        %v1764 = vmul.f32 %v1754, %v1762
        %v1765 = vpack.c.bf16 %v1764, %v1763
        %v1767 = vsel %vm1551, %v1765, 0
        %1769 = vmatpush.bf16.msra.mxu0 0
        %1770 = vmatpush.bf16.msra.mxu0 0
        %1771 = vmatpush.bf16.msra.mxu0 0
        %1772 = vmatpush.bf16.msra.mxu0 0
        %1773 = vmatpush.bf16.msra.mxu0 0
        %1774 = vmatpush.bf16.msra.mxu0 0
        %1775 = vmatpush.bf16.msra.mxu0 0
        %1776 = vmatpush.bf16.msra.mxu0 %v1705
        %1777 = vmatmul.bf16.gmra.mxu0 %v1767
        %v1778 = vpop.f32.mrf.mxu0
        %v1779 = vadd.f32 0.0, %v1778
        %v1780 = vpop.f32.mrf.mxu0
        %v1781 = vadd.f32 0.0, %v1780
        %1782 = vdwg.mxu0
        %1785 = vrot.lane.b32.xlu0 %v1653, 32
        %v1786 = vpop.permute.xlu0 %1785
        %1787 = vrot.lane.b32.xlu0 %v1655, 32
        %v1788 = vpop.permute.xlu0 %1787
        %1793 = vrot.lane.b32.xlu0 %v1720, 64
        %v1794 = vpop.permute.xlu0 %1793
        %1795 = vrot.lane.b32.xlu0 %v1722, 64
        %v1796 = vpop.permute.xlu0 %1795
        %1801 = vrot.lane.b32.xlu0 %v1779, 96
        %v1802 = vpop.permute.xlu0 %1801
        %1803 = vrot.lane.b32.xlu0 %v1781, 96
        %v1804 = vpop.permute.xlu0 %1803
        %v1807 = vsel %vm1530, %v1594, %v1786
        %v1808 = vsel %vm1530, %v1596, %v1788
        %v1809 = vsel %vm1369, %v1807, %v1794
        %v1810 = vsel %vm1369, %v1808, %v1796
        %vm1811 = vcmask 785408
        %v1812 = vsel %vm1811, %v1809, %v1802
        %v1813 = vsel %vm1811, %v1810, %v1804
        %v1814 = vld [vmem:[%s886] sm:$0xf]
        %v1815 = vld [vmem:[%s886 + $0x4] sm:$0xf]
        %v1816 = vld [vmem:[%s886 + $0x8] sm:$0xf]
        %v1817 = vld [vmem:[%s886 + $0xc] sm:$0xf]
        %v1818 = vld [vmem:[%s886 + $0x10] sm:$0xf]
        %v1819 = vld [vmem:[%s886 + $0x14] sm:$0xf]
        %v1820 = vld [vmem:[%s886 + $0x18] sm:$0xf]
        %v1821 = vld [vmem:[%s886 + $0x1c] sm:$0xf]
        %v1822 = vld [vmem:[%s886 + $0x20] sm:$0xf]
        %v1823 = vld [vmem:[%s886 + $0x24] sm:$0xf]
        %v1824 = vld [vmem:[%s886 + $0x28] sm:$0xf]
        %v1825 = vld [vmem:[%s886 + $0x2c] sm:$0xf]
        %v1826 = vld [vmem:[%s886 + $0x30] sm:$0xf]
        %v1827 = vld [vmem:[%s886 + $0x34] sm:$0xf]
        %v1828 = vld [vmem:[%s886 + $0x38] sm:$0xf]
        %v1829 = vld [vmem:[%s886 + $0x3c] sm:$0xf]
        %v1830 = vpack.c.bf16 %v1813, %v1812
        %v1847 = vunpack.c.l.b16 %v1814
        %v1848 = vunpack.c.l.b16 %v1815
        %v1849 = vunpack.c.l.b16 %v1816
        %v1850 = vunpack.c.l.b16 %v1817
        %v1851 = vunpack.c.l.b16 %v1818
        %v1852 = vunpack.c.l.b16 %v1819
        %v1853 = vunpack.c.l.b16 %v1820
        %v1854 = vunpack.c.l.b16 %v1821
        %v1855 = vunpack.c.l.b16 %v1822
        %v1856 = vunpack.c.l.b16 %v1823
        %v1857 = vunpack.c.l.b16 %v1824
        %v1858 = vunpack.c.l.b16 %v1825
        %v1859 = vunpack.c.l.b16 %v1826
        %v1860 = vunpack.c.l.b16 %v1827
        %v1861 = vunpack.c.l.b16 %v1828
        %v1862 = vunpack.c.l.b16 %v1829
        %v1863 = vpack.c.b16 %v1848, %v1847
        %v1864 = vpack.c.b16 %v1850, %v1849
        %v1865 = vpack.c.b16 %v1852, %v1851
        %v1866 = vpack.c.b16 %v1854, %v1853
        %v1867 = vpack.c.b16 %v1856, %v1855
        %v1868 = vpack.c.b16 %v1858, %v1857
        %v1869 = vpack.c.b16 %v1860, %v1859
        %v1870 = vpack.c.b16 %v1862, %v1861
        %1879 = vmatpush.bf16.msra.mxu0 %v1870
        %1880 = vmatpush.bf16.msra.mxu0 %v1869
        %1881 = vmatpush.bf16.msra.mxu0 %v1868
        %1882 = vmatpush.bf16.msra.mxu0 %v1867
        %1883 = vmatpush.bf16.msra.mxu0 %v1866
        %1884 = vmatpush.bf16.msra.mxu0 %v1865
        %1885 = vmatpush.bf16.msra.mxu0 %v1864
        %1886 = vmatpush.bf16.msra.mxu0 %v1863
        %1887 = vmatmul.bf16.gmra.mxu0 %v1830
        %v1888 = vpop.f32.mrf.mxu0
        %v1889 = vadd.f32 0.0, %v1888
        %v1890 = vpop.f32.mrf.mxu0
        %v1891 = vadd.f32 0.0, %v1890
        %1892 = vdwg.mxu0
        %v1893 = vadd.f32 %v997, %v1889
        %v1894 = vadd.f32 %v998, %v1891
        %v1895 = vld [vmem:[%s895] sm:$0x1]
        %v1896 = vmul.f32 %v1893, %v1893
        %v1897 = vmul.f32 %v1894, %v1894
        %1898 = vadd.xlane.f32.xlu0 %v1896
        %v1899 = vpop.xlane.xlu0 %1898
        %1900 = vadd.xlane.f32.xlu0 %v1897
        %v1901 = vpop.xlane.xlu0 %1900
        %v1902 = vmul.f32 %v1899, %v1024
        %v1903 = vmul.f32 %v1901, %v1024
        %v1904 = vadd.f32 %v1902, 1e-06
        %v1905 = vadd.f32 %v1903, 1e-06
        %v1906 = vrsqrt.pop %v1904
        %v1907 = vmul.f32 %v1906, %v1904
        %v1908 = vmul.f32 %v1907, %v1906
        %v1909 = vmul.f32 0.5, %v1908
        %v1910 = vsub.f32 1.5, %v1909
        %v1911 = vmul.f32 %v1906, %v1910
        %vm1912 = vweird.f32 %v1904
        %vm1913 = vweird.f32 %v1906
        %vm1914 = vmor %vm1912, %vm1913
        %v1915 = vsel %vm1914, %v1906, %v1911
        %v1916 = vrsqrt.pop %v1905
        %v1917 = vmul.f32 %v1916, %v1905
        %v1918 = vmul.f32 %v1917, %v1916
        %v1919 = vmul.f32 0.5, %v1918
        %v1920 = vsub.f32 1.5, %v1919
        %v1921 = vmul.f32 %v1916, %v1920
        %vm1922 = vweird.f32 %v1905
        %vm1923 = vweird.f32 %v1916
        %vm1924 = vmor %vm1922, %vm1923
        %v1925 = vsel %vm1924, %v1916, %v1921
        %v1926 = vmul.f32 %v1893, %v1915
        %v1927 = vmul.f32 %v1894, %v1925
        %v1929 = vperm.slane %v1895, 0
        %v1931 = vmul.f32 %v1929, %v1926
        %v1932 = vmul.f32 %v1929, %v1927
        %v1933 = vpack.c.bf16 %v1932, %v1931
        %v1934 = vld [vmem:[%s900] sm:$0xff]
        %v1935 = vld [vmem:[%s900 + $0x8] sm:$0xff]
        %v1936 = vld [vmem:[%s900 + $0x10] sm:$0xff]
        %v1937 = vld [vmem:[%s900 + $0x18] sm:$0xff]
        %v1938 = vld [vmem:[%s900 + $0x20] sm:$0xff]
        %v1939 = vld [vmem:[%s900 + $0x28] sm:$0xff]
        %v1940 = vld [vmem:[%s900 + $0x30] sm:$0xff]
        %v1941 = vld [vmem:[%s900 + $0x38] sm:$0xff]
        %v1942 = vld [vmem:[%s900 + $0x40] sm:$0xff]
        %v1943 = vld [vmem:[%s900 + $0x48] sm:$0xff]
        %v1944 = vld [vmem:[%s900 + $0x50] sm:$0xff]
        %v1945 = vld [vmem:[%s900 + $0x58] sm:$0xff]
        %v1946 = vld [vmem:[%s900 + $0x60] sm:$0xff]
        %v1947 = vld [vmem:[%s900 + $0x68] sm:$0xff]
        %v1948 = vld [vmem:[%s900 + $0x70] sm:$0xff]
        %v1949 = vld [vmem:[%s900 + $0x78] sm:$0xff]
        %v1966 = vunpack.c.l.b16 %v1934
        %v1967 = vunpack.c.h.b16 %v1934
        %v1968 = vunpack.c.l.b16 %v1935
        %v1969 = vunpack.c.h.b16 %v1935
        %v1970 = vunpack.c.l.b16 %v1936
        %v1971 = vunpack.c.h.b16 %v1936
        %v1972 = vunpack.c.l.b16 %v1937
        %v1973 = vunpack.c.h.b16 %v1937
        %v1974 = vunpack.c.l.b16 %v1938
        %v1975 = vunpack.c.h.b16 %v1938
        %v1976 = vunpack.c.l.b16 %v1939
        %v1977 = vunpack.c.h.b16 %v1939
        %v1978 = vunpack.c.l.b16 %v1940
        %v1979 = vunpack.c.h.b16 %v1940
        %v1980 = vunpack.c.l.b16 %v1941
        %v1981 = vunpack.c.h.b16 %v1941
        %v1982 = vunpack.c.l.b16 %v1942
        %v1983 = vunpack.c.h.b16 %v1942
        %v1984 = vunpack.c.l.b16 %v1943
        %v1985 = vunpack.c.h.b16 %v1943
        %v1986 = vunpack.c.l.b16 %v1944
        %v1987 = vunpack.c.h.b16 %v1944
        %v1988 = vunpack.c.l.b16 %v1945
        %v1989 = vunpack.c.h.b16 %v1945
        %v1990 = vunpack.c.l.b16 %v1946
        %v1991 = vunpack.c.h.b16 %v1946
        %v1992 = vunpack.c.l.b16 %v1947
        %v1993 = vunpack.c.h.b16 %v1947
        %v1994 = vunpack.c.l.b16 %v1948
        %v1995 = vunpack.c.h.b16 %v1948
        %v1996 = vunpack.c.l.b16 %v1949
        %v1997 = vunpack.c.h.b16 %v1949
        %v1998 = vpack.c.b16 %v1968, %v1966
        %v1999 = vpack.c.b16 %v1969, %v1967
        %v2000 = vpack.c.b16 %v1972, %v1970
        %v2001 = vpack.c.b16 %v1973, %v1971
        %v2002 = vpack.c.b16 %v1976, %v1974
        %v2003 = vpack.c.b16 %v1977, %v1975
        %v2004 = vpack.c.b16 %v1980, %v1978
        %v2005 = vpack.c.b16 %v1981, %v1979
        %v2006 = vpack.c.b16 %v1984, %v1982
        %v2007 = vpack.c.b16 %v1985, %v1983
        %v2008 = vpack.c.b16 %v1988, %v1986
        %v2009 = vpack.c.b16 %v1989, %v1987
        %v2010 = vpack.c.b16 %v1992, %v1990
        %v2011 = vpack.c.b16 %v1993, %v1991
        %v2012 = vpack.c.b16 %v1996, %v1994
        %v2013 = vpack.c.b16 %v1997, %v1995
        %2030 = vmatpush.bf16.msra.mxu0 %v2012
        %2031 = vmatpush.bf16.msra.mxu0 %v2010
        %2032 = vmatpush.bf16.msra.mxu0 %v2008
        %2033 = vmatpush.bf16.msra.mxu0 %v2006
        %2034 = vmatpush.bf16.msra.mxu0 %v2004
        %2035 = vmatpush.bf16.msra.mxu0 %v2002
        %2036 = vmatpush.bf16.msra.mxu0 %v2000
        %2037 = vmatpush.bf16.msra.mxu0 %v1998
        %2038 = vmatmul.bf16.gmra.mxu0 %v1933
        %v2039 = vpop.f32.mrf.mxu0
        %v2040 = vadd.f32 0.0, %v2039
        %v2041 = vpop.f32.mrf.mxu0
        %v2042 = vadd.f32 0.0, %v2041
        %2043 = vdwg.mxu0
        %2044 = vmatpush.bf16.msra.mxu0 %v2013
        %2045 = vmatpush.bf16.msra.mxu0 %v2011
        %2046 = vmatpush.bf16.msra.mxu0 %v2009
        %2047 = vmatpush.bf16.msra.mxu0 %v2007
        %2048 = vmatpush.bf16.msra.mxu0 %v2005
        %2049 = vmatpush.bf16.msra.mxu0 %v2003
        %2050 = vmatpush.bf16.msra.mxu0 %v2001
        %2051 = vmatpush.bf16.msra.mxu0 %v1999
        %2052 = vmatmul.bf16.gmra.mxu0 %v1933
        %v2053 = vpop.f32.mrf.mxu0
        %v2054 = vadd.f32 0.0, %v2053
        %v2055 = vpop.f32.mrf.mxu0
        %v2056 = vadd.f32 0.0, %v2055
        %2057 = vdwg.mxu0
        %v2058 = vld [vmem:[%s905] sm:$0xff]
        %v2059 = vld [vmem:[%s905 + $0x8] sm:$0xff]
        %v2060 = vld [vmem:[%s905 + $0x10] sm:$0xff]
        %v2061 = vld [vmem:[%s905 + $0x18] sm:$0xff]
        %v2062 = vld [vmem:[%s905 + $0x20] sm:$0xff]
        %v2063 = vld [vmem:[%s905 + $0x28] sm:$0xff]
        %v2064 = vld [vmem:[%s905 + $0x30] sm:$0xff]
        %v2065 = vld [vmem:[%s905 + $0x38] sm:$0xff]
        %v2066 = vld [vmem:[%s905 + $0x40] sm:$0xff]
        %v2067 = vld [vmem:[%s905 + $0x48] sm:$0xff]
        %v2068 = vld [vmem:[%s905 + $0x50] sm:$0xff]
        %v2069 = vld [vmem:[%s905 + $0x58] sm:$0xff]
        %v2070 = vld [vmem:[%s905 + $0x60] sm:$0xff]
        %v2071 = vld [vmem:[%s905 + $0x68] sm:$0xff]
        %v2072 = vld [vmem:[%s905 + $0x70] sm:$0xff]
        %v2073 = vld [vmem:[%s905 + $0x78] sm:$0xff]
        %v2090 = vunpack.c.l.b16 %v2058
        %v2091 = vunpack.c.h.b16 %v2058
        %v2092 = vunpack.c.l.b16 %v2059
        %v2093 = vunpack.c.h.b16 %v2059
        %v2094 = vunpack.c.l.b16 %v2060
        %v2095 = vunpack.c.h.b16 %v2060
        %v2096 = vunpack.c.l.b16 %v2061
        %v2097 = vunpack.c.h.b16 %v2061
        %v2098 = vunpack.c.l.b16 %v2062
        %v2099 = vunpack.c.h.b16 %v2062
        %v2100 = vunpack.c.l.b16 %v2063
        %v2101 = vunpack.c.h.b16 %v2063
        %v2102 = vunpack.c.l.b16 %v2064
        %v2103 = vunpack.c.h.b16 %v2064
        %v2104 = vunpack.c.l.b16 %v2065
        %v2105 = vunpack.c.h.b16 %v2065
        %v2106 = vunpack.c.l.b16 %v2066
        %v2107 = vunpack.c.h.b16 %v2066
        %v2108 = vunpack.c.l.b16 %v2067
        %v2109 = vunpack.c.h.b16 %v2067
        %v2110 = vunpack.c.l.b16 %v2068
        %v2111 = vunpack.c.h.b16 %v2068
        %v2112 = vunpack.c.l.b16 %v2069
        %v2113 = vunpack.c.h.b16 %v2069
        %v2114 = vunpack.c.l.b16 %v2070
        %v2115 = vunpack.c.h.b16 %v2070
        %v2116 = vunpack.c.l.b16 %v2071
        %v2117 = vunpack.c.h.b16 %v2071
        %v2118 = vunpack.c.l.b16 %v2072
        %v2119 = vunpack.c.h.b16 %v2072
        %v2120 = vunpack.c.l.b16 %v2073
        %v2121 = vunpack.c.h.b16 %v2073
        %v2122 = vpack.c.b16 %v2092, %v2090
        %v2123 = vpack.c.b16 %v2093, %v2091
        %v2124 = vpack.c.b16 %v2096, %v2094
        %v2125 = vpack.c.b16 %v2097, %v2095
        %v2126 = vpack.c.b16 %v2100, %v2098
        %v2127 = vpack.c.b16 %v2101, %v2099
        %v2128 = vpack.c.b16 %v2104, %v2102
        %v2129 = vpack.c.b16 %v2105, %v2103
        %v2130 = vpack.c.b16 %v2108, %v2106
        %v2131 = vpack.c.b16 %v2109, %v2107
        %v2132 = vpack.c.b16 %v2112, %v2110
        %v2133 = vpack.c.b16 %v2113, %v2111
        %v2134 = vpack.c.b16 %v2116, %v2114
        %v2135 = vpack.c.b16 %v2117, %v2115
        %v2136 = vpack.c.b16 %v2120, %v2118
        %v2137 = vpack.c.b16 %v2121, %v2119
        %2154 = vmatpush.bf16.msra.mxu0 %v2136
        %2155 = vmatpush.bf16.msra.mxu0 %v2134
        %2156 = vmatpush.bf16.msra.mxu0 %v2132
        %2157 = vmatpush.bf16.msra.mxu0 %v2130
        %2158 = vmatpush.bf16.msra.mxu0 %v2128
        %2159 = vmatpush.bf16.msra.mxu0 %v2126
        %2160 = vmatpush.bf16.msra.mxu0 %v2124
        %2161 = vmatpush.bf16.msra.mxu0 %v2122
        %2162 = vmatmul.bf16.gmra.mxu0 %v1933
        %v2163 = vpop.f32.mrf.mxu0
        %v2164 = vadd.f32 0.0, %v2163
        %v2165 = vpop.f32.mrf.mxu0
        %v2166 = vadd.f32 0.0, %v2165
        %2167 = vdwg.mxu0
        %2168 = vmatpush.bf16.msra.mxu0 %v2137
        %2169 = vmatpush.bf16.msra.mxu0 %v2135
        %2170 = vmatpush.bf16.msra.mxu0 %v2133
        %2171 = vmatpush.bf16.msra.mxu0 %v2131
        %2172 = vmatpush.bf16.msra.mxu0 %v2129
        %2173 = vmatpush.bf16.msra.mxu0 %v2127
        %2174 = vmatpush.bf16.msra.mxu0 %v2125
        %2175 = vmatpush.bf16.msra.mxu0 %v2123
        %2176 = vmatmul.bf16.gmra.mxu0 %v1933
        %v2177 = vpop.f32.mrf.mxu0
        %v2178 = vadd.f32 0.0, %v2177
        %v2179 = vpop.f32.mrf.mxu0
        %v2180 = vadd.f32 0.0, %v2179
        %2181 = vdwg.mxu0
        %v2182 = vxor.u32 %v2040, 2147483648
        %v2183 = vxor.u32 %v2054, 2147483648
        %v2184 = vxor.u32 %v2042, 2147483648
        %v2185 = vxor.u32 %v2056, 2147483648
        %v2186 = vmul.f32 %v2182, 1.442695
        %v2187 = vpow.pop %v2186
        %v2188 = vmul.f32 %v2183, 1.442695
        %v2189 = vpow.pop %v2188
        %v2190 = vmul.f32 %v2184, 1.442695
        %v2191 = vpow.pop %v2190
        %v2192 = vmul.f32 %v2185, 1.442695
        %v2193 = vpow.pop %v2192
        %v2194 = vadd.f32 %v2187, 1.0
        %v2195 = vadd.f32 %v2189, 1.0
        %v2196 = vadd.f32 %v2191, 1.0
        %v2197 = vadd.f32 %v2193, 1.0
        %v2198 = vrcp.pop %v2194
        %v2199 = vmul.f32 %v2194, %v2198
        %v2200 = vsub.f32 1.0, %v2199
        %v2201 = vmul.f32 %v2198, %v2200
        %v2202 = vadd.f32 %v2198, %v2201
        %vm2203 = vweird.f32 %v2194
        %vm2204 = vweird.f32 %v2198
        %vm2205 = vmor %vm2203, %vm2204
        %v2206 = vsel %vm2205, %v2198, %v2202
        %v2207 = vand.u32 2147483647, %v2194
        %vm2208 = vcmp.eq.f32.partialorder %v2207, 8.507059e+37
        %v2209 = vand.u32 %v2194, 2147483648
        %v2210 = vor.u32 1.1754944e-38, %v2209
        %v2211 = vsel %vm2208, %v2210, %v2206
        %v2212 = vmul.f32 1.0, %v2211
        %v2213 = vrcp.pop %v2195
        %v2214 = vmul.f32 %v2195, %v2213
        %v2215 = vsub.f32 1.0, %v2214
        %v2216 = vmul.f32 %v2213, %v2215
        %v2217 = vadd.f32 %v2213, %v2216
        %vm2218 = vweird.f32 %v2195
        %vm2219 = vweird.f32 %v2213
        %vm2220 = vmor %vm2218, %vm2219
        %v2221 = vsel %vm2220, %v2213, %v2217
        %v2222 = vand.u32 2147483647, %v2195
        %vm2223 = vcmp.eq.f32.partialorder %v2222, 8.507059e+37
        %v2224 = vand.u32 %v2195, 2147483648
        %v2225 = vor.u32 1.1754944e-38, %v2224
        %v2226 = vsel %vm2223, %v2225, %v2221
        %v2227 = vmul.f32 1.0, %v2226
        %v2228 = vrcp.pop %v2196
        %v2229 = vmul.f32 %v2196, %v2228
        %v2230 = vsub.f32 1.0, %v2229
        %v2231 = vmul.f32 %v2228, %v2230
        %v2232 = vadd.f32 %v2228, %v2231
        %vm2233 = vweird.f32 %v2196
        %vm2234 = vweird.f32 %v2228
        %vm2235 = vmor %vm2233, %vm2234
        %v2236 = vsel %vm2235, %v2228, %v2232
        %v2237 = vand.u32 2147483647, %v2196
        %vm2238 = vcmp.eq.f32.partialorder %v2237, 8.507059e+37
        %v2239 = vand.u32 %v2196, 2147483648
        %v2240 = vor.u32 1.1754944e-38, %v2239
        %v2241 = vsel %vm2238, %v2240, %v2236
        %v2242 = vmul.f32 1.0, %v2241
        %v2243 = vrcp.pop %v2197
        %v2244 = vmul.f32 %v2197, %v2243
        %v2245 = vsub.f32 1.0, %v2244
        %v2246 = vmul.f32 %v2243, %v2245
        %v2247 = vadd.f32 %v2243, %v2246
        %vm2248 = vweird.f32 %v2197
        %vm2249 = vweird.f32 %v2243
        %vm2250 = vmor %vm2248, %vm2249
        %v2251 = vsel %vm2250, %v2243, %v2247
        %v2252 = vand.u32 2147483647, %v2197
        %vm2253 = vcmp.eq.f32.partialorder %v2252, 8.507059e+37
        %v2254 = vand.u32 %v2197, 2147483648
        %v2255 = vor.u32 1.1754944e-38, %v2254
        %v2256 = vsel %vm2253, %v2255, %v2251
        %v2257 = vmul.f32 1.0, %v2256
        %v2258 = vmul.f32 %v2040, %v2212
        %v2259 = vmul.f32 %v2054, %v2227
        %v2260 = vmul.f32 %v2042, %v2242
        %v2261 = vmul.f32 %v2056, %v2257
        %v2262 = vmul.f32 %v2258, %v2164
        %v2263 = vmul.f32 %v2259, %v2178
        %v2264 = vmul.f32 %v2260, %v2166
        %v2265 = vmul.f32 %v2261, %v2180
        %v2266 = vld [vmem:[%s910] sm:$0xf]
        %v2267 = vld [vmem:[%s910 + $0x4] sm:$0xf]
        %v2268 = vld [vmem:[%s910 + $0x8] sm:$0xf]
        %v2269 = vld [vmem:[%s910 + $0xc] sm:$0xf]
        %v2270 = vld [vmem:[%s910 + $0x10] sm:$0xf]
        %v2271 = vld [vmem:[%s910 + $0x14] sm:$0xf]
        %v2272 = vld [vmem:[%s910 + $0x18] sm:$0xf]
        %v2273 = vld [vmem:[%s910 + $0x1c] sm:$0xf]
        %v2274 = vld [vmem:[%s910 + $0x20] sm:$0xf]
        %v2275 = vld [vmem:[%s910 + $0x24] sm:$0xf]
        %v2276 = vld [vmem:[%s910 + $0x28] sm:$0xf]
        %v2277 = vld [vmem:[%s910 + $0x2c] sm:$0xf]
        %v2278 = vld [vmem:[%s910 + $0x30] sm:$0xf]
        %v2279 = vld [vmem:[%s910 + $0x34] sm:$0xf]
        %v2280 = vld [vmem:[%s910 + $0x38] sm:$0xf]
        %v2281 = vld [vmem:[%s910 + $0x3c] sm:$0xf]
        %v2282 = vld [vmem:[%s910 + $0x40] sm:$0xf]
        %v2283 = vld [vmem:[%s910 + $0x44] sm:$0xf]
        %v2284 = vld [vmem:[%s910 + $0x48] sm:$0xf]
        %v2285 = vld [vmem:[%s910 + $0x4c] sm:$0xf]
        %v2286 = vld [vmem:[%s910 + $0x50] sm:$0xf]
        %v2287 = vld [vmem:[%s910 + $0x54] sm:$0xf]
        %v2288 = vld [vmem:[%s910 + $0x58] sm:$0xf]
        %v2289 = vld [vmem:[%s910 + $0x5c] sm:$0xf]
        %v2290 = vld [vmem:[%s910 + $0x60] sm:$0xf]
        %v2291 = vld [vmem:[%s910 + $0x64] sm:$0xf]
        %v2292 = vld [vmem:[%s910 + $0x68] sm:$0xf]
        %v2293 = vld [vmem:[%s910 + $0x6c] sm:$0xf]
        %v2294 = vld [vmem:[%s910 + $0x70] sm:$0xf]
        %v2295 = vld [vmem:[%s910 + $0x74] sm:$0xf]
        %v2296 = vld [vmem:[%s910 + $0x78] sm:$0xf]
        %v2297 = vld [vmem:[%s910 + $0x7c] sm:$0xf]
        %v2298 = vpack.c.bf16 %v2264, %v2262
        %v2299 = vpack.c.bf16 %v2265, %v2263
        %v2332 = vunpack.c.l.b16 %v2266
        %v2333 = vunpack.c.l.b16 %v2267
        %v2334 = vunpack.c.l.b16 %v2268
        %v2335 = vunpack.c.l.b16 %v2269
        %v2336 = vunpack.c.l.b16 %v2270
        %v2337 = vunpack.c.l.b16 %v2271
        %v2338 = vunpack.c.l.b16 %v2272
        %v2339 = vunpack.c.l.b16 %v2273
        %v2340 = vunpack.c.l.b16 %v2274
        %v2341 = vunpack.c.l.b16 %v2275
        %v2342 = vunpack.c.l.b16 %v2276
        %v2343 = vunpack.c.l.b16 %v2277
        %v2344 = vunpack.c.l.b16 %v2278
        %v2345 = vunpack.c.l.b16 %v2279
        %v2346 = vunpack.c.l.b16 %v2280
        %v2347 = vunpack.c.l.b16 %v2281
        %v2348 = vunpack.c.l.b16 %v2282
        %v2349 = vunpack.c.l.b16 %v2283
        %v2350 = vunpack.c.l.b16 %v2284
        %v2351 = vunpack.c.l.b16 %v2285
        %v2352 = vunpack.c.l.b16 %v2286
        %v2353 = vunpack.c.l.b16 %v2287
        %v2354 = vunpack.c.l.b16 %v2288
        %v2355 = vunpack.c.l.b16 %v2289
        %v2356 = vunpack.c.l.b16 %v2290
        %v2357 = vunpack.c.l.b16 %v2291
        %v2358 = vunpack.c.l.b16 %v2292
        %v2359 = vunpack.c.l.b16 %v2293
        %v2360 = vunpack.c.l.b16 %v2294
        %v2361 = vunpack.c.l.b16 %v2295
        %v2362 = vunpack.c.l.b16 %v2296
        %v2363 = vunpack.c.l.b16 %v2297
        %v2364 = vpack.c.b16 %v2333, %v2332
        %v2365 = vpack.c.b16 %v2335, %v2334
        %v2366 = vpack.c.b16 %v2337, %v2336
        %v2367 = vpack.c.b16 %v2339, %v2338
        %v2368 = vpack.c.b16 %v2341, %v2340
        %v2369 = vpack.c.b16 %v2343, %v2342
        %v2370 = vpack.c.b16 %v2345, %v2344
        %v2371 = vpack.c.b16 %v2347, %v2346
        %v2372 = vpack.c.b16 %v2349, %v2348
        %v2373 = vpack.c.b16 %v2351, %v2350
        %v2374 = vpack.c.b16 %v2353, %v2352
        %v2375 = vpack.c.b16 %v2355, %v2354
        %v2376 = vpack.c.b16 %v2357, %v2356
        %v2377 = vpack.c.b16 %v2359, %v2358
        %v2378 = vpack.c.b16 %v2361, %v2360
        %v2379 = vpack.c.b16 %v2363, %v2362
        %2396 = vmatpush.bf16.msra.mxu0 %v2371
        %2397 = vmatpush.bf16.msra.mxu0 %v2370
        %2398 = vmatpush.bf16.msra.mxu0 %v2369
        %2399 = vmatpush.bf16.msra.mxu0 %v2368
        %2400 = vmatpush.bf16.msra.mxu0 %v2367
        %2401 = vmatpush.bf16.msra.mxu0 %v2366
        %2402 = vmatpush.bf16.msra.mxu0 %v2365
        %2403 = vmatpush.bf16.msra.mxu0 %v2364
        %2404 = vmatmul.bf16.gmra.mxu0 %v2298
        %v2405 = vpop.f32.mrf.mxu0
        %v2406 = vadd.f32 0.0, %v2405
        %v2407 = vpop.f32.mrf.mxu0
        %v2408 = vadd.f32 0.0, %v2407
        %2409 = vdwg.mxu0
        %2410 = vmatpush.bf16.msra.mxu0 %v2379
        %2411 = vmatpush.bf16.msra.mxu0 %v2378
        %2412 = vmatpush.bf16.msra.mxu0 %v2377
        %2413 = vmatpush.bf16.msra.mxu0 %v2376
        %2414 = vmatpush.bf16.msra.mxu0 %v2375
        %2415 = vmatpush.bf16.msra.mxu0 %v2374
        %2416 = vmatpush.bf16.msra.mxu0 %v2373
        %2417 = vmatpush.bf16.msra.mxu0 %v2372
        %2418 = vmatmul.bf16.gmra.mxu0 %v2299
        %v2419 = vpop.f32.mrf.mxu0
        %v2420 = vadd.f32 %v2406, %v2419
        %v2421 = vpop.f32.mrf.mxu0
        %v2422 = vadd.f32 %v2408, %v2421
        %2423 = vdwg.mxu0
        %v2424 = vadd.f32 %v1893, %v2420
        %v2425 = vadd.f32 %v1894, %v2422
        %2426 = vst [vmem:[#allocation2] sm:$0xff] %v2424
        %2427 = vst [vmem:[#allocation2 + $0x8] sm:$0xff] %v2425
        %p2428 = scmp.eq.s32.totalorder %s43, 1
        // Predicated region
        $region121: #{qwen3_forward.1} parent=111 // pred_check
          %p2429 = pneg %p2428
        $region122: #{qwen3_forward.1} parent=111 // pred_check_branch
          %2431 = sbr.rel (%p2429) target = $region124
        $region123: #{qwen3_forward.1} parent=111 // pred_region
          %v2432 = vld [vmem:[%s11] sm:$0x1]
          %v2433 = vmul.f32 %v2424, %v2424
          %v2434 = vmul.f32 %v2425, %v2425
          %2435 = vadd.xlane.f32.xlu0 %v2433
          %v2436 = vpop.xlane.xlu0 %2435
          %2437 = vadd.xlane.f32.xlu0 %v2434
          %v2438 = vpop.xlane.xlu0 %2437
          %v2439 = vmul.f32 %v2436, %v1024
          %v2440 = vmul.f32 %v2438, %v1024
          %v2441 = vadd.f32 %v2439, 1e-06
          %v2442 = vadd.f32 %v2440, 1e-06
          %v2443 = vrsqrt.pop %v2441
          %v2444 = vmul.f32 %v2443, %v2441
          %v2445 = vmul.f32 %v2444, %v2443
          %v2446 = vmul.f32 0.5, %v2445
          %v2447 = vsub.f32 1.5, %v2446
          %v2448 = vmul.f32 %v2443, %v2447
          %vm2449 = vweird.f32 %v2441
          %vm2450 = vweird.f32 %v2443
          %vm2451 = vmor %vm2449, %vm2450
          %v2452 = vsel %vm2451, %v2443, %v2448
          %v2453 = vrsqrt.pop %v2442
          %v2454 = vmul.f32 %v2453, %v2442
          %v2455 = vmul.f32 %v2454, %v2453
          %v2456 = vmul.f32 0.5, %v2455
          %v2457 = vsub.f32 1.5, %v2456
          %v2458 = vmul.f32 %v2453, %v2457
          %vm2459 = vweird.f32 %v2442
          %vm2460 = vweird.f32 %v2453
          %vm2461 = vmor %vm2459, %vm2460
          %v2462 = vsel %vm2461, %v2453, %v2458
          %v2463 = vmul.f32 %v2424, %v2452
          %v2464 = vmul.f32 %v2425, %v2462
          %v2466 = vperm.slane %v2432, 0
          %v2468 = vmul.f32 %v2466, %v2463
          %v2469 = vmul.f32 %v2466, %v2464
          %2470 = vst [vmem:[%s863] sm:$0xff] %v2468
          %2471 = vst [vmem:[%s863 + $0x8] sm:$0xff] %v2469
        $region124: #{qwen3_forward.1} parent=111 // pred_fallthru
          _
        %s2472 = sand.u32 %s596, 1
        %s2473 = scalar_lea.sflag [#allocation4], %s2472
        %s2474 = sand.u32 %s596, 1
        %s2475 = smul.addr %s2474, 16
        %s2476 = scalar_lea.vmem [#allocation6], %s2475
        // Predicated region
        $region125: #{qwen3_forward.1} parent=111 // pred_check
          %p2477 = pneg %p606
        $region126: #{qwen3_forward.1} parent=111 // pred_check_branch
          %2479 = sbr.rel (%p2477) target = $region128
        $region127: #{qwen3_forward.1} parent=111 // pred_region
          %s2480 = smul.u32 2, %s42
          %2482 = vsyncadd %s2473, 0
          %s2483 = smul.addr %s2480, 8
          %s2484 = scalar_lea.hbm %s23, %s2483
          %s2485 = sshll.u32 %s2476, 4
          %s2486 = int_to_ptr.vmem [resolvable:$true] %s2485
          %s2487 = sshll.u32 %s2484, 4
          %s2488 = int_to_ptr.hbm [resolvable:$true] %s2487
          %2493 = dma.vmem_to_hbm [thread:$0]  %s2486, 256, %s2488, %s2473, 128, 128, 8
        $region128: #{qwen3_forward.1} parent=111 // pred_fallthru
          _
      $region112: #{qwen3_forward.1} parent=5 // pred_fallthru
        _
      %p2494 = scmp.le.s32.totalorder 2, %s33
      // Predicated region
      $region129: #{qwen3_forward.1} parent=5 // pred_check
        %p2495 = pneg %p2494
      $region130: #{qwen3_forward.1} parent=5 // pred_check_branch
        %2497 = sbr.rel (%p2495) target = $region132
      $region131: #{qwen3_forward.1} parent=5 // pred_region
        %s2498 = ssub.s32 %s33, 2
        // Predicated region
        $region133: #{qwen3_forward.1} parent=131 // pred_check
          %p2499 = pneg %p612
        $region134: #{qwen3_forward.1} parent=131 // pred_check_branch
          %2501 = sbr.rel (%p2499) target = $region136
        $region135: #{qwen3_forward.1} parent=131 // pred_region
          %s2502 = sand.u32 %s597, 1
          %s2503 = scalar_lea.sflag [#allocation4], %s2502
          %s2504 = sand.u32 %s597, 1
          %s2505 = smul.addr %s2504, 16
          %s2506 = scalar_lea.vmem [#allocation6], %s2505
          %2508 = dma.done %s2503, 256
        $region136: #{qwen3_forward.1} parent=131 // pred_fallthru
          _
      $region132: #{qwen3_forward.1} parent=5 // pred_fallthru
        _
    $region6: #{qwen3_forward.1} parent=1 // loop_footer
      %s37 = sadd.s32 1, %s33
    $region7: #{qwen3_forward.1} parent=1 // loop_footer_branch
      %32 = sbr.rel target = $region3
    $region8: #{qwen3_forward.1} parent=1 // loop_exit
      _
    %2509 = vsyncpa [#allocation4], 1
    %s2510 = scalar_lea.sflag [#allocation4], 1
    %2511 = vsyncpa %s2510, 1
    %2512 = vsyncpa [#allocation5], 1
    %s2513 = scalar_lea.sflag [#allocation5], 1
    %2514 = vsyncpa %s2513, 1

</llo_original>
